<compile_context>
chip_gen: v5e
topology: v5e:2x2
jax: 0.10.0
libtpu: 0.0.40
codegen_flags: <defaults>
</compile_context>

<pallas_src>
import jax
import jax.numpy as jnp
from jax.experimental import pallas as pl
from jax.experimental.pallas import tpu as pltpu


# ---------------------------------------------------------------------------
# Kernel factory
# ---------------------------------------------------------------------------
def _make_kernel(hh, ww, chid, cin_p):
    hw = hh * ww

    def rotate_from_ref(src_ref, nrows, k, dst_ref):
        """dst[:nrows, j] <- src[:nrows, (j - k) mod hw]  (== jnp.roll(src, k)).

        Implemented with plain ref loads/stores at static offsets through a VMEM
        scratch: no value-level unaligned slicing, no roll-direction ambiguity.
        """
        k = k % hw
        if k == 0:
            return src_ref[:nrows, :].astype(jnp.float32)
        dst_ref[:nrows, :k] = src_ref[:nrows, hw - k:].astype(jnp.float32)
        dst_ref[:nrows, k:] = src_ref[:nrows, :hw - k].astype(jnp.float32)
        return dst_ref[:nrows, :]

    def build_taps(src_ref, nrows, rot_a, rot_b):
        """(nrows, H*W) channel-major image -> (9*nrows, H*W) 3x3 circular taps.

        Row order: tap (ky, kx) outer (t = ky*3 + kx), channel inner — matching
        the (ky, kx, c_in) column order of the stacked conv weights.  The row
        (dy) wrap is exact as a flat rotation because the lane axis holds one
        whole image: q = (p + dy*W) mod (H*W).  The column (dx) wrap needs a
        per-lane select between two rotations at the x==0 / x==W-1 columns.
        """
        lane = jax.lax.broadcasted_iota(jnp.int32, (1, hw), 1).astype(jnp.float32)
        col = lane - jnp.floor(lane / ww) * ww           # x position (exact in f32)
        first_col = col < 0.5
        last_col = col > (ww - 1) - 0.5
        taps = []
        for dy in (-1, 0, 1):
            base = dy * ww
            for dx in (-1, 0, 1):
                main = rotate_from_ref(src_ref, nrows, -(base + dx), rot_a)
                if dx == 0:
                    taps.append(main)
                elif dx == 1:   # x == W-1 wraps to column 0 of the same row
                    wrap = rotate_from_ref(src_ref, nrows, -(base + dx - ww), rot_b)
                    taps.append(jnp.where(last_col, wrap, main))
                else:           # x == 0 wraps to column W-1 of the same row
                    wrap = rotate_from_ref(src_ref, nrows, -(base + dx + ww), rot_b)
                    taps.append(jnp.where(first_col, wrap, main))
        return jnp.concatenate(taps, axis=0)             # (9*nrows, hw)

    def kernel(x_ref, h_ref, c_ref, wx_ref, wh_ref, b_ref, ch_ref, cc_ref,
               hsrc, rot_a, rot_b):
        # Stage h once in f32 so every rotation load runs on the mature f32 path.
        hsrc[...] = h_ref[...].astype(jnp.float32)

        # ---- in-kernel im2col (3x3, circular) — no HBM patch matrices --------
        xp = build_taps(x_ref, cin_p, rot_a, rot_b).astype(jnp.bfloat16)
        hp = build_taps(hsrc, chid, rot_a, rot_b).astype(jnp.bfloat16)

        # ---- all 8 convolutions as two fused MXU matmuls (f32 accumulate) ----
        # Output (4*chid, H*W): full MXU width on v6e/v7x, lane-dense epilogue.
        gates = (jnp.dot(wx_ref[...], xp, preferred_element_type=jnp.float32)
                 + jnp.dot(wh_ref[...], hp, preferred_element_type=jnp.float32)
                 + b_ref[...])

        # ---- LSTM gate math, gate row order [i | f | o | c], all f32 ---------
        sig = jax.nn.sigmoid(gates[:3 * chid])
        gi = sig[:chid]
        gf = sig[chid:2 * chid]
        go = sig[2 * chid:]
        gc = jnp.tanh(gates[3 * chid:])

        cc = gf * c_ref[...] + gi * gc
        ch = go * jnp.tanh(cc)

        # Two separate lane-dense (chid, H*W) output slabs — unmasked stores.
        cc_ref[...] = cc
        ch_ref[...] = ch.astype(ch_ref.dtype)

    return kernel


def _vmem_limit_bytes():
    """Generation-aware scoped-VMEM budget (~48 MiB on v7x, 64 MiB on v5e/v6e)."""
    try:
        cap = pltpu.get_tpu_info().vmem_capacity_bytes
    except Exception:
        cap = 64 * 1024 * 1024
    return int(min(64 * 1024 * 1024, (3 * cap) // 4))


# ---------------------------------------------------------------------------
# Wrapper: pure reshapes / casts + weight packing, then one fused pallas_call
# ---------------------------------------------------------------------------
def convlstm_forward_pallas(x, h, c, params, *, ch_dtype=jnp.float32):
    """x: (N, Cin, H, W), h, c: (N, Chid, H, W).  Returns (ch, cc) in NCHW."""
    n, cin, hh, ww = x.shape
    chid = h.shape[1]
    hw = hh * ww
    if chid % 16:
        raise ValueError("hidden_channels must be a multiple of 16 (bf16 h block)")
    cin_p = ((cin + 7) // 8) * 8          # pad input channels to an f32 sublane tile

    # Pure reshapes / casts — no im2col, no transposes, no patch matrices in HBM.
    x_t = jnp.pad(x, ((0, 0), (0, cin_p - cin), (0, 0), (0, 0)))
    x_t = x_t.reshape(n * cin_p, hw).astype(jnp.float32)
    h_t = h.reshape(n * chid, hw).astype(jnp.bfloat16)    # bf16 halves the h stream
    c_t = c.reshape(n * chid, hw).astype(jnp.float32)     # cell state stays f32

    # Stacked conv weights -> matmul weights; gate rows [i | f | o | c],
    # columns ordered (ky, kx, c_in) to match the kernel's tap order.
    gate_order = ("i", "f", "o", "c")

    def conv_w_rows(w, cpad):
        o, i, kh, kw = w.shape
        w = jnp.pad(w, ((0, 0), (0, cpad - i), (0, 0), (0, 0)))
        return jnp.transpose(w, (0, 2, 3, 1)).reshape(o, kh * kw * cpad)

    wx_t = jnp.concatenate([conv_w_rows(params["Wx" + g], cin_p) for g in gate_order],
                           axis=0).astype(jnp.bfloat16)          # (4*chid, 9*cin_p)
    wh_t = jnp.concatenate([conv_w_rows(params["Wh" + g], chid) for g in gate_order],
                           axis=0).astype(jnp.bfloat16)          # (4*chid, 9*chid)
    bias = jnp.concatenate([params["bx" + g] for g in gate_order])
    bias = bias.reshape(4 * chid, 1).astype(jnp.float32)         # zeros i/f/c, ones o

    kernel = _make_kernel(hh, ww, chid, cin_p)
    scratch_rows = max(chid, cin_p)

    cost = pl.CostEstimate(
        flops=int(2 * n * hw * 9 * (cin_p + chid) * 4 * chid),
        transcendentals=int(5 * n * hw * chid),
        bytes_accessed=int(n * cin_p * hw * 4 + n * chid * hw * 2
                           + n * chid * hw * 4
                           + 4 * chid * 9 * (cin_p + chid) * 2
                           + 4 * chid * 4
                           + n * chid * hw * jnp.dtype(ch_dtype).itemsize
                           + n * chid * hw * 4),
    )

    ch_t, cc_t = pl.pallas_call(
        kernel,
        out_shape=(jax.ShapeDtypeStruct((n * chid, hw), ch_dtype),
                   jax.ShapeDtypeStruct((n * chid, hw), jnp.float32)),
        grid=(n,),                                             # one image per step
        in_specs=[
            pl.BlockSpec((cin_p, hw), lambda i: (i, 0)),            # x  (f32)
            pl.BlockSpec((chid, hw), lambda i: (i, 0)),             # h  (bf16)
            pl.BlockSpec((chid, hw), lambda i: (i, 0)),             # c  (f32)
            pl.BlockSpec((4 * chid, 9 * cin_p), lambda i: (0, 0)),  # Wx (resident)
            pl.BlockSpec((4 * chid, 9 * chid), lambda i: (0, 0)),   # Wh (resident)
            pl.BlockSpec((4 * chid, 1), lambda i: (0, 0)),          # bias
        ],
        out_specs=(pl.BlockSpec((chid, hw), lambda i: (i, 0)),      # ch
                   pl.BlockSpec((chid, hw), lambda i: (i, 0))),     # cc
        scratch_shapes=[
            pltpu.VMEM((chid, hw), jnp.float32),           # h staged in f32
            pltpu.VMEM((scratch_rows, hw), jnp.float32),   # rotation buffer A
            pltpu.VMEM((scratch_rows, hw), jnp.float32),   # rotation buffer B
        ],
        compiler_params=pltpu.CompilerParams(
            dimension_semantics=("parallel",),
            vmem_limit_bytes=_vmem_limit_bytes()),
        cost_estimate=cost,
    )(x_t, h_t, c_t, wx_t, wh_t, bias)

    return (ch_t.reshape(n, chid, hh, ww), cc_t.reshape(n, chid, hh, ww))


# ---------------------------------------------------------------------------
# Pure-JAX f32 reference (matches the PyTorch forward exactly)
# ---------------------------------------------------------------------------
def conv2d_circular_ref(x, w, b=None, k=3):
    p = (k - 1) // 2
    xp = jnp.pad(x, ((0, 0), (0, 0), (p, p), (p, p)), mode="wrap")
    y = jax.lax.conv_general_dilated(
        xp, w, window_strides=(1, 1), padding="VALID",
        dimension_numbers=("NCHW", "OIHW", "NCHW"))
    if b is not None:
        y = y + b[None, :, None, None]
    return y


def convlstm_forward_ref(x, h, c, p):
    ci = jax.nn.sigmoid(conv2d_circular_ref(x, p["Wxi"], p["bxi"])
                        + conv2d_circular_ref(h, p["Whi"]))
    cf = jax.nn.sigmoid(conv2d_circular_ref(x, p["Wxf"], p["bxf"])
                        + conv2d_circular_ref(h, p["Whf"]))
    cc = cf * c + ci * jnp.tanh(conv2d_circular_ref(x, p["Wxc"], p["bxc"])
                                + conv2d_circular_ref(h, p["Whc"]))
    co = jax.nn.sigmoid(conv2d_circular_ref(x, p["Wxo"], p["bxo"])
                        + conv2d_circular_ref(h, p["Who"]))
    ch = co * jnp.tanh(cc)
    return ch, cc


# ---------------------------------------------------------------------------
# Main
# ---------------------------------------------------------------------------
if __name__ == "__main__":
    N, Cin, Chid, H, W = 2, 4, 32, 16, 16
    K = 3  # input_kernel_size = hidden_kernel_size = 3, stride 1, padding 1

    key = jax.random.PRNGKey(0)
    keys = jax.random.split(key, 12)

    def winit(k, shape):
        return (0.1 * jax.random.normal(k, shape)).astype(jnp.float32)

    params = {
        # input convs (with bias): Conv2d(Cin -> Chid, 3x3, circular)
        "Wxi": winit(keys[0], (Chid, Cin, K, K)),
        "Wxf": winit(keys[1], (Chid, Cin, K, K)),
        "Wxc": winit(keys[2], (Chid, Cin, K, K)),
        "Wxo": winit(keys[3], (Chid, Cin, K, K)),
        # hidden convs (no bias): Conv2d(Chid -> Chid, 3x3, circular)
        "Whi": winit(keys[4], (Chid, Chid, K, K)),
        "Whf": winit(keys[5], (Chid, Chid, K, K)),
        "Whc": winit(keys[6], (Chid, Chid, K, K)),
        "Who": winit(keys[7], (Chid, Chid, K, K)),
        # biases: zeros for i/f/c, ones for o (as in __init__)
        "bxi": jnp.zeros((Chid,), jnp.float32),
        "bxf": jnp.zeros((Chid,), jnp.float32),
        "bxc": jnp.zeros((Chid,), jnp.float32),
        "bxo": jnp.ones((Chid,), jnp.float32),
    }

    x = jax.random.normal(keys[8], (N, Cin, H, W), dtype=jnp.float32)
    h = jax.random.normal(keys[9], (N, Chid, H, W), dtype=jnp.float32)
    c = jax.random.normal(keys[10], (N, Chid, H, W), dtype=jnp.float32)

    fwd = jax.jit(convlstm_forward_pallas)
    ch_k, cc_k = fwd(x, h, c, params)
    jax.block_until_ready((ch_k, cc_k))

    ch_r, cc_r = convlstm_forward_ref(x, h, c, params)

    assert ch_k.shape == (N, Chid, H, W) and cc_k.shape == (N, Chid, H, W)
    # bf16 h / weight / tap streams vs f32 reference -> loosened tolerance
    assert jnp.allclose(ch_k, ch_r, rtol=2e-2, atol=2e-2), "ch mismatch"
    assert jnp.allclose(cc_k, cc_r, rtol=2e-2, atol=2e-2), "cc mismatch"

    print("KERNEL_OK")
</pallas_src>

<mosaic_0001>
module attributes {stable_mosaic.version = 11 : i64} {
  func.func @kernel(%arg0: i32, %arg1: memref<8x256xf32, #tpu.memory_space<vmem>>, %arg2: memref<32x256xbf16, #tpu.memory_space<vmem>>, %arg3: memref<32x256xf32, #tpu.memory_space<vmem>>, %arg4: memref<128x72xbf16, #tpu.memory_space<vmem>>, %arg5: memref<128x288xbf16, #tpu.memory_space<vmem>>, %arg6: memref<128x1xf32, #tpu.memory_space<vmem>>, %arg7: memref<32x256xf32, #tpu.memory_space<vmem>>, %arg8: memref<32x256xf32, #tpu.memory_space<vmem>>, %arg9: memref<32x256xf32, #tpu.memory_space<vmem>>, %arg10: memref<32x256xf32, #tpu.memory_space<vmem>>, %arg11: memref<32x256xf32, #tpu.memory_space<vmem>>) attributes {dimension_semantics = [#tpu.dimension_semantics<parallel>], iteration_bounds = array<i64: 2>, scalar_prefetch = 0 : i64, scratch_operands = 3 : i64, tpu.core_type = #tpu.core_type<tc>, window_params = [{transform_indices = @transform_0, window_bounds = array<i64: 8, 256>}, {transform_indices = @transform_1, window_bounds = array<i64: 32, 256>}, {transform_indices = @transform_2, window_bounds = array<i64: 32, 256>}, {pipeline_mode = #tpu.pipeline_mode<synchronous>, transform_indices = @transform_3, window_bounds = array<i64: 128, 72>}, {pipeline_mode = #tpu.pipeline_mode<synchronous>, transform_indices = @transform_4, window_bounds = array<i64: 128, 288>}, {pipeline_mode = #tpu.pipeline_mode<synchronous>, transform_indices = @transform_5, window_bounds = array<i64: 128, 1>}, {transform_indices = @transform_6, window_bounds = array<i64: 32, 256>}, {transform_indices = @transform_7, window_bounds = array<i64: 32, 256>}]} {
    %c0 = arith.constant 0 : index
    %c0_0 = arith.constant 0 : index
    %0 = vector.load %arg2[%c0, %c0_0] : memref<32x256xbf16, #tpu.memory_space<vmem>>, vector<32x256xbf16>
    %1 = arith.extf %0 : vector<32x256xbf16> to vector<32x256xf32>
    %c0_1 = arith.constant 0 : index
    %c0_2 = arith.constant 0 : index
    %2 = vector.load %arg9[%c0_1, %c0_2] : memref<32x256xf32, #tpu.memory_space<vmem>>, vector<32x256xf32>
    tpu.vector_store %arg9[%c0_1, %c0_2], %1 {strides = array<i32>} : memref<32x256xf32, #tpu.memory_space<vmem>>, vector<32x256xf32>,
    %3 = tpu.iota {dimensions = array<i32: 1>} : vector<1x256xi32>
    %4 = arith.sitofp %3 : vector<1x256xi32> to vector<1x256xf32>
    %cst = arith.constant 1.600000e+01 : f32
    %5 = vector.broadcast %cst : f32 to vector<1x256xf32>
    %6 = arith.divf %4, %5 : vector<1x256xf32>
    %7 = math.floor %6 : vector<1x256xf32>
    %cst_3 = arith.constant 1.600000e+01 : f32
    %8 = vector.broadcast %cst_3 : f32 to vector<1x256xf32>
    %9 = arith.mulf %7, %8 : vector<1x256xf32>
    %10 = arith.subf %4, %9 : vector<1x256xf32>
    %cst_4 = arith.constant 5.000000e-01 : f32
    %11 = vector.broadcast %cst_4 : f32 to vector<1x256xf32>
    %12 = arith.cmpf olt, %10, %11 : vector<1x256xf32>
    %cst_5 = arith.constant 1.450000e+01 : f32
    %13 = vector.broadcast %cst_5 : f32 to vector<1x256xf32>
    %14 = arith.cmpf ogt, %10, %13 : vector<1x256xf32>
    %c0_6 = arith.constant 0 : index
    %c239 = arith.constant 239 : index
    %15 = vector.load %arg1[%c0_6, %c239] : memref<8x256xf32, #tpu.memory_space<vmem>>, vector<8x17xf32>
    %c0_7 = arith.constant 0 : index
    %c0_8 = arith.constant 0 : index
    %16 = vector.load %arg10[%c0_7, %c0_8] : memref<32x256xf32, #tpu.memory_space<vmem>>, vector<8x17xf32>
    tpu.vector_store %arg10[%c0_7, %c0_8], %15 {strides = array<i32>} : memref<32x256xf32, #tpu.memory_space<vmem>>, vector<8x17xf32>,
    %c0_9 = arith.constant 0 : index
    %c0_10 = arith.constant 0 : index
    %17 = vector.load %arg1[%c0_9, %c0_10] : memref<8x256xf32, #tpu.memory_space<vmem>>, vector<8x239xf32>
    %c0_11 = arith.constant 0 : index
    %c17 = arith.constant 17 : index
    %18 = vector.load %arg10[%c0_11, %c17] : memref<32x256xf32, #tpu.memory_space<vmem>>, vector<8x239xf32>
    tpu.vector_store %arg10[%c0_11, %c17], %17 {strides = array<i32>} : memref<32x256xf32, #tpu.memory_space<vmem>>, vector<8x239xf32>,
    %c0_12 = arith.constant 0 : index
    %c0_13 = arith.constant 0 : index
    %19 = vector.load %arg10[%c0_12, %c0_13] : memref<32x256xf32, #tpu.memory_space<vmem>>, vector<8x256xf32>
    %c0_14 = arith.constant 0 : index
    %c255 = arith.constant 255 : index
    %20 = vector.load %arg1[%c0_14, %c255] : memref<8x256xf32, #tpu.memory_space<vmem>>, vector<8x1xf32>
    %c0_15 = arith.constant 0 : index
    %c0_16 = arith.constant 0 : index
    %21 = vector.load %arg11[%c0_15, %c0_16] : memref<32x256xf32, #tpu.memory_space<vmem>>, vector<8x1xf32>
    tpu.vector_store %arg11[%c0_15, %c0_16], %20 {strides = array<i32>} : memref<32x256xf32, #tpu.memory_space<vmem>>, vector<8x1xf32>,
    %c0_17 = arith.constant 0 : index
    %c0_18 = arith.constant 0 : index
    %22 = vector.load %arg1[%c0_17, %c0_18] : memref<8x256xf32, #tpu.memory_space<vmem>>, vector<8x255xf32>
    %c0_19 = arith.constant 0 : index
    %c1 = arith.constant 1 : index
    %23 = vector.load %arg11[%c0_19, %c1] : memref<32x256xf32, #tpu.memory_space<vmem>>, vector<8x255xf32>
    tpu.vector_store %arg11[%c0_19, %c1], %22 {strides = array<i32>} : memref<32x256xf32, #tpu.memory_space<vmem>>, vector<8x255xf32>,
    %c0_20 = arith.constant 0 : index
    %c0_21 = arith.constant 0 : index
    %24 = vector.load %arg11[%c0_20, %c0_21] : memref<32x256xf32, #tpu.memory_space<vmem>>, vector<8x256xf32>
    %25 = vector.shape_cast %12 : vector<1x256xi1> to vector<1x256xi1>
    %26 = vector.broadcast %25 : vector<1x256xi1> to vector<8x256xi1>
    %27 = arith.select %26, %24, %19 : vector<8x256xi1>, vector<8x256xf32>
    %c0_22 = arith.constant 0 : index
    %c240 = arith.constant 240 : index
    %28 = vector.load %arg1[%c0_22, %c240] : memref<8x256xf32, #tpu.memory_space<vmem>>, vector<8x16xf32>
    %c0_23 = arith.constant 0 : index
    %c0_24 = arith.constant 0 : index
    %29 = vector.load %arg10[%c0_23, %c0_24] : memref<32x256xf32, #tpu.memory_space<vmem>>, vector<8x16xf32>
    tpu.vector_store %arg10[%c0_23, %c0_24], %28 {strides = array<i32>} : memref<32x256xf32, #tpu.memory_space<vmem>>, vector<8x16xf32>,
    %c0_25 = arith.constant 0 : index
    %c0_26 = arith.constant 0 : index
    %30 = vector.load %arg1[%c0_25, %c0_26] : memref<8x256xf32, #tpu.memory_space<vmem>>, vector<8x240xf32>
    %c0_27 = arith.constant 0 : index
    %c16 = arith.constant 16 : index
    %31 = vector.load %arg10[%c0_27, %c16] : memref<32x256xf32, #tpu.memory_space<vmem>>, vector<8x240xf32>
    tpu.vector_store %arg10[%c0_27, %c16], %30 {strides = array<i32>} : memref<32x256xf32, #tpu.memory_space<vmem>>, vector<8x240xf32>,
    %c0_28 = arith.constant 0 : index
    %c0_29 = arith.constant 0 : index
    %32 = vector.load %arg10[%c0_28, %c0_29] : memref<32x256xf32, #tpu.memory_space<vmem>>, vector<8x256xf32>
    %c0_30 = arith.constant 0 : index
    %c241 = arith.constant 241 : index
    %33 = vector.load %arg1[%c0_30, %c241] : memref<8x256xf32, #tpu.memory_space<vmem>>, vector<8x15xf32>
    %c0_31 = arith.constant 0 : index
    %c0_32 = arith.constant 0 : index
    %34 = vector.load %arg10[%c0_31, %c0_32] : memref<32x256xf32, #tpu.memory_space<vmem>>, vector<8x15xf32>
    tpu.vector_store %arg10[%c0_31, %c0_32], %33 {strides = array<i32>} : memref<32x256xf32, #tpu.memory_space<vmem>>, vector<8x15xf32>,
    %c0_33 = arith.constant 0 : index
    %c0_34 = arith.constant 0 : index
    %35 = vector.load %arg1[%c0_33, %c0_34] : memref<8x256xf32, #tpu.memory_space<vmem>>, vector<8x241xf32>
    %c0_35 = arith.constant 0 : index
    %c15 = arith.constant 15 : index
    %36 = vector.load %arg10[%c0_35, %c15] : memref<32x256xf32, #tpu.memory_space<vmem>>, vector<8x241xf32>
    tpu.vector_store %arg10[%c0_35, %c15], %35 {strides = array<i32>} : memref<32x256xf32, #tpu.memory_space<vmem>>, vector<8x241xf32>,
    %c0_36 = arith.constant 0 : index
    %c0_37 = arith.constant 0 : index
    %37 = vector.load %arg10[%c0_36, %c0_37] : memref<32x256xf32, #tpu.memory_space<vmem>>, vector<8x256xf32>
    %c0_38 = arith.constant 0 : index
    %c225 = arith.constant 225 : index
    %38 = vector.load %arg1[%c0_38, %c225] : memref<8x256xf32, #tpu.memory_space<vmem>>, vector<8x31xf32>
    %c0_39 = arith.constant 0 : index
    %c0_40 = arith.constant 0 : index
    %39 = vector.load %arg11[%c0_39, %c0_40] : memref<32x256xf32, #tpu.memory_space<vmem>>, vector<8x31xf32>
    tpu.vector_store %arg11[%c0_39, %c0_40], %38 {strides = array<i32>} : memref<32x256xf32, #tpu.memory_space<vmem>>, vector<8x31xf32>,
    %c0_41 = arith.constant 0 : index
    %c0_42 = arith.constant 0 : index
    %40 = vector.load %arg1[%c0_41, %c0_42] : memref<8x256xf32, #tpu.memory_space<vmem>>, vector<8x225xf32>
    %c0_43 = arith.constant 0 : index
    %c31 = arith.constant 31 : index
    %41 = vector.load %arg11[%c0_43, %c31] : memref<32x256xf32, #tpu.memory_space<vmem>>, vector<8x225xf32>
    tpu.vector_store %arg11[%c0_43, %c31], %40 {strides = array<i32>} : memref<32x256xf32, #tpu.memory_space<vmem>>, vector<8x225xf32>,
    %c0_44 = arith.constant 0 : index
    %c0_45 = arith.constant 0 : index
    %42 = vector.load %arg11[%c0_44, %c0_45] : memref<32x256xf32, #tpu.memory_space<vmem>>, vector<8x256xf32>
    %43 = vector.shape_cast %14 : vector<1x256xi1> to vector<1x256xi1>
    %44 = vector.broadcast %43 : vector<1x256xi1> to vector<8x256xi1>
    %45 = arith.select %44, %42, %37 : vector<8x256xi1>, vector<8x256xf32>
    %c0_46 = arith.constant 0 : index
    %c255_47 = arith.constant 255 : index
    %46 = vector.load %arg1[%c0_46, %c255_47] : memref<8x256xf32, #tpu.memory_space<vmem>>, vector<8x1xf32>
    %c0_48 = arith.constant 0 : index
    %c0_49 = arith.constant 0 : index
    %47 = vector.load %arg10[%c0_48, %c0_49] : memref<32x256xf32, #tpu.memory_space<vmem>>, vector<8x1xf32>
    tpu.vector_store %arg10[%c0_48, %c0_49], %46 {strides = array<i32>} : memref<32x256xf32, #tpu.memory_space<vmem>>, vector<8x1xf32>,
    %c0_50 = arith.constant 0 : index
    %c0_51 = arith.constant 0 : index
    %48 = vector.load %arg1[%c0_50, %c0_51] : memref<8x256xf32, #tpu.memory_space<vmem>>, vector<8x255xf32>
    %c0_52 = arith.constant 0 : index
    %c1_53 = arith.constant 1 : index
    %49 = vector.load %arg10[%c0_52, %c1_53] : memref<32x256xf32, #tpu.memory_space<vmem>>, vector<8x255xf32>
    tpu.vector_store %arg10[%c0_52, %c1_53], %48 {strides = array<i32>} : memref<32x256xf32, #tpu.memory_space<vmem>>, vector<8x255xf32>,
    %c0_54 = arith.constant 0 : index
    %c0_55 = arith.constant 0 : index
    %50 = vector.load %arg10[%c0_54, %c0_55] : memref<32x256xf32, #tpu.memory_space<vmem>>, vector<8x256xf32>
    %c0_56 = arith.constant 0 : index
    %c15_57 = arith.constant 15 : index
    %51 = vector.load %arg1[%c0_56, %c15_57] : memref<8x256xf32, #tpu.memory_space<vmem>>, vector<8x241xf32>
    %c0_58 = arith.constant 0 : index
    %c0_59 = arith.constant 0 : index
    %52 = vector.load %arg11[%c0_58, %c0_59] : memref<32x256xf32, #tpu.memory_space<vmem>>, vector<8x241xf32>
    tpu.vector_store %arg11[%c0_58, %c0_59], %51 {strides = array<i32>} : memref<32x256xf32, #tpu.memory_space<vmem>>, vector<8x241xf32>,
    %c0_60 = arith.constant 0 : index
    %c0_61 = arith.constant 0 : index
    %53 = vector.load %arg1[%c0_60, %c0_61] : memref<8x256xf32, #tpu.memory_space<vmem>>, vector<8x15xf32>
    %c0_62 = arith.constant 0 : index
    %c241_63 = arith.constant 241 : index
    %54 = vector.load %arg11[%c0_62, %c241_63] : memref<32x256xf32, #tpu.memory_space<vmem>>, vector<8x15xf32>
    tpu.vector_store %arg11[%c0_62, %c241_63], %53 {strides = array<i32>} : memref<32x256xf32, #tpu.memory_space<vmem>>, vector<8x15xf32>,
    %c0_64 = arith.constant 0 : index
    %c0_65 = arith.constant 0 : index
    %55 = vector.load %arg11[%c0_64, %c0_65] : memref<32x256xf32, #tpu.memory_space<vmem>>, vector<8x256xf32>
    %56 = vector.shape_cast %12 : vector<1x256xi1> to vector<1x256xi1>
    %57 = vector.broadcast %56 : vector<1x256xi1> to vector<8x256xi1>
    %58 = arith.select %57, %55, %50 : vector<8x256xi1>, vector<8x256xf32>
    %c0_66 = arith.constant 0 : index
    %c0_67 = arith.constant 0 : index
    %59 = vector.load %arg1[%c0_66, %c0_67] : memref<8x256xf32, #tpu.memory_space<vmem>>, vector<8x256xf32>
    %c0_68 = arith.constant 0 : index
    %c1_69 = arith.constant 1 : index
    %60 = vector.load %arg1[%c0_68, %c1_69] : memref<8x256xf32, #tpu.memory_space<vmem>>, vector<8x255xf32>
    %c0_70 = arith.constant 0 : index
    %c0_71 = arith.constant 0 : index
    %61 = vector.load %arg10[%c0_70, %c0_71] : memref<32x256xf32, #tpu.memory_space<vmem>>, vector<8x255xf32>
    tpu.vector_store %arg10[%c0_70, %c0_71], %60 {strides = array<i32>} : memref<32x256xf32, #tpu.memory_space<vmem>>, vector<8x255xf32>,
    %c0_72 = arith.constant 0 : index
    %c0_73 = arith.constant 0 : index
    %62 = vector.load %arg1[%c0_72, %c0_73] : memref<8x256xf32, #tpu.memory_space<vmem>>, vector<8x1xf32>
    %c0_74 = arith.constant 0 : index
    %c255_75 = arith.constant 255 : index
    %63 = vector.load %arg10[%c0_74, %c255_75] : memref<32x256xf32, #tpu.memory_space<vmem>>, vector<8x1xf32>
    tpu.vector_store %arg10[%c0_74, %c255_75], %62 {strides = array<i32>} : memref<32x256xf32, #tpu.memory_space<vmem>>, vector<8x1xf32>,
    %c0_76 = arith.constant 0 : index
    %c0_77 = arith.constant 0 : index
    %64 = vector.load %arg10[%c0_76, %c0_77] : memref<32x256xf32, #tpu.memory_space<vmem>>, vector<8x256xf32>
    %c0_78 = arith.constant 0 : index
    %c241_79 = arith.constant 241 : index
    %65 = vector.load %arg1[%c0_78, %c241_79] : memref<8x256xf32, #tpu.memory_space<vmem>>, vector<8x15xf32>
    %c0_80 = arith.constant 0 : index
    %c0_81 = arith.constant 0 : index
    %66 = vector.load %arg11[%c0_80, %c0_81] : memref<32x256xf32, #tpu.memory_space<vmem>>, vector<8x15xf32>
    tpu.vector_store %arg11[%c0_80, %c0_81], %65 {strides = array<i32>} : memref<32x256xf32, #tpu.memory_space<vmem>>, vector<8x15xf32>,
    %c0_82 = arith.constant 0 : index
    %c0_83 = arith.constant 0 : index
    %67 = vector.load %arg1[%c0_82, %c0_83] : memref<8x256xf32, #tpu.memory_space<vmem>>, vector<8x241xf32>
    %c0_84 = arith.constant 0 : index
    %c15_85 = arith.constant 15 : index
    %68 = vector.load %arg11[%c0_84, %c15_85] : memref<32x256xf32, #tpu.memory_space<vmem>>, vector<8x241xf32>
    tpu.vector_store %arg11[%c0_84, %c15_85], %67 {strides = array<i32>} : memref<32x256xf32, #tpu.memory_space<vmem>>, vector<8x241xf32>,
    %c0_86 = arith.constant 0 : index
    %c0_87 = arith.constant 0 : index
    %69 = vector.load %arg11[%c0_86, %c0_87] : memref<32x256xf32, #tpu.memory_space<vmem>>, vector<8x256xf32>
    %70 = vector.shape_cast %14 : vector<1x256xi1> to vector<1x256xi1>
    %71 = vector.broadcast %70 : vector<1x256xi1> to vector<8x256xi1>
    %72 = arith.select %71, %69, %64 : vector<8x256xi1>, vector<8x256xf32>
    %c0_88 = arith.constant 0 : index
    %c15_89 = arith.constant 15 : index
    %73 = vector.load %arg1[%c0_88, %c15_89] : memref<8x256xf32, #tpu.memory_space<vmem>>, vector<8x241xf32>
    %c0_90 = arith.constant 0 : index
    %c0_91 = arith.constant 0 : index
    %74 = vector.load %arg10[%c0_90, %c0_91] : memref<32x256xf32, #tpu.memory_space<vmem>>, vector<8x241xf32>
    tpu.vector_store %arg10[%c0_90, %c0_91], %73 {strides = array<i32>} : memref<32x256xf32, #tpu.memory_space<vmem>>, vector<8x241xf32>,
    %c0_92 = arith.constant 0 : index
    %c0_93 = arith.constant 0 : index
    %75 = vector.load %arg1[%c0_92, %c0_93] : memref<8x256xf32, #tpu.memory_space<vmem>>, vector<8x15xf32>
    %c0_94 = arith.constant 0 : index
    %c241_95 = arith.constant 241 : index
    %76 = vector.load %arg10[%c0_94, %c241_95] : memref<32x256xf32, #tpu.memory_space<vmem>>, vector<8x15xf32>
    tpu.vector_store %arg10[%c0_94, %c241_95], %75 {strides = array<i32>} : memref<32x256xf32, #tpu.memory_space<vmem>>, vector<8x15xf32>,
    %c0_96 = arith.constant 0 : index
    %c0_97 = arith.constant 0 : index
    %77 = vector.load %arg10[%c0_96, %c0_97] : memref<32x256xf32, #tpu.memory_space<vmem>>, vector<8x256xf32>
    %c0_98 = arith.constant 0 : index
    %c31_99 = arith.constant 31 : index
    %78 = vector.load %arg1[%c0_98, %c31_99] : memref<8x256xf32, #tpu.memory_space<vmem>>, vector<8x225xf32>
    %c0_100 = arith.constant 0 : index
    %c0_101 = arith.constant 0 : index
    %79 = vector.load %arg11[%c0_100, %c0_101] : memref<32x256xf32, #tpu.memory_space<vmem>>, vector<8x225xf32>
    tpu.vector_store %arg11[%c0_100, %c0_101], %78 {strides = array<i32>} : memref<32x256xf32, #tpu.memory_space<vmem>>, vector<8x225xf32>,
    %c0_102 = arith.constant 0 : index
    %c0_103 = arith.constant 0 : index
    %80 = vector.load %arg1[%c0_102, %c0_103] : memref<8x256xf32, #tpu.memory_space<vmem>>, vector<8x31xf32>
    %c0_104 = arith.constant 0 : index
    %c225_105 = arith.constant 225 : index
    %81 = vector.load %arg11[%c0_104, %c225_105] : memref<32x256xf32, #tpu.memory_space<vmem>>, vector<8x31xf32>
    tpu.vector_store %arg11[%c0_104, %c225_105], %80 {strides = array<i32>} : memref<32x256xf32, #tpu.memory_space<vmem>>, vector<8x31xf32>,
    %c0_106 = arith.constant 0 : index
    %c0_107 = arith.constant 0 : index
    %82 = vector.load %arg11[%c0_106, %c0_107] : memref<32x256xf32, #tpu.memory_space<vmem>>, vector<8x256xf32>
    %83 = vector.shape_cast %12 : vector<1x256xi1> to vector<1x256xi1>
    %84 = vector.broadcast %83 : vector<1x256xi1> to vector<8x256xi1>
    %85 = arith.select %84, %82, %77 : vector<8x256xi1>, vector<8x256xf32>
    %c0_108 = arith.constant 0 : index
    %c16_109 = arith.constant 16 : index
    %86 = vector.load %arg1[%c0_108, %c16_109] : memref<8x256xf32, #tpu.memory_space<vmem>>, vector<8x240xf32>
    %c0_110 = arith.constant 0 : index
    %c0_111 = arith.constant 0 : index
    %87 = vector.load %arg10[%c0_110, %c0_111] : memref<32x256xf32, #tpu.memory_space<vmem>>, vector<8x240xf32>
    tpu.vector_store %arg10[%c0_110, %c0_111], %86 {strides = array<i32>} : memref<32x256xf32, #tpu.memory_space<vmem>>, vector<8x240xf32>,
    %c0_112 = arith.constant 0 : index
    %c0_113 = arith.constant 0 : index
    %88 = vector.load %arg1[%c0_112, %c0_113] : memref<8x256xf32, #tpu.memory_space<vmem>>, vector<8x16xf32>
    %c0_114 = arith.constant 0 : index
    %c240_115 = arith.constant 240 : index
    %89 = vector.load %arg10[%c0_114, %c240_115] : memref<32x256xf32, #tpu.memory_space<vmem>>, vector<8x16xf32>
    tpu.vector_store %arg10[%c0_114, %c240_115], %88 {strides = array<i32>} : memref<32x256xf32, #tpu.memory_space<vmem>>, vector<8x16xf32>,
    %c0_116 = arith.constant 0 : index
    %c0_117 = arith.constant 0 : index
    %90 = vector.load %arg10[%c0_116, %c0_117] : memref<32x256xf32, #tpu.memory_space<vmem>>, vector<8x256xf32>
    %c0_118 = arith.constant 0 : index
    %c17_119 = arith.constant 17 : index
    %91 = vector.load %arg1[%c0_118, %c17_119] : memref<8x256xf32, #tpu.memory_space<vmem>>, vector<8x239xf32>
    %c0_120 = arith.constant 0 : index
    %c0_121 = arith.constant 0 : index
    %92 = vector.load %arg10[%c0_120, %c0_121] : memref<32x256xf32, #tpu.memory_space<vmem>>, vector<8x239xf32>
    tpu.vector_store %arg10[%c0_120, %c0_121], %91 {strides = array<i32>} : memref<32x256xf32, #tpu.memory_space<vmem>>, vector<8x239xf32>,
    %c0_122 = arith.constant 0 : index
    %c0_123 = arith.constant 0 : index
    %93 = vector.load %arg1[%c0_122, %c0_123] : memref<8x256xf32, #tpu.memory_space<vmem>>, vector<8x17xf32>
    %c0_124 = arith.constant 0 : index
    %c239_125 = arith.constant 239 : index
    %94 = vector.load %arg10[%c0_124, %c239_125] : memref<32x256xf32, #tpu.memory_space<vmem>>, vector<8x17xf32>
    tpu.vector_store %arg10[%c0_124, %c239_125], %93 {strides = array<i32>} : memref<32x256xf32, #tpu.memory_space<vmem>>, vector<8x17xf32>,
    %c0_126 = arith.constant 0 : index
    %c0_127 = arith.constant 0 : index
    %95 = vector.load %arg10[%c0_126, %c0_127] : memref<32x256xf32, #tpu.memory_space<vmem>>, vector<8x256xf32>
    %c0_128 = arith.constant 0 : index
    %c1_129 = arith.constant 1 : index
    %96 = vector.load %arg1[%c0_128, %c1_129] : memref<8x256xf32, #tpu.memory_space<vmem>>, vector<8x255xf32>
    %c0_130 = arith.constant 0 : index
    %c0_131 = arith.constant 0 : index
    %97 = vector.load %arg11[%c0_130, %c0_131] : memref<32x256xf32, #tpu.memory_space<vmem>>, vector<8x255xf32>
    tpu.vector_store %arg11[%c0_130, %c0_131], %96 {strides = array<i32>} : memref<32x256xf32, #tpu.memory_space<vmem>>, vector<8x255xf32>,
    %c0_132 = arith.constant 0 : index
    %c0_133 = arith.constant 0 : index
    %98 = vector.load %arg1[%c0_132, %c0_133] : memref<8x256xf32, #tpu.memory_space<vmem>>, vector<8x1xf32>
    %c0_134 = arith.constant 0 : index
    %c255_135 = arith.constant 255 : index
    %99 = vector.load %arg11[%c0_134, %c255_135] : memref<32x256xf32, #tpu.memory_space<vmem>>, vector<8x1xf32>
    tpu.vector_store %arg11[%c0_134, %c255_135], %98 {strides = array<i32>} : memref<32x256xf32, #tpu.memory_space<vmem>>, vector<8x1xf32>,
    %c0_136 = arith.constant 0 : index
    %c0_137 = arith.constant 0 : index
    %100 = vector.load %arg11[%c0_136, %c0_137] : memref<32x256xf32, #tpu.memory_space<vmem>>, vector<8x256xf32>
    %101 = vector.shape_cast %14 : vector<1x256xi1> to vector<1x256xi1>
    %102 = vector.broadcast %101 : vector<1x256xi1> to vector<8x256xi1>
    %103 = arith.select %102, %100, %95 : vector<8x256xi1>, vector<8x256xf32>
    %104 = tpu.concatenate %27, %32, %45, %58, %59, %72, %85, %90, %103 in 0 : vector<8x256xf32>, vector<8x256xf32>, vector<8x256xf32>, vector<8x256xf32>, vector<8x256xf32>, vector<8x256xf32>, vector<8x256xf32>, vector<8x256xf32>, vector<8x256xf32> -> vector<72x256xf32>
    %105 = arith.truncf %104 : vector<72x256xf32> to vector<72x256xbf16>
    %106 = tpu.iota {dimensions = array<i32: 1>} : vector<1x256xi32>
    %107 = arith.sitofp %106 : vector<1x256xi32> to vector<1x256xf32>
    %cst_138 = arith.constant 1.600000e+01 : f32
    %108 = vector.broadcast %cst_138 : f32 to vector<1x256xf32>
    %109 = arith.divf %107, %108 : vector<1x256xf32>
    %110 = math.floor %109 : vector<1x256xf32>
    %cst_139 = arith.constant 1.600000e+01 : f32
    %111 = vector.broadcast %cst_139 : f32 to vector<1x256xf32>
    %112 = arith.mulf %110, %111 : vector<1x256xf32>
    %113 = arith.subf %107, %112 : vector<1x256xf32>
    %cst_140 = arith.constant 5.000000e-01 : f32
    %114 = vector.broadcast %cst_140 : f32 to vector<1x256xf32>
    %115 = arith.cmpf olt, %113, %114 : vector<1x256xf32>
    %cst_141 = arith.constant 1.450000e+01 : f32
    %116 = vector.broadcast %cst_141 : f32 to vector<1x256xf32>
    %117 = arith.cmpf ogt, %113, %116 : vector<1x256xf32>
    %c0_142 = arith.constant 0 : index
    %c239_143 = arith.constant 239 : index
    %118 = vector.load %arg9[%c0_142, %c239_143] : memref<32x256xf32, #tpu.memory_space<vmem>>, vector<32x17xf32>
    %c0_144 = arith.constant 0 : index
    %c0_145 = arith.constant 0 : index
    %119 = vector.load %arg10[%c0_144, %c0_145] : memref<32x256xf32, #tpu.memory_space<vmem>>, vector<32x17xf32>
    tpu.vector_store %arg10[%c0_144, %c0_145], %118 {strides = array<i32>} : memref<32x256xf32, #tpu.memory_space<vmem>>, vector<32x17xf32>,
    %c0_146 = arith.constant 0 : index
    %c0_147 = arith.constant 0 : index
    %120 = vector.load %arg9[%c0_146, %c0_147] : memref<32x256xf32, #tpu.memory_space<vmem>>, vector<32x239xf32>
    %c0_148 = arith.constant 0 : index
    %c17_149 = arith.constant 17 : index
    %121 = vector.load %arg10[%c0_148, %c17_149] : memref<32x256xf32, #tpu.memory_space<vmem>>, vector<32x239xf32>
    tpu.vector_store %arg10[%c0_148, %c17_149], %120 {strides = array<i32>} : memref<32x256xf32, #tpu.memory_space<vmem>>, vector<32x239xf32>,
    %c0_150 = arith.constant 0 : index
    %c0_151 = arith.constant 0 : index
    %122 = vector.load %arg10[%c0_150, %c0_151] : memref<32x256xf32, #tpu.memory_space<vmem>>, vector<32x256xf32>
    %c0_152 = arith.constant 0 : index
    %c255_153 = arith.constant 255 : index
    %123 = vector.load %arg9[%c0_152, %c255_153] : memref<32x256xf32, #tpu.memory_space<vmem>>, vector<32x1xf32>
    %c0_154 = arith.constant 0 : index
    %c0_155 = arith.constant 0 : index
    %124 = vector.load %arg11[%c0_154, %c0_155] : memref<32x256xf32, #tpu.memory_space<vmem>>, vector<32x1xf32>
    tpu.vector_store %arg11[%c0_154, %c0_155], %123 {strides = array<i32>} : memref<32x256xf32, #tpu.memory_space<vmem>>, vector<32x1xf32>,
    %c0_156 = arith.constant 0 : index
    %c0_157 = arith.constant 0 : index
    %125 = vector.load %arg9[%c0_156, %c0_157] : memref<32x256xf32, #tpu.memory_space<vmem>>, vector<32x255xf32>
    %c0_158 = arith.constant 0 : index
    %c1_159 = arith.constant 1 : index
    %126 = vector.load %arg11[%c0_158, %c1_159] : memref<32x256xf32, #tpu.memory_space<vmem>>, vector<32x255xf32>
    tpu.vector_store %arg11[%c0_158, %c1_159], %125 {strides = array<i32>} : memref<32x256xf32, #tpu.memory_space<vmem>>, vector<32x255xf32>,
    %c0_160 = arith.constant 0 : index
    %c0_161 = arith.constant 0 : index
    %127 = vector.load %arg11[%c0_160, %c0_161] : memref<32x256xf32, #tpu.memory_space<vmem>>, vector<32x256xf32>
    %128 = vector.shape_cast %115 : vector<1x256xi1> to vector<1x256xi1>
    %129 = vector.broadcast %128 : vector<1x256xi1> to vector<32x256xi1>
    %130 = arith.select %129, %127, %122 : vector<32x256xi1>, vector<32x256xf32>
    %c0_162 = arith.constant 0 : index
    %c240_163 = arith.constant 240 : index
    %131 = vector.load %arg9[%c0_162, %c240_163] : memref<32x256xf32, #tpu.memory_space<vmem>>, vector<32x16xf32>
    %c0_164 = arith.constant 0 : index
    %c0_165 = arith.constant 0 : index
    %132 = vector.load %arg10[%c0_164, %c0_165] : memref<32x256xf32, #tpu.memory_space<vmem>>, vector<32x16xf32>
    tpu.vector_store %arg10[%c0_164, %c0_165], %131 {strides = array<i32>} : memref<32x256xf32, #tpu.memory_space<vmem>>, vector<32x16xf32>,
    %c0_166 = arith.constant 0 : index
    %c0_167 = arith.constant 0 : index
    %133 = vector.load %arg9[%c0_166, %c0_167] : memref<32x256xf32, #tpu.memory_space<vmem>>, vector<32x240xf32>
    %c0_168 = arith.constant 0 : index
    %c16_169 = arith.constant 16 : index
    %134 = vector.load %arg10[%c0_168, %c16_169] : memref<32x256xf32, #tpu.memory_space<vmem>>, vector<32x240xf32>
    tpu.vector_store %arg10[%c0_168, %c16_169], %133 {strides = array<i32>} : memref<32x256xf32, #tpu.memory_space<vmem>>, vector<32x240xf32>,
    %c0_170 = arith.constant 0 : index
    %c0_171 = arith.constant 0 : index
    %135 = vector.load %arg10[%c0_170, %c0_171] : memref<32x256xf32, #tpu.memory_space<vmem>>, vector<32x256xf32>
    %c0_172 = arith.constant 0 : index
    %c241_173 = arith.constant 241 : index
    %136 = vector.load %arg9[%c0_172, %c241_173] : memref<32x256xf32, #tpu.memory_space<vmem>>, vector<32x15xf32>
    %c0_174 = arith.constant 0 : index
    %c0_175 = arith.constant 0 : index
    %137 = vector.load %arg10[%c0_174, %c0_175] : memref<32x256xf32, #tpu.memory_space<vmem>>, vector<32x15xf32>
    tpu.vector_store %arg10[%c0_174, %c0_175], %136 {strides = array<i32>} : memref<32x256xf32, #tpu.memory_space<vmem>>, vector<32x15xf32>,
    %c0_176 = arith.constant 0 : index
    %c0_177 = arith.constant 0 : index
    %138 = vector.load %arg9[%c0_176, %c0_177] : memref<32x256xf32, #tpu.memory_space<vmem>>, vector<32x241xf32>
    %c0_178 = arith.constant 0 : index
    %c15_179 = arith.constant 15 : index
    %139 = vector.load %arg10[%c0_178, %c15_179] : memref<32x256xf32, #tpu.memory_space<vmem>>, vector<32x241xf32>
    tpu.vector_store %arg10[%c0_178, %c15_179], %138 {strides = array<i32>} : memref<32x256xf32, #tpu.memory_space<vmem>>, vector<32x241xf32>,
    %c0_180 = arith.constant 0 : index
    %c0_181 = arith.constant 0 : index
    %140 = vector.load %arg10[%c0_180, %c0_181] : memref<32x256xf32, #tpu.memory_space<vmem>>, vector<32x256xf32>
    %c0_182 = arith.constant 0 : index
    %c225_183 = arith.constant 225 : index
    %141 = vector.load %arg9[%c0_182, %c225_183] : memref<32x256xf32, #tpu.memory_space<vmem>>, vector<32x31xf32>
    %c0_184 = arith.constant 0 : index
    %c0_185 = arith.constant 0 : index
    %142 = vector.load %arg11[%c0_184, %c0_185] : memref<32x256xf32, #tpu.memory_space<vmem>>, vector<32x31xf32>
    tpu.vector_store %arg11[%c0_184, %c0_185], %141 {strides = array<i32>} : memref<32x256xf32, #tpu.memory_space<vmem>>, vector<32x31xf32>,
    %c0_186 = arith.constant 0 : index
    %c0_187 = arith.constant 0 : index
    %143 = vector.load %arg9[%c0_186, %c0_187] : memref<32x256xf32, #tpu.memory_space<vmem>>, vector<32x225xf32>
    %c0_188 = arith.constant 0 : index
    %c31_189 = arith.constant 31 : index
    %144 = vector.load %arg11[%c0_188, %c31_189] : memref<32x256xf32, #tpu.memory_space<vmem>>, vector<32x225xf32>
    tpu.vector_store %arg11[%c0_188, %c31_189], %143 {strides = array<i32>} : memref<32x256xf32, #tpu.memory_space<vmem>>, vector<32x225xf32>,
    %c0_190 = arith.constant 0 : index
    %c0_191 = arith.constant 0 : index
    %145 = vector.load %arg11[%c0_190, %c0_191] : memref<32x256xf32, #tpu.memory_space<vmem>>, vector<32x256xf32>
    %146 = vector.shape_cast %117 : vector<1x256xi1> to vector<1x256xi1>
    %147 = vector.broadcast %146 : vector<1x256xi1> to vector<32x256xi1>
    %148 = arith.select %147, %145, %140 : vector<32x256xi1>, vector<32x256xf32>
    %c0_192 = arith.constant 0 : index
    %c255_193 = arith.constant 255 : index
    %149 = vector.load %arg9[%c0_192, %c255_193] : memref<32x256xf32, #tpu.memory_space<vmem>>, vector<32x1xf32>
    %c0_194 = arith.constant 0 : index
    %c0_195 = arith.constant 0 : index
    %150 = vector.load %arg10[%c0_194, %c0_195] : memref<32x256xf32, #tpu.memory_space<vmem>>, vector<32x1xf32>
    tpu.vector_store %arg10[%c0_194, %c0_195], %149 {strides = array<i32>} : memref<32x256xf32, #tpu.memory_space<vmem>>, vector<32x1xf32>,
    %c0_196 = arith.constant 0 : index
    %c0_197 = arith.constant 0 : index
    %151 = vector.load %arg9[%c0_196, %c0_197] : memref<32x256xf32, #tpu.memory_space<vmem>>, vector<32x255xf32>
    %c0_198 = arith.constant 0 : index
    %c1_199 = arith.constant 1 : index
    %152 = vector.load %arg10[%c0_198, %c1_199] : memref<32x256xf32, #tpu.memory_space<vmem>>, vector<32x255xf32>
    tpu.vector_store %arg10[%c0_198, %c1_199], %151 {strides = array<i32>} : memref<32x256xf32, #tpu.memory_space<vmem>>, vector<32x255xf32>,
    %c0_200 = arith.constant 0 : index
    %c0_201 = arith.constant 0 : index
    %153 = vector.load %arg10[%c0_200, %c0_201] : memref<32x256xf32, #tpu.memory_space<vmem>>, vector<32x256xf32>
    %c0_202 = arith.constant 0 : index
    %c15_203 = arith.constant 15 : index
    %154 = vector.load %arg9[%c0_202, %c15_203] : memref<32x256xf32, #tpu.memory_space<vmem>>, vector<32x241xf32>
    %c0_204 = arith.constant 0 : index
    %c0_205 = arith.constant 0 : index
    %155 = vector.load %arg11[%c0_204, %c0_205] : memref<32x256xf32, #tpu.memory_space<vmem>>, vector<32x241xf32>
    tpu.vector_store %arg11[%c0_204, %c0_205], %154 {strides = array<i32>} : memref<32x256xf32, #tpu.memory_space<vmem>>, vector<32x241xf32>,
    %c0_206 = arith.constant 0 : index
    %c0_207 = arith.constant 0 : index
    %156 = vector.load %arg9[%c0_206, %c0_207] : memref<32x256xf32, #tpu.memory_space<vmem>>, vector<32x15xf32>
    %c0_208 = arith.constant 0 : index
    %c241_209 = arith.constant 241 : index
    %157 = vector.load %arg11[%c0_208, %c241_209] : memref<32x256xf32, #tpu.memory_space<vmem>>, vector<32x15xf32>
    tpu.vector_store %arg11[%c0_208, %c241_209], %156 {strides = array<i32>} : memref<32x256xf32, #tpu.memory_space<vmem>>, vector<32x15xf32>,
    %c0_210 = arith.constant 0 : index
    %c0_211 = arith.constant 0 : index
    %158 = vector.load %arg11[%c0_210, %c0_211] : memref<32x256xf32, #tpu.memory_space<vmem>>, vector<32x256xf32>
    %159 = vector.shape_cast %115 : vector<1x256xi1> to vector<1x256xi1>
    %160 = vector.broadcast %159 : vector<1x256xi1> to vector<32x256xi1>
    %161 = arith.select %160, %158, %153 : vector<32x256xi1>, vector<32x256xf32>
    %c0_212 = arith.constant 0 : index
    %c0_213 = arith.constant 0 : index
    %162 = vector.load %arg9[%c0_212, %c0_213] : memref<32x256xf32, #tpu.memory_space<vmem>>, vector<32x256xf32>
    %c0_214 = arith.constant 0 : index
    %c1_215 = arith.constant 1 : index
    %163 = vector.load %arg9[%c0_214, %c1_215] : memref<32x256xf32, #tpu.memory_space<vmem>>, vector<32x255xf32>
    %c0_216 = arith.constant 0 : index
    %c0_217 = arith.constant 0 : index
    %164 = vector.load %arg10[%c0_216, %c0_217] : memref<32x256xf32, #tpu.memory_space<vmem>>, vector<32x255xf32>
    tpu.vector_store %arg10[%c0_216, %c0_217], %163 {strides = array<i32>} : memref<32x256xf32, #tpu.memory_space<vmem>>, vector<32x255xf32>,
    %c0_218 = arith.constant 0 : index
    %c0_219 = arith.constant 0 : index
    %165 = vector.load %arg9[%c0_218, %c0_219] : memref<32x256xf32, #tpu.memory_space<vmem>>, vector<32x1xf32>
    %c0_220 = arith.constant 0 : index
    %c255_221 = arith.constant 255 : index
    %166 = vector.load %arg10[%c0_220, %c255_221] : memref<32x256xf32, #tpu.memory_space<vmem>>, vector<32x1xf32>
    tpu.vector_store %arg10[%c0_220, %c255_221], %165 {strides = array<i32>} : memref<32x256xf32, #tpu.memory_space<vmem>>, vector<32x1xf32>,
    %c0_222 = arith.constant 0 : index
    %c0_223 = arith.constant 0 : index
    %167 = vector.load %arg10[%c0_222, %c0_223] : memref<32x256xf32, #tpu.memory_space<vmem>>, vector<32x256xf32>
    %c0_224 = arith.constant 0 : index
    %c241_225 = arith.constant 241 : index
    %168 = vector.load %arg9[%c0_224, %c241_225] : memref<32x256xf32, #tpu.memory_space<vmem>>, vector<32x15xf32>
    %c0_226 = arith.constant 0 : index
    %c0_227 = arith.constant 0 : index
    %169 = vector.load %arg11[%c0_226, %c0_227] : memref<32x256xf32, #tpu.memory_space<vmem>>, vector<32x15xf32>
    tpu.vector_store %arg11[%c0_226, %c0_227], %168 {strides = array<i32>} : memref<32x256xf32, #tpu.memory_space<vmem>>, vector<32x15xf32>,
    %c0_228 = arith.constant 0 : index
    %c0_229 = arith.constant 0 : index
    %170 = vector.load %arg9[%c0_228, %c0_229] : memref<32x256xf32, #tpu.memory_space<vmem>>, vector<32x241xf32>
    %c0_230 = arith.constant 0 : index
    %c15_231 = arith.constant 15 : index
    %171 = vector.load %arg11[%c0_230, %c15_231] : memref<32x256xf32, #tpu.memory_space<vmem>>, vector<32x241xf32>
    tpu.vector_store %arg11[%c0_230, %c15_231], %170 {strides = array<i32>} : memref<32x256xf32, #tpu.memory_space<vmem>>, vector<32x241xf32>,
    %c0_232 = arith.constant 0 : index
    %c0_233 = arith.constant 0 : index
    %172 = vector.load %arg11[%c0_232, %c0_233] : memref<32x256xf32, #tpu.memory_space<vmem>>, vector<32x256xf32>
    %173 = vector.shape_cast %117 : vector<1x256xi1> to vector<1x256xi1>
    %174 = vector.broadcast %173 : vector<1x256xi1> to vector<32x256xi1>
    %175 = arith.select %174, %172, %167 : vector<32x256xi1>, vector<32x256xf32>
    %c0_234 = arith.constant 0 : index
    %c15_235 = arith.constant 15 : index
    %176 = vector.load %arg9[%c0_234, %c15_235] : memref<32x256xf32, #tpu.memory_space<vmem>>, vector<32x241xf32>
    %c0_236 = arith.constant 0 : index
    %c0_237 = arith.constant 0 : index
    %177 = vector.load %arg10[%c0_236, %c0_237] : memref<32x256xf32, #tpu.memory_space<vmem>>, vector<32x241xf32>
    tpu.vector_store %arg10[%c0_236, %c0_237], %176 {strides = array<i32>} : memref<32x256xf32, #tpu.memory_space<vmem>>, vector<32x241xf32>,
    %c0_238 = arith.constant 0 : index
    %c0_239 = arith.constant 0 : index
    %178 = vector.load %arg9[%c0_238, %c0_239] : memref<32x256xf32, #tpu.memory_space<vmem>>, vector<32x15xf32>
    %c0_240 = arith.constant 0 : index
    %c241_241 = arith.constant 241 : index
    %179 = vector.load %arg10[%c0_240, %c241_241] : memref<32x256xf32, #tpu.memory_space<vmem>>, vector<32x15xf32>
    tpu.vector_store %arg10[%c0_240, %c241_241], %178 {strides = array<i32>} : memref<32x256xf32, #tpu.memory_space<vmem>>, vector<32x15xf32>,
    %c0_242 = arith.constant 0 : index
    %c0_243 = arith.constant 0 : index
    %180 = vector.load %arg10[%c0_242, %c0_243] : memref<32x256xf32, #tpu.memory_space<vmem>>, vector<32x256xf32>
    %c0_244 = arith.constant 0 : index
    %c31_245 = arith.constant 31 : index
    %181 = vector.load %arg9[%c0_244, %c31_245] : memref<32x256xf32, #tpu.memory_space<vmem>>, vector<32x225xf32>
    %c0_246 = arith.constant 0 : index
    %c0_247 = arith.constant 0 : index
    %182 = vector.load %arg11[%c0_246, %c0_247] : memref<32x256xf32, #tpu.memory_space<vmem>>, vector<32x225xf32>
    tpu.vector_store %arg11[%c0_246, %c0_247], %181 {strides = array<i32>} : memref<32x256xf32, #tpu.memory_space<vmem>>, vector<32x225xf32>,
    %c0_248 = arith.constant 0 : index
    %c0_249 = arith.constant 0 : index
    %183 = vector.load %arg9[%c0_248, %c0_249] : memref<32x256xf32, #tpu.memory_space<vmem>>, vector<32x31xf32>
    %c0_250 = arith.constant 0 : index
    %c225_251 = arith.constant 225 : index
    %184 = vector.load %arg11[%c0_250, %c225_251] : memref<32x256xf32, #tpu.memory_space<vmem>>, vector<32x31xf32>
    tpu.vector_store %arg11[%c0_250, %c225_251], %183 {strides = array<i32>} : memref<32x256xf32, #tpu.memory_space<vmem>>, vector<32x31xf32>,
    %c0_252 = arith.constant 0 : index
    %c0_253 = arith.constant 0 : index
    %185 = vector.load %arg11[%c0_252, %c0_253] : memref<32x256xf32, #tpu.memory_space<vmem>>, vector<32x256xf32>
    %186 = vector.shape_cast %115 : vector<1x256xi1> to vector<1x256xi1>
    %187 = vector.broadcast %186 : vector<1x256xi1> to vector<32x256xi1>
    %188 = arith.select %187, %185, %180 : vector<32x256xi1>, vector<32x256xf32>
    %c0_254 = arith.constant 0 : index
    %c16_255 = arith.constant 16 : index
    %189 = vector.load %arg9[%c0_254, %c16_255] : memref<32x256xf32, #tpu.memory_space<vmem>>, vector<32x240xf32>
    %c0_256 = arith.constant 0 : index
    %c0_257 = arith.constant 0 : index
    %190 = vector.load %arg10[%c0_256, %c0_257] : memref<32x256xf32, #tpu.memory_space<vmem>>, vector<32x240xf32>
    tpu.vector_store %arg10[%c0_256, %c0_257], %189 {strides = array<i32>} : memref<32x256xf32, #tpu.memory_space<vmem>>, vector<32x240xf32>,
    %c0_258 = arith.constant 0 : index
    %c0_259 = arith.constant 0 : index
    %191 = vector.load %arg9[%c0_258, %c0_259] : memref<32x256xf32, #tpu.memory_space<vmem>>, vector<32x16xf32>
    %c0_260 = arith.constant 0 : index
    %c240_261 = arith.constant 240 : index
    %192 = vector.load %arg10[%c0_260, %c240_261] : memref<32x256xf32, #tpu.memory_space<vmem>>, vector<32x16xf32>
    tpu.vector_store %arg10[%c0_260, %c240_261], %191 {strides = array<i32>} : memref<32x256xf32, #tpu.memory_space<vmem>>, vector<32x16xf32>,
    %c0_262 = arith.constant 0 : index
    %c0_263 = arith.constant 0 : index
    %193 = vector.load %arg10[%c0_262, %c0_263] : memref<32x256xf32, #tpu.memory_space<vmem>>, vector<32x256xf32>
    %c0_264 = arith.constant 0 : index
    %c17_265 = arith.constant 17 : index
    %194 = vector.load %arg9[%c0_264, %c17_265] : memref<32x256xf32, #tpu.memory_space<vmem>>, vector<32x239xf32>
    %c0_266 = arith.constant 0 : index
    %c0_267 = arith.constant 0 : index
    %195 = vector.load %arg10[%c0_266, %c0_267] : memref<32x256xf32, #tpu.memory_space<vmem>>, vector<32x239xf32>
    tpu.vector_store %arg10[%c0_266, %c0_267], %194 {strides = array<i32>} : memref<32x256xf32, #tpu.memory_space<vmem>>, vector<32x239xf32>,
    %c0_268 = arith.constant 0 : index
    %c0_269 = arith.constant 0 : index
    %196 = vector.load %arg9[%c0_268, %c0_269] : memref<32x256xf32, #tpu.memory_space<vmem>>, vector<32x17xf32>
    %c0_270 = arith.constant 0 : index
    %c239_271 = arith.constant 239 : index
    %197 = vector.load %arg10[%c0_270, %c239_271] : memref<32x256xf32, #tpu.memory_space<vmem>>, vector<32x17xf32>
    tpu.vector_store %arg10[%c0_270, %c239_271], %196 {strides = array<i32>} : memref<32x256xf32, #tpu.memory_space<vmem>>, vector<32x17xf32>,
    %c0_272 = arith.constant 0 : index
    %c0_273 = arith.constant 0 : index
    %198 = vector.load %arg10[%c0_272, %c0_273] : memref<32x256xf32, #tpu.memory_space<vmem>>, vector<32x256xf32>
    %c0_274 = arith.constant 0 : index
    %c1_275 = arith.constant 1 : index
    %199 = vector.load %arg9[%c0_274, %c1_275] : memref<32x256xf32, #tpu.memory_space<vmem>>, vector<32x255xf32>
    %c0_276 = arith.constant 0 : index
    %c0_277 = arith.constant 0 : index
    %200 = vector.load %arg11[%c0_276, %c0_277] : memref<32x256xf32, #tpu.memory_space<vmem>>, vector<32x255xf32>
    tpu.vector_store %arg11[%c0_276, %c0_277], %199 {strides = array<i32>} : memref<32x256xf32, #tpu.memory_space<vmem>>, vector<32x255xf32>,
    %c0_278 = arith.constant 0 : index
    %c0_279 = arith.constant 0 : index
    %201 = vector.load %arg9[%c0_278, %c0_279] : memref<32x256xf32, #tpu.memory_space<vmem>>, vector<32x1xf32>
    %c0_280 = arith.constant 0 : index
    %c255_281 = arith.constant 255 : index
    %202 = vector.load %arg11[%c0_280, %c255_281] : memref<32x256xf32, #tpu.memory_space<vmem>>, vector<32x1xf32>
    tpu.vector_store %arg11[%c0_280, %c255_281], %201 {strides = array<i32>} : memref<32x256xf32, #tpu.memory_space<vmem>>, vector<32x1xf32>,
    %c0_282 = arith.constant 0 : index
    %c0_283 = arith.constant 0 : index
    %203 = vector.load %arg11[%c0_282, %c0_283] : memref<32x256xf32, #tpu.memory_space<vmem>>, vector<32x256xf32>
    %204 = vector.shape_cast %117 : vector<1x256xi1> to vector<1x256xi1>
    %205 = vector.broadcast %204 : vector<1x256xi1> to vector<32x256xi1>
    %206 = arith.select %205, %203, %198 : vector<32x256xi1>, vector<32x256xf32>
    %207 = tpu.concatenate %130, %135, %148, %161, %162, %175, %188, %193, %206 in 0 : vector<32x256xf32>, vector<32x256xf32>, vector<32x256xf32>, vector<32x256xf32>, vector<32x256xf32>, vector<32x256xf32>, vector<32x256xf32>, vector<32x256xf32>, vector<32x256xf32> -> vector<288x256xf32>
    %208 = arith.truncf %207 : vector<288x256xf32> to vector<288x256xbf16>
    %c0_284 = arith.constant 0 : index
    %c0_285 = arith.constant 0 : index
    %209 = vector.load %arg4[%c0_284, %c0_285] : memref<128x72xbf16, #tpu.memory_space<vmem>>, vector<128x72xbf16>
    %cst_286 = arith.constant dense<0.000000e+00> : vector<128x256xf32>
    %210 = tpu.matmul %209, %105, %cst_286 {dimension_numbers = #tpu.dot_dimension_numbers<[1], [0], [0], [1], [0, 0, 1, 1], [], []>} : vector<128x72xbf16>, vector<72x256xbf16>, vector<128x256xf32> -> vector<128x256xf32>
    %c0_287 = arith.constant 0 : index
    %c0_288 = arith.constant 0 : index
    %211 = vector.load %arg5[%c0_287, %c0_288] : memref<128x288xbf16, #tpu.memory_space<vmem>>, vector<128x288xbf16>
    %cst_289 = arith.constant dense<0.000000e+00> : vector<128x256xf32>
    %212 = tpu.matmul %211, %208, %cst_289 {dimension_numbers = #tpu.dot_dimension_numbers<[1], [0], [0], [1], [0, 0, 1, 1], [], []>} : vector<128x288xbf16>, vector<288x256xbf16>, vector<128x256xf32> -> vector<128x256xf32>
    %213 = arith.addf %210, %212 : vector<128x256xf32>
    %c0_290 = arith.constant 0 : index
    %c0_291 = arith.constant 0 : index
    %214 = vector.load %arg6[%c0_290, %c0_291] : memref<128x1xf32, #tpu.memory_space<vmem>>, vector<128x1xf32>
    %215 = vector.broadcast %214 : vector<128x1xf32> to vector<128x256xf32>
    %216 = arith.addf %213, %215 : vector<128x256xf32>
    %217 = vector.extract_strided_slice %216 {offsets = [0, 0], sizes = [96, 256], strides = [1, 1]} : vector<128x256xf32> to vector<96x256xf32>
    %218 = arith.negf %217 : vector<96x256xf32>
    %219 = math.exp %218 : vector<96x256xf32>
    %cst_292 = arith.constant 1.000000e+00 : f32
    %220 = vector.broadcast %cst_292 : f32 to vector<96x256xf32>
    %221 = arith.addf %220, %219 : vector<96x256xf32>
    %222 = arith.divf %220, %221 : vector<96x256xf32>
    %223 = vector.extract_strided_slice %222 {offsets = [0, 0], sizes = [32, 256], strides = [1, 1]} : vector<96x256xf32> to vector<32x256xf32>
    %224 = vector.extract_strided_slice %222 {offsets = [32, 0], sizes = [32, 256], strides = [1, 1]} : vector<96x256xf32> to vector<32x256xf32>
    %225 = vector.extract_strided_slice %222 {offsets = [64, 0], sizes = [32, 256], strides = [1, 1]} : vector<96x256xf32> to vector<32x256xf32>
    %226 = vector.extract_strided_slice %216 {offsets = [96, 0], sizes = [32, 256], strides = [1, 1]} : vector<128x256xf32> to vector<32x256xf32>
    %227 = math.tanh %226 : vector<32x256xf32>
    %c0_293 = arith.constant 0 : index
    %c0_294 = arith.constant 0 : index
    %228 = vector.load %arg3[%c0_293, %c0_294] : memref<32x256xf32, #tpu.memory_space<vmem>>, vector<32x256xf32>
    %229 = arith.mulf %224, %228 : vector<32x256xf32>
    %230 = arith.mulf %223, %227 : vector<32x256xf32>
    %231 = arith.addf %229, %230 : vector<32x256xf32>
    %232 = math.tanh %231 : vector<32x256xf32>
    %233 = arith.mulf %225, %232 : vector<32x256xf32>
    %c0_295 = arith.constant 0 : index
    %c0_296 = arith.constant 0 : index
    %234 = vector.load %arg8[%c0_295, %c0_296] : memref<32x256xf32, #tpu.memory_space<vmem>>, vector<32x256xf32>
    tpu.vector_store %arg8[%c0_295, %c0_296], %231 {strides = array<i32>} : memref<32x256xf32, #tpu.memory_space<vmem>>, vector<32x256xf32>,
    %c0_297 = arith.constant 0 : index
    %c0_298 = arith.constant 0 : index
    %235 = vector.load %arg7[%c0_297, %c0_298] : memref<32x256xf32, #tpu.memory_space<vmem>>, vector<32x256xf32>
    tpu.vector_store %arg7[%c0_297, %c0_298], %233 {strides = array<i32>} : memref<32x256xf32, #tpu.memory_space<vmem>>, vector<32x256xf32>,
    return
  }
  func.func @transform_0(%arg0: i32) -> (i32, i32) {
    %c0_i32 = arith.constant 0 : i32
    %c0_i32_0 = arith.constant 0 : i32
    return %arg0, %c0_i32 : i32, i32
  }
  func.func @transform_1(%arg0: i32) -> (i32, i32) {
    %c0_i32 = arith.constant 0 : i32
    %c0_i32_0 = arith.constant 0 : i32
    return %arg0, %c0_i32 : i32, i32
  }
  func.func @transform_2(%arg0: i32) -> (i32, i32) {
    %c0_i32 = arith.constant 0 : i32
    %c0_i32_0 = arith.constant 0 : i32
    return %arg0, %c0_i32 : i32, i32
  }
  func.func @transform_3(%arg0: i32) -> (i32, i32) {
    %c0_i32 = arith.constant 0 : i32
    %c0_i32_0 = arith.constant 0 : i32
    %c0_i32_1 = arith.constant 0 : i32
    return %c0_i32, %c0_i32_0 : i32, i32
  }
  func.func @transform_4(%arg0: i32) -> (i32, i32) {
    %c0_i32 = arith.constant 0 : i32
    %c0_i32_0 = arith.constant 0 : i32
    %c0_i32_1 = arith.constant 0 : i32
    return %c0_i32, %c0_i32_0 : i32, i32
  }
  func.func @transform_5(%arg0: i32) -> (i32, i32) {
    %c0_i32 = arith.constant 0 : i32
    %c0_i32_0 = arith.constant 0 : i32
    %c0_i32_1 = arith.constant 0 : i32
    return %c0_i32, %c0_i32_0 : i32, i32
  }
  func.func @transform_6(%arg0: i32) -> (i32, i32) {
    %c0_i32 = arith.constant 0 : i32
    %c0_i32_0 = arith.constant 0 : i32
    return %arg0, %c0_i32 : i32, i32
  }
  func.func @transform_7(%arg0: i32) -> (i32, i32) {
    %c0_i32 = arith.constant 0 : i32
    %c0_i32_0 = arith.constant 0 : i32
    return %arg0, %c0_i32 : i32, i32
  }
}

</mosaic_0001>

<llo_original>
// kernel: convlstm_forward_pallas.1
$region0: #{convlstm_forward_pallas.1}
  #allocation0 [shape = 'u32[]', space=smem, size = 0x4, offset = 0x4, fixed_abs, tag = 'smem constant byte address 0x4 - core index']
  #allocation1 [shape = 'u32[72,128]{1,0:T(1,128)}', space=vmem, size = 0x9000, scoped, tag = 'internal scratch']
  #allocation2 [shape = 'f32[32,256]{1,0:T(8,128)}', space=vmem, size = 0x8000, scoped, tag = 'scratch operand']
  #allocation3 [shape = 'f32[32,256]{1,0:T(8,128)}', space=vmem, size = 0x8000, scoped, tag = 'scratch operand']
  #allocation4 [shape = 'f32[32,256]{1,0:T(8,128)}', space=vmem, size = 0x8000, scoped, tag = 'scratch operand']
  %s0 = inlined_call_operand.vmem [shape: f32[16,256], index: 0, kind: input, shape index: {}]
  %s1 = inlined_call_operand.vmem [shape: bf16[64,256], index: 1, kind: input, shape index: {}]
  %s2 = inlined_call_operand.vmem [shape: f32[64,256], index: 2, kind: input, shape index: {}]
  %s3 = inlined_call_operand.vmem [shape: bf16[128,72], index: 3, kind: input, shape index: {}]
  %s4 = inlined_call_operand.vmem [shape: bf16[128,288], index: 4, kind: input, shape index: {}]
  %s5 = inlined_call_operand.vmem [shape: f32[128,1], index: 5, kind: input, shape index: {}]
  %s6 = inlined_call_operand.vmem [shape: f32[64,256], index: 6, kind: output, shape index: {0}]
  %s7 = inlined_call_operand.vmem [shape: f32[64,256], index: 7, kind: output, shape index: {1}]
  %8 = xla_tuple %s6, %s7
  %s9 = sld [smem:[#allocation0]]
  $region65: #{convlstm_forward_pallas.1} parent=0
    _
  %s11 = ssub.s32 1, %s9
  %s12 = scalar_select 0, %s11, %s9
  loop: start=0, step=1, limit=4
  $region2: #{convlstm_forward_pallas.1} parent=0 // loop_pre_header
    _
  $region3: #{convlstm_forward_pallas.1} parent=0 // loop_header
    %s14 = sphi 0, %s18
    %p15 = scmp.ge.s32.totalorder %s14, 4
    %s24 = sphi 0, %s26
    %s27 = sphi 0, %s24
    %s28 = sphi 0, %s27
    %s44 = sphi 0, %s28
    %s50 = sphi 0, %s52
    %s53 = sphi 0, %s50
    %s54 = sphi 0, %s53
    %s70 = sphi 0, %s54
    %s76 = sphi 0, %s78
    %s79 = sphi 0, %s76
    %s80 = sphi 0, %s79
    %s96 = sphi 0, %s80
    %s100 = sphi 0, %s100
    %s102 = sphi 0, %s100
    %s103 = sphi 0, %s102
    %s117 = sphi 0, %s103
    %s121 = sphi 0, %s121
    %s123 = sphi 0, %s121
    %s124 = sphi 0, %s123
    %s138 = sphi 0, %s124
    %s142 = sphi 0, %s142
    %s144 = sphi 0, %s142
    %s145 = sphi 0, %s144
    %s159 = sphi 0, %s145
    %s165 = sphi 0, %s167
    %s168 = sphi 0, %s165
    %s169 = sphi 0, %s168
    %s185 = sphi 0, %s169
    %s191 = sphi 0, %s193
    %s194 = sphi 0, %s191
    %s195 = sphi 0, %s194
    %s211 = sphi 0, %s195
  $region4: #{convlstm_forward_pallas.1} parent=0 // loop_header_branch
    %17 = sbr.rel (%p15) target = $region8
  $region5: #{convlstm_forward_pallas.1} parent=0 // loop_body
    %s19 = ssub.s32 %s14, 1
    %s20 = ssub.s32 %s14, 2
    %s21 = sadd.s32 %s14, 1
    %s22 = ssub.s32 %s14, %s21
    %p23 = scmp.eq.s32.totalorder %s22, 0
    %s25 = sadd.s32 %s24, 1
    %s26 = scalar_select %p23, %s24, %s25
    %p29 = pneg %p23
    %p30 = scmp.eq.s32.totalorder %s14, 1
    %p31 = por %p29, %p30
    %p32 = scmp.ne.s32.totalorder %s24, %s27
    %p33 = scmp.eq.s32.totalorder %s14, 0
    %p34 = por %p32, %p33
    %p35 = scmp.ne.s32.totalorder %s24, %s27
    %p36 = scmp.eq.s32.totalorder %s19, 1
    %p37 = por %p35, %p36
    %p38 = scmp.ne.s32.totalorder %s27, %s28
    %p39 = scmp.eq.s32.totalorder %s19, 0
    %p40 = por %p38, %p39
    %p41 = scmp.ne.s32.totalorder %s27, %s28
    %p42 = scmp.eq.s32.totalorder %s20, 1
    %p43 = por %p41, %p42
    %p45 = scmp.ne.s32.totalorder %s28, %s44
    %p46 = scmp.eq.s32.totalorder %s20, 0
    %p47 = por %p45, %p46
    %s48 = ssub.s32 %s14, %s21
    %p49 = scmp.eq.s32.totalorder %s48, 0
    %s51 = sadd.s32 %s50, 1
    %s52 = scalar_select %p49, %s50, %s51
    %p55 = pneg %p49
    %p56 = scmp.eq.s32.totalorder %s14, 1
    %p57 = por %p55, %p56
    %p58 = scmp.ne.s32.totalorder %s50, %s53
    %p59 = scmp.eq.s32.totalorder %s14, 0
    %p60 = por %p58, %p59
    %p61 = scmp.ne.s32.totalorder %s50, %s53
    %p62 = scmp.eq.s32.totalorder %s19, 1
    %p63 = por %p61, %p62
    %p64 = scmp.ne.s32.totalorder %s53, %s54
    %p65 = scmp.eq.s32.totalorder %s19, 0
    %p66 = por %p64, %p65
    %p67 = scmp.ne.s32.totalorder %s53, %s54
    %p68 = scmp.eq.s32.totalorder %s20, 1
    %p69 = por %p67, %p68
    %p71 = scmp.ne.s32.totalorder %s54, %s70
    %p72 = scmp.eq.s32.totalorder %s20, 0
    %p73 = por %p71, %p72
    %s74 = ssub.s32 %s14, %s21
    %p75 = scmp.eq.s32.totalorder %s74, 0
    %s77 = sadd.s32 %s76, 1
    %s78 = scalar_select %p75, %s76, %s77
    %p81 = pneg %p75
    %p82 = scmp.eq.s32.totalorder %s14, 1
    %p83 = por %p81, %p82
    %p84 = scmp.ne.s32.totalorder %s76, %s79
    %p85 = scmp.eq.s32.totalorder %s14, 0
    %p86 = por %p84, %p85
    %p87 = scmp.ne.s32.totalorder %s76, %s79
    %p88 = scmp.eq.s32.totalorder %s19, 1
    %p89 = por %p87, %p88
    %p90 = scmp.ne.s32.totalorder %s79, %s80
    %p91 = scmp.eq.s32.totalorder %s19, 0
    %p92 = por %p90, %p91
    %p93 = scmp.ne.s32.totalorder %s79, %s80
    %p94 = scmp.eq.s32.totalorder %s20, 1
    %p95 = por %p93, %p94
    %p97 = scmp.ne.s32.totalorder %s80, %s96
    %p98 = scmp.eq.s32.totalorder %s20, 0
    %p99 = por %p97, %p98
    %s101 = sadd.s32 %s100, 1
    %p104 = scmp.eq.s32.totalorder %s14, 1
    %p105 = scmp.ne.s32.totalorder %s100, %s102
    %p106 = scmp.eq.s32.totalorder %s14, 0
    %p107 = por %p105, %p106
    %p108 = scmp.ne.s32.totalorder %s100, %s102
    %p109 = scmp.eq.s32.totalorder %s19, 1
    %p110 = por %p108, %p109
    %p111 = scmp.ne.s32.totalorder %s102, %s103
    %p112 = scmp.eq.s32.totalorder %s19, 0
    %p113 = por %p111, %p112
    %p114 = scmp.ne.s32.totalorder %s102, %s103
    %p115 = scmp.eq.s32.totalorder %s20, 1
    %p116 = por %p114, %p115
    %p118 = scmp.ne.s32.totalorder %s103, %s117
    %p119 = scmp.eq.s32.totalorder %s20, 0
    %p120 = por %p118, %p119
    %s122 = sadd.s32 %s121, 1
    %p125 = scmp.eq.s32.totalorder %s14, 1
    %p126 = scmp.ne.s32.totalorder %s121, %s123
    %p127 = scmp.eq.s32.totalorder %s14, 0
    %p128 = por %p126, %p127
    %p129 = scmp.ne.s32.totalorder %s121, %s123
    %p130 = scmp.eq.s32.totalorder %s19, 1
    %p131 = por %p129, %p130
    %p132 = scmp.ne.s32.totalorder %s123, %s124
    %p133 = scmp.eq.s32.totalorder %s19, 0
    %p134 = por %p132, %p133
    %p135 = scmp.ne.s32.totalorder %s123, %s124
    %p136 = scmp.eq.s32.totalorder %s20, 1
    %p137 = por %p135, %p136
    %p139 = scmp.ne.s32.totalorder %s124, %s138
    %p140 = scmp.eq.s32.totalorder %s20, 0
    %p141 = por %p139, %p140
    %s143 = sadd.s32 %s142, 1
    %p146 = scmp.eq.s32.totalorder %s14, 1
    %p147 = scmp.ne.s32.totalorder %s142, %s144
    %p148 = scmp.eq.s32.totalorder %s14, 0
    %p149 = por %p147, %p148
    %p150 = scmp.ne.s32.totalorder %s142, %s144
    %p151 = scmp.eq.s32.totalorder %s19, 1
    %p152 = por %p150, %p151
    %p153 = scmp.ne.s32.totalorder %s144, %s145
    %p154 = scmp.eq.s32.totalorder %s19, 0
    %p155 = por %p153, %p154
    %p156 = scmp.ne.s32.totalorder %s144, %s145
    %p157 = scmp.eq.s32.totalorder %s20, 1
    %p158 = por %p156, %p157
    %p160 = scmp.ne.s32.totalorder %s145, %s159
    %p161 = scmp.eq.s32.totalorder %s20, 0
    %p162 = por %p160, %p161
    %s163 = ssub.s32 %s14, %s21
    %p164 = scmp.eq.s32.totalorder %s163, 0
    %s166 = sadd.s32 %s165, 1
    %s167 = scalar_select %p164, %s165, %s166
    %p170 = pneg %p164
    %p171 = scmp.eq.s32.totalorder %s14, 1
    %p172 = por %p170, %p171
    %p173 = scmp.ne.s32.totalorder %s165, %s168
    %p174 = scmp.eq.s32.totalorder %s14, 0
    %p175 = por %p173, %p174
    %p176 = scmp.ne.s32.totalorder %s165, %s168
    %p177 = scmp.eq.s32.totalorder %s19, 1
    %p178 = por %p176, %p177
    %p179 = scmp.ne.s32.totalorder %s168, %s169
    %p180 = scmp.eq.s32.totalorder %s19, 0
    %p181 = por %p179, %p180
    %p182 = scmp.ne.s32.totalorder %s168, %s169
    %p183 = scmp.eq.s32.totalorder %s20, 1
    %p184 = por %p182, %p183
    %p186 = scmp.ne.s32.totalorder %s169, %s185
    %p187 = scmp.eq.s32.totalorder %s20, 0
    %p188 = por %p186, %p187
    %s189 = ssub.s32 %s14, %s21
    %p190 = scmp.eq.s32.totalorder %s189, 0
    %s192 = sadd.s32 %s191, 1
    %s193 = scalar_select %p190, %s191, %s192
    %p196 = pneg %p190
    %p197 = scmp.eq.s32.totalorder %s14, 1
    %p198 = por %p196, %p197
    %p199 = scmp.ne.s32.totalorder %s191, %s194
    %p200 = scmp.eq.s32.totalorder %s14, 0
    %p201 = por %p199, %p200
    %p202 = scmp.ne.s32.totalorder %s191, %s194
    %p203 = scmp.eq.s32.totalorder %s19, 1
    %p204 = por %p202, %p203
    %p205 = scmp.ne.s32.totalorder %s194, %s195
    %p206 = scmp.eq.s32.totalorder %s19, 0
    %p207 = por %p205, %p206
    %p208 = scmp.ne.s32.totalorder %s194, %s195
    %p209 = scmp.eq.s32.totalorder %s20, 1
    %p210 = por %p208, %p209
    %p212 = scmp.ne.s32.totalorder %s195, %s211
    %p213 = scmp.eq.s32.totalorder %s20, 0
    %p214 = por %p212, %p213
    %p215 = scmp.le.s32.totalorder 1, %s14
    %p216 = scmp.lt.s32.totalorder %s14, 3
    %p217 = pnand %p215, %p216
    %p218 = pneg %p217
    // Predicated region
    $region9: #{convlstm_forward_pallas.1} parent=5 // pred_check
      _
    $region10: #{convlstm_forward_pallas.1} parent=5 // pred_check_branch
      %220 = sbr.rel (%p217) target = $region12
    $region11: #{convlstm_forward_pallas.1} parent=5 // pred_region
      %s221 = ssub.s32 %s14, 1
      // Predicated region
      $region13: #{convlstm_forward_pallas.1} parent=11 // pred_check
        %p222 = pneg %p113
      $region14: #{convlstm_forward_pallas.1} parent=11 // pred_check_branch
        %224 = sbr.rel (%p222) target = $region16
      $region15: #{convlstm_forward_pallas.1} parent=11 // pred_region
        _
      $region16: #{convlstm_forward_pallas.1} parent=11 // pred_fallthru
        _
      // Predicated region
      $region17: #{convlstm_forward_pallas.1} parent=11 // pred_check
        %p225 = pneg %p134
      $region18: #{convlstm_forward_pallas.1} parent=11 // pred_check_branch
        %227 = sbr.rel (%p225) target = $region20
      $region19: #{convlstm_forward_pallas.1} parent=11 // pred_region
        _
      $region20: #{convlstm_forward_pallas.1} parent=11 // pred_fallthru
        _
      // Predicated region
      $region21: #{convlstm_forward_pallas.1} parent=11 // pred_check
        %p228 = pneg %p155
      $region22: #{convlstm_forward_pallas.1} parent=11 // pred_check_branch
        %230 = sbr.rel (%p228) target = $region24
      $region23: #{convlstm_forward_pallas.1} parent=11 // pred_region
        _
      $region24: #{convlstm_forward_pallas.1} parent=11 // pred_fallthru
        _
    $region12: #{convlstm_forward_pallas.1} parent=5 // pred_fallthru
      _
    %p231 = scmp.lt.s32.totalorder %s14, 2
    // Predicated region
    $region25: #{convlstm_forward_pallas.1} parent=5 // pred_check
      %p232 = pneg %p231
    $region26: #{convlstm_forward_pallas.1} parent=5 // pred_check_branch
      %234 = sbr.rel (%p232) target = $region28
    $region27: #{convlstm_forward_pallas.1} parent=5 // pred_region
      // Predicated region
      $region29: #{convlstm_forward_pallas.1} parent=27 // pred_check
        %p235 = pneg %p34
      $region30: #{convlstm_forward_pallas.1} parent=27 // pred_check_branch
        %237 = sbr.rel (%p235) target = $region32
      $region31: #{convlstm_forward_pallas.1} parent=27 // pred_region
        %p238 = scmp.lt.s32.totalorder %s14, 1
        %s239 = scalar_select %p238, %s14, 1
        %s240 = smul.addr %s239, 2
        %s241 = smul.addr %s240, 8
        %s242 = scalar_lea.vmem %s0, %s241
      $region32: #{convlstm_forward_pallas.1} parent=27 // pred_fallthru
        _
      // Predicated region
      $region33: #{convlstm_forward_pallas.1} parent=27 // pred_check
        %p243 = pneg %p60
      $region34: #{convlstm_forward_pallas.1} parent=27 // pred_check_branch
        %245 = sbr.rel (%p243) target = $region36
      $region35: #{convlstm_forward_pallas.1} parent=27 // pred_region
        %s246 = smul.u32 4, %s14
        %p247 = scmp.lt.s32.totalorder %s246, 7
        %s248 = scalar_select %p247, %s246, 7
        %s249 = smul.addr %s248, 2
        %s250 = smul.addr %s249, 4
        %s251 = scalar_lea.vmem %s1, %s250
        %s252 = smul.u32 4, %s14
      $region36: #{convlstm_forward_pallas.1} parent=27 // pred_fallthru
        _
      // Predicated region
      $region37: #{convlstm_forward_pallas.1} parent=27 // pred_check
        %p253 = pneg %p86
      $region38: #{convlstm_forward_pallas.1} parent=27 // pred_check_branch
        %255 = sbr.rel (%p253) target = $region40
      $region39: #{convlstm_forward_pallas.1} parent=27 // pred_region
        %s256 = smul.u32 4, %s14
        %p257 = scmp.lt.s32.totalorder %s256, 7
        %s258 = scalar_select %p257, %s256, 7
        %s259 = smul.addr %s258, 2
        %s260 = smul.addr %s259, 8
        %s261 = scalar_lea.vmem %s2, %s260
        %s262 = smul.u32 4, %s14
      $region40: #{convlstm_forward_pallas.1} parent=27 // pred_fallthru
        _
    $region28: #{convlstm_forward_pallas.1} parent=5 // pred_fallthru
      _
    %p263 = scmp.le.s32.totalorder 1, %s14
    %p264 = scmp.lt.s32.totalorder %s14, 3
    %p265 = pnand %p263, %p264
    %p266 = pneg %p265
    // Predicated region
    $region41: #{convlstm_forward_pallas.1} parent=5 // pred_check
      _
    $region42: #{convlstm_forward_pallas.1} parent=5 // pred_check_branch
      %268 = sbr.rel (%p265) target = $region44
    $region43: #{convlstm_forward_pallas.1} parent=5 // pred_region
      %s269 = ssub.s32 %s14, 1
      %p270 = scmp.lt.s32.totalorder %s19, 1
      %s271 = scalar_select %p270, %s19, 1
      %s272 = smul.addr %s271, 2
      %s273 = smul.addr %s272, 8
      %s274 = scalar_lea.vmem %s0, %s273
      %p275 = pneg %p40
      %p276 = pneg %p37
      %s277 = smul.u32 4, %s19
      %p278 = scmp.lt.s32.totalorder %s277, 7
      %s279 = scalar_select %p278, %s277, 7
      %s280 = smul.addr %s279, 2
      %s281 = smul.addr %s280, 4
      %s282 = scalar_lea.vmem %s1, %s281
      %p283 = pneg %p66
      %p284 = pneg %p63
      %s285 = smul.u32 4, %s19
      %p286 = scmp.lt.s32.totalorder %s285, 7
      %s287 = scalar_select %p286, %s285, 7
      %s288 = smul.addr %s287, 2
      %s289 = smul.addr %s288, 8
      %s290 = scalar_lea.vmem %s2, %s289
      %p291 = pneg %p92
      %p292 = pneg %p89
      %p293 = pneg %p113
      %p294 = pneg %p110
      %p295 = pneg %p134
      %p296 = pneg %p131
      %p297 = pneg %p155
      %p298 = pneg %p152
      %p299 = pneg %p181
      %p300 = pneg %p178
      %s301 = smul.u32 4, %s19
      %p302 = scmp.lt.s32.totalorder %s301, 7
      %s303 = scalar_select %p302, %s301, 7
      %s304 = smul.addr %s303, 2
      %s305 = smul.addr %s304, 8
      %s306 = scalar_lea.vmem %s6, %s305
      %p307 = pneg %p207
      %p308 = pneg %p204
      %s309 = smul.u32 4, %s19
      %p310 = scmp.lt.s32.totalorder %s309, 7
      %s311 = scalar_select %p310, %s309, 7
      %s312 = smul.addr %s311, 2
      %s313 = smul.addr %s312, 8
      %s314 = scalar_lea.vmem %s7, %s313
      %p315 = scmp.lt.s32.totalorder %s19, 1
      %s316 = scalar_select %p315, %s19, 1
      %s317 = smul.addr %s316, 2
      %s318 = smul.addr %s317, 8
      %s319 = scalar_lea.vmem %s0, %s318
      %s320 = smul.u32 4, %s19
      %p321 = scmp.lt.s32.totalorder %s320, 7
      %s322 = scalar_select %p321, %s320, 7
      %s323 = smul.addr %s322, 2
      %s324 = smul.addr %s323, 4
      %s325 = scalar_lea.vmem %s1, %s324
      %s326 = smul.u32 4, %s19
      %s327 = smul.u32 4, %s19
      %p328 = scmp.lt.s32.totalorder %s327, 7
      %s329 = scalar_select %p328, %s327, 7
      %s330 = smul.addr %s329, 2
      %s331 = smul.addr %s330, 8
      %s332 = scalar_lea.vmem %s2, %s331
      %s333 = smul.u32 4, %s19
      %s334 = smul.u32 4, %s19
      %p335 = scmp.lt.s32.totalorder %s334, 7
      %s336 = scalar_select %p335, %s334, 7
      %s337 = smul.addr %s336, 2
      %s338 = smul.addr %s337, 8
      %s339 = scalar_lea.vmem %s6, %s338
      %s340 = smul.u32 4, %s19
      %s341 = smul.u32 4, %s19
      %p342 = scmp.lt.s32.totalorder %s341, 7
      %s343 = scalar_select %p342, %s341, 7
      %s344 = smul.addr %s343, 2
      %s345 = smul.addr %s344, 8
      %s346 = scalar_lea.vmem %s7, %s345
      %s347 = smul.u32 4, %s19
      %v349 = vld [vmem:[%s325] sm:$0xff]
      %v350 = vld [vmem:[%s325 + $0x8] sm:$0xff]
      %v351 = vld [vmem:[%s325 + $0x10] sm:$0xff]
      %v352 = vld [vmem:[%s325 + $0x18] sm:$0xff]
      %v353 = vunpack.c.l.bf16 %v349
      %v354 = vunpack.c.h.bf16 %v349
      %v355 = vunpack.c.l.bf16 %v350
      %v356 = vunpack.c.h.bf16 %v350
      %v357 = vunpack.c.l.bf16 %v351
      %v358 = vunpack.c.h.bf16 %v351
      %v359 = vunpack.c.l.bf16 %v352
      %v360 = vunpack.c.h.bf16 %v352
      %361 = vst [vmem:[#allocation2] sm:$0xff] %v353
      %362 = vst [vmem:[#allocation2 + $0x8] sm:$0xff] %v354
      %363 = vst [vmem:[#allocation2 + $0x10] sm:$0xff] %v355
      %364 = vst [vmem:[#allocation2 + $0x18] sm:$0xff] %v356
      %365 = vst [vmem:[#allocation2 + $0x20] sm:$0xff] %v357
      %366 = vst [vmem:[#allocation2 + $0x28] sm:$0xff] %v358
      %367 = vst [vmem:[#allocation2 + $0x30] sm:$0xff] %v359
      %368 = vst [vmem:[#allocation2 + $0x38] sm:$0xff] %v360
      %v369 = vlaneseq
      %v370 = vand.u32 %v369, 127
      %v371 = vadd.s32 %v370, 128
      %v372 = vcvt.s32.f32 %v370
      %v373 = vcvt.s32.f32 %v371
      %v374 = vrcp.pop 16.0
      %v375 = vmul.f32 16.0, %v374
      %v376 = vsub.f32 1.0, %v375
      %v377 = vmul.f32 %v374, %v376
      %v378 = vadd.f32 %v374, %v377
      %vm379 = vweird.f32 %v374
      %v380 = vsel %vm379, %v374, %v378
      %v381 = vmul.f32 %v372, %v380
      %v382 = vmul.f32 %v373, %v380
      %v383 = vfloor.f32 %v381
      %v384 = vfloor.f32 %v382
      %v385 = vmul.f32 %v383, 16.0
      %v386 = vmul.f32 %v384, 16.0
      %v387 = vsub.f32 %v372, %v385
      %v388 = vsub.f32 %v373, %v386
      %vm389 = vcmp.lt.f32.partialorder %v387, 0.5
      %vm390 = vcmp.lt.f32.partialorder %v388, 0.5
      %vm391 = vcmp.gt.f32.partialorder %v387, 14.5
      %vm392 = vcmp.gt.f32.partialorder %v388, 14.5
      %v393 = vld [vmem:[%s319 + $0x8] sm:$0xff]
      %395 = vrot.lane.b32.xlu0 %v393, 17
      %v396 = vpop.permute.xlu0 %395
      %vm398 = vcmask 138240
      %399 = vst.msk [vmem:[#allocation3] sm:$0xff] %vm398, %v396
      %v400 = vld [vmem:[%s319] sm:$0xff]
      %v401 = vld [vmem:[%s319 + $0x8] sm:$0xff]
      %404 = vrot.lane.b32.xlu0 %v400, 17
      %v405 = vpop.permute.xlu0 %404
      %406 = vrot.lane.b32.xlu0 %v401, 17
      %v407 = vpop.permute.xlu0 %406
      %v408 = vsel %vm398, %v405, %v407
      %vm411 = vcmask 1047688
      %412 = vst.msk [vmem:[#allocation3] sm:$0xff] %vm411, %v405
      %413 = vst [vmem:[#allocation3 + $0x8] sm:$0xff] %v408
      %v414 = vld [vmem:[#allocation3] sm:$0xff]
      %v415 = vld [vmem:[#allocation3 + $0x8] sm:$0xff]
      %v416 = vld [vmem:[%s319 + $0x8] sm:$0xff]
      %418 = vrot.lane.b32.xlu0 %v416, 1
      %v419 = vpop.permute.xlu0 %418
      %vm421 = vcmask 7168
      %422 = vst.msk [vmem:[#allocation4] sm:$0xff] %vm421, %v419
      %v423 = vld [vmem:[%s319] sm:$0xff]
      %v424 = vld [vmem:[%s319 + $0x8] sm:$0xff]
      %427 = vrot.lane.b32.xlu0 %v423, 1
      %v428 = vpop.permute.xlu0 %427
      %429 = vrot.lane.b32.xlu0 %v424, 1
      %v430 = vpop.permute.xlu0 %429
      %v431 = vsel %vm421, %v428, %v430
      %vm434 = vcmask 1047560
      %435 = vst.msk [vmem:[#allocation4] sm:$0xff] %vm434, %v428
      %436 = vst [vmem:[#allocation4 + $0x8] sm:$0xff] %v431
      %v437 = vld [vmem:[#allocation4] sm:$0xff]
      %v438 = vld [vmem:[#allocation4 + $0x8] sm:$0xff]
      %v439 = vsel %vm389, 1, 0
      %v440 = vsel %vm390, 1, 0
      %vm441 = vcmp.eq.s32.totalorder %v439, 1
      %vm442 = vcmp.eq.s32.totalorder %v440, 1
      %v443 = vsel %vm441, %v437, %v414
      %v444 = vsel %vm442, %v438, %v415
      %v445 = vld [vmem:[%s319 + $0x8] sm:$0xff]
      %447 = vrot.lane.b32.xlu0 %v445, 16
      %v448 = vpop.permute.xlu0 %447
      %vm450 = vcmask 130048
      %451 = vst.msk [vmem:[#allocation3] sm:$0xff] %vm450, %v448
      %v452 = vld [vmem:[%s319] sm:$0xff]
      %v453 = vld [vmem:[%s319 + $0x8] sm:$0xff]
      %456 = vrot.lane.b32.xlu0 %v452, 16
      %v457 = vpop.permute.xlu0 %456
      %458 = vrot.lane.b32.xlu0 %v453, 16
      %v459 = vpop.permute.xlu0 %458
      %v460 = vsel %vm450, %v457, %v459
      %vm463 = vcmask 1047680
      %464 = vst.msk [vmem:[#allocation3] sm:$0xff] %vm463, %v457
      %465 = vst [vmem:[#allocation3 + $0x8] sm:$0xff] %v460
      %v466 = vld [vmem:[#allocation3] sm:$0xff]
      %v467 = vld [vmem:[#allocation3 + $0x8] sm:$0xff]
      %v468 = vld [vmem:[%s319 + $0x8] sm:$0xff]
      %470 = vrot.lane.b32.xlu0 %v468, 15
      %v471 = vpop.permute.xlu0 %470
      %vm473 = vcmask 121856
      %474 = vst.msk [vmem:[#allocation3] sm:$0xff] %vm473, %v471
      %v475 = vld [vmem:[%s319] sm:$0xff]
      %v476 = vld [vmem:[%s319 + $0x8] sm:$0xff]
      %479 = vrot.lane.b32.xlu0 %v475, 15
      %v480 = vpop.permute.xlu0 %479
      %481 = vrot.lane.b32.xlu0 %v476, 15
      %v482 = vpop.permute.xlu0 %481
      %v483 = vsel %vm473, %v480, %v482
      %vm486 = vcmask 1047672
      %487 = vst.msk [vmem:[#allocation3] sm:$0xff] %vm486, %v480
      %488 = vst [vmem:[#allocation3 + $0x8] sm:$0xff] %v483
      %v489 = vld [vmem:[#allocation3] sm:$0xff]
      %v490 = vld [vmem:[#allocation3 + $0x8] sm:$0xff]
      %v491 = vld [vmem:[%s319 + $0x8] sm:$0xff]
      %493 = vrot.lane.b32.xlu0 %v491, 31
      %v494 = vpop.permute.xlu0 %493
      %vm496 = vcmask 252928
      %497 = vst.msk [vmem:[#allocation4] sm:$0xff] %vm496, %v494
      %v498 = vld [vmem:[%s319] sm:$0xff]
      %v499 = vld [vmem:[%s319 + $0x8] sm:$0xff]
      %502 = vrot.lane.b32.xlu0 %v498, 31
      %v503 = vpop.permute.xlu0 %502
      %504 = vrot.lane.b32.xlu0 %v499, 31
      %v505 = vpop.permute.xlu0 %504
      %v506 = vsel %vm496, %v503, %v505
      %vm509 = vcmask 1047800
      %510 = vst.msk [vmem:[#allocation4] sm:$0xff] %vm509, %v503
      %511 = vst [vmem:[#allocation4 + $0x8] sm:$0xff] %v506
      %v512 = vld [vmem:[#allocation4] sm:$0xff]
      %v513 = vld [vmem:[#allocation4 + $0x8] sm:$0xff]
      %v514 = vsel %vm391, 1, 0
      %v515 = vsel %vm392, 1, 0
      %vm516 = vcmp.eq.s32.totalorder %v514, 1
      %vm517 = vcmp.eq.s32.totalorder %v515, 1
      %v518 = vsel %vm516, %v512, %v489
      %v519 = vsel %vm517, %v513, %v490
      %v520 = vld [vmem:[%s319 + $0x8] sm:$0xff]
      %522 = vrot.lane.b32.xlu0 %v520, 1
      %v523 = vpop.permute.xlu0 %522
      %525 = vst.msk [vmem:[#allocation3] sm:$0xff] %vm421, %v523
      %v526 = vld [vmem:[%s319] sm:$0xff]
      %v527 = vld [vmem:[%s319 + $0x8] sm:$0xff]
      %530 = vrot.lane.b32.xlu0 %v526, 1
      %v531 = vpop.permute.xlu0 %530
      %532 = vrot.lane.b32.xlu0 %v527, 1
      %v533 = vpop.permute.xlu0 %532
      %v534 = vsel %vm421, %v531, %v533
      %537 = vst.msk [vmem:[#allocation3] sm:$0xff] %vm434, %v531
      %538 = vst [vmem:[#allocation3 + $0x8] sm:$0xff] %v534
      %v539 = vld [vmem:[#allocation3] sm:$0xff]
      %v540 = vld [vmem:[#allocation3 + $0x8] sm:$0xff]
      %v541 = vld [vmem:[%s319] sm:$0xff]
      %v542 = vld [vmem:[%s319 + $0x8] sm:$0xff]
      %545 = vrot.lane.b32.xlu0 %v541, 113
      %v546 = vpop.permute.xlu0 %545
      %547 = vrot.lane.b32.xlu0 %v542, 113
      %v548 = vpop.permute.xlu0 %547
      %vm549 = vcmask 924672
      %v550 = vsel %vm549, %v546, %v548
      %553 = vst [vmem:[#allocation4] sm:$0xff] %v550
      %554 = vst.msk [vmem:[#allocation4 + $0x8] sm:$0xff] %vm549, %v548
      %v555 = vld [vmem:[%s319] sm:$0xff]
      %557 = vrot.lane.b32.xlu0 %v555, 113
      %v558 = vpop.permute.xlu0 %557
      %vm560 = vcmask 1048456
      %561 = vst.msk [vmem:[#allocation4 + $0x8] sm:$0xff] %vm560, %v558
      %v562 = vld [vmem:[#allocation4] sm:$0xff]
      %v563 = vld [vmem:[#allocation4 + $0x8] sm:$0xff]
      %v564 = vsel %vm441, %v562, %v539
      %v565 = vsel %vm442, %v563, %v540
      %v566 = vld [vmem:[%s319] sm:$0xff]
      %v567 = vld [vmem:[%s319 + $0x8] sm:$0xff]
      %570 = vrot.lane.b32.xlu0 %v566, 127
      %v571 = vpop.permute.xlu0 %570
      %572 = vrot.lane.b32.xlu0 %v567, 127
      %v573 = vpop.permute.xlu0 %572
      %vm574 = vcmask 1039360
      %v575 = vsel %vm574, %v571, %v573
      %578 = vst [vmem:[#allocation3] sm:$0xff] %v575
      %579 = vst.msk [vmem:[#allocation3 + $0x8] sm:$0xff] %vm574, %v573
      %v580 = vld [vmem:[%s319] sm:$0xff]
      %582 = vrot.lane.b32.xlu0 %v580, 127
      %v583 = vpop.permute.xlu0 %582
      %vm585 = vcmask 1048568
      %586 = vst.msk [vmem:[#allocation3 + $0x8] sm:$0xff] %vm585, %v583
      %v587 = vld [vmem:[#allocation3] sm:$0xff]
      %v588 = vld [vmem:[#allocation3 + $0x8] sm:$0xff]
      %v589 = vld [vmem:[%s319 + $0x8] sm:$0xff]
      %591 = vrot.lane.b32.xlu0 %v589, 15
      %v592 = vpop.permute.xlu0 %591
      %594 = vst.msk [vmem:[#allocation4] sm:$0xff] %vm473, %v592
      %v595 = vld [vmem:[%s319] sm:$0xff]
      %v596 = vld [vmem:[%s319 + $0x8] sm:$0xff]
      %599 = vrot.lane.b32.xlu0 %v595, 15
      %v600 = vpop.permute.xlu0 %599
      %601 = vrot.lane.b32.xlu0 %v596, 15
      %v602 = vpop.permute.xlu0 %601
      %v603 = vsel %vm473, %v600, %v602
      %606 = vst.msk [vmem:[#allocation4] sm:$0xff] %vm486, %v600
      %607 = vst [vmem:[#allocation4 + $0x8] sm:$0xff] %v603
      %v608 = vld [vmem:[#allocation4] sm:$0xff]
      %v609 = vld [vmem:[#allocation4 + $0x8] sm:$0xff]
      %v610 = vsel %vm516, %v608, %v587
      %v611 = vsel %vm517, %v609, %v588
      %v612 = vld [vmem:[%s319] sm:$0xff]
      %v613 = vld [vmem:[%s319 + $0x8] sm:$0xff]
      %616 = vrot.lane.b32.xlu0 %v612, 113
      %v617 = vpop.permute.xlu0 %616
      %618 = vrot.lane.b32.xlu0 %v613, 113
      %v619 = vpop.permute.xlu0 %618
      %v620 = vsel %vm549, %v617, %v619
      %623 = vst [vmem:[#allocation3] sm:$0xff] %v620
      %624 = vst.msk [vmem:[#allocation3 + $0x8] sm:$0xff] %vm549, %v619
      %v625 = vld [vmem:[%s319] sm:$0xff]
      %627 = vrot.lane.b32.xlu0 %v625, 113
      %v628 = vpop.permute.xlu0 %627
      %630 = vst.msk [vmem:[#allocation3 + $0x8] sm:$0xff] %vm560, %v628
      %v631 = vld [vmem:[#allocation3] sm:$0xff]
      %v632 = vld [vmem:[#allocation3 + $0x8] sm:$0xff]
      %v633 = vld [vmem:[%s319] sm:$0xff]
      %v634 = vld [vmem:[%s319 + $0x8] sm:$0xff]
      %637 = vrot.lane.b32.xlu0 %v633, 97
      %v638 = vpop.permute.xlu0 %637
      %639 = vrot.lane.b32.xlu0 %v634, 97
      %v640 = vpop.permute.xlu0 %639
      %vm641 = vcmask 793600
      %v642 = vsel %vm641, %v638, %v640
      %645 = vst [vmem:[#allocation4] sm:$0xff] %v642
      %646 = vst.msk [vmem:[#allocation4 + $0x8] sm:$0xff] %vm641, %v640
      %v647 = vld [vmem:[%s319] sm:$0xff]
      %649 = vrot.lane.b32.xlu0 %v647, 97
      %v650 = vpop.permute.xlu0 %649
      %vm652 = vcmask 1048328
      %653 = vst.msk [vmem:[#allocation4 + $0x8] sm:$0xff] %vm652, %v650
      %v654 = vld [vmem:[#allocation4] sm:$0xff]
      %v655 = vld [vmem:[#allocation4 + $0x8] sm:$0xff]
      %v656 = vsel %vm441, %v654, %v631
      %v657 = vsel %vm442, %v655, %v632
      %v658 = vld [vmem:[%s319] sm:$0xff]
      %v659 = vld [vmem:[%s319 + $0x8] sm:$0xff]
      %662 = vrot.lane.b32.xlu0 %v658, 112
      %v663 = vpop.permute.xlu0 %662
      %664 = vrot.lane.b32.xlu0 %v659, 112
      %v665 = vpop.permute.xlu0 %664
      %vm666 = vcmask 916480
      %v667 = vsel %vm666, %v663, %v665
      %670 = vst [vmem:[#allocation3] sm:$0xff] %v667
      %671 = vst.msk [vmem:[#allocation3 + $0x8] sm:$0xff] %vm666, %v665
      %v672 = vld [vmem:[%s319] sm:$0xff]
      %674 = vrot.lane.b32.xlu0 %v672, 112
      %v675 = vpop.permute.xlu0 %674
      %vm677 = vcmask 1048448
      %678 = vst.msk [vmem:[#allocation3 + $0x8] sm:$0xff] %vm677, %v675
      %v679 = vld [vmem:[#allocation3] sm:$0xff]
      %v680 = vld [vmem:[#allocation3 + $0x8] sm:$0xff]
      %v681 = vld [vmem:[%s319] sm:$0xff]
      %v682 = vld [vmem:[%s319 + $0x8] sm:$0xff]
      %685 = vrot.lane.b32.xlu0 %v681, 111
      %v686 = vpop.permute.xlu0 %685
      %687 = vrot.lane.b32.xlu0 %v682, 111
      %v688 = vpop.permute.xlu0 %687
      %vm689 = vcmask 908288
      %v690 = vsel %vm689, %v686, %v688
      %693 = vst [vmem:[#allocation3] sm:$0xff] %v690
      %694 = vst.msk [vmem:[#allocation3 + $0x8] sm:$0xff] %vm689, %v688
      %v695 = vld [vmem:[%s319] sm:$0xff]
      %697 = vrot.lane.b32.xlu0 %v695, 111
      %v698 = vpop.permute.xlu0 %697
      %vm700 = vcmask 1048440
      %701 = vst.msk [vmem:[#allocation3 + $0x8] sm:$0xff] %vm700, %v698
      %v702 = vld [vmem:[#allocation3] sm:$0xff]
      %v703 = vld [vmem:[#allocation3 + $0x8] sm:$0xff]
      %v704 = vld [vmem:[%s319] sm:$0xff]
      %v705 = vld [vmem:[%s319 + $0x8] sm:$0xff]
      %708 = vrot.lane.b32.xlu0 %v704, 127
      %v709 = vpop.permute.xlu0 %708
      %710 = vrot.lane.b32.xlu0 %v705, 127
      %v711 = vpop.permute.xlu0 %710
      %v712 = vsel %vm574, %v709, %v711
      %715 = vst [vmem:[#allocation4] sm:$0xff] %v712
      %716 = vst.msk [vmem:[#allocation4 + $0x8] sm:$0xff] %vm574, %v711
      %v717 = vld [vmem:[%s319] sm:$0xff]
      %719 = vrot.lane.b32.xlu0 %v717, 127
      %v720 = vpop.permute.xlu0 %719
      %722 = vst.msk [vmem:[#allocation4 + $0x8] sm:$0xff] %vm585, %v720
      %v723 = vld [vmem:[#allocation4] sm:$0xff]
      %v724 = vld [vmem:[#allocation4 + $0x8] sm:$0xff]
      %v725 = vsel %vm516, %v723, %v702
      %v726 = vsel %vm517, %v724, %v703
      %v727 = vpack.c.bf16 %v466, %v443
      %v728 = vpack.c.bf16 %v467, %v444
      %v729 = vpack.c.bf16 %v564, %v518
      %v730 = vpack.c.bf16 %v565, %v519
      %v731 = vpack.c.bf16 %v610, %v566
      %v732 = vpack.c.bf16 %v611, %v567
      %v733 = vpack.c.bf16 %v679, %v656
      %v734 = vpack.c.bf16 %v680, %v657
      %v735 = vpack.c.bf16 %v725, %v725
      %v736 = vpack.c.bf16 %v726, %v726
      %v737 = vld [vmem:[#allocation2 + $0x8] sm:$0xff]
      %v738 = vld [vmem:[#allocation2 + $0x18] sm:$0xff]
      %v739 = vld [vmem:[#allocation2 + $0x28] sm:$0xff]
      %v740 = vld [vmem:[#allocation2 + $0x38] sm:$0xff]
      %745 = vrot.lane.b32.xlu0 %v737, 17
      %v746 = vpop.permute.xlu0 %745
      %747 = vrot.lane.b32.xlu0 %v738, 17
      %v748 = vpop.permute.xlu0 %747
      %749 = vrot.lane.b32.xlu0 %v739, 17
      %v750 = vpop.permute.xlu0 %749
      %751 = vrot.lane.b32.xlu0 %v740, 17
      %v752 = vpop.permute.xlu0 %751
      %757 = vst.msk [vmem:[#allocation3] sm:$0xff] %vm398, %v746
      %758 = vst.msk [vmem:[#allocation3 + $0x10] sm:$0xff] %vm398, %v748
      %759 = vst.msk [vmem:[#allocation3 + $0x20] sm:$0xff] %vm398, %v750
      %760 = vst.msk [vmem:[#allocation3 + $0x30] sm:$0xff] %vm398, %v752
      %v761 = vld [vmem:[#allocation2] sm:$0xff]
      %v762 = vld [vmem:[#allocation2 + $0x8] sm:$0xff]
      %v763 = vld [vmem:[#allocation2 + $0x10] sm:$0xff]
      %v764 = vld [vmem:[#allocation2 + $0x18] sm:$0xff]
      %v765 = vld [vmem:[#allocation2 + $0x20] sm:$0xff]
      %v766 = vld [vmem:[#allocation2 + $0x28] sm:$0xff]
      %v767 = vld [vmem:[#allocation2 + $0x30] sm:$0xff]
      %v768 = vld [vmem:[#allocation2 + $0x38] sm:$0xff]
      %777 = vrot.lane.b32.xlu0 %v761, 17
      %v778 = vpop.permute.xlu0 %777
      %779 = vrot.lane.b32.xlu0 %v762, 17
      %v780 = vpop.permute.xlu0 %779
      %781 = vrot.lane.b32.xlu0 %v763, 17
      %v782 = vpop.permute.xlu0 %781
      %783 = vrot.lane.b32.xlu0 %v764, 17
      %v784 = vpop.permute.xlu0 %783
      %785 = vrot.lane.b32.xlu0 %v765, 17
      %v786 = vpop.permute.xlu0 %785
      %787 = vrot.lane.b32.xlu0 %v766, 17
      %v788 = vpop.permute.xlu0 %787
      %789 = vrot.lane.b32.xlu0 %v767, 17
      %v790 = vpop.permute.xlu0 %789
      %791 = vrot.lane.b32.xlu0 %v768, 17
      %v792 = vpop.permute.xlu0 %791
      %v793 = vsel %vm398, %v778, %v780
      %v794 = vsel %vm398, %v782, %v784
      %v795 = vsel %vm398, %v786, %v788
      %v796 = vsel %vm398, %v790, %v792
      %805 = vst.msk [vmem:[#allocation3] sm:$0xff] %vm411, %v778
      %806 = vst [vmem:[#allocation3 + $0x8] sm:$0xff] %v793
      %807 = vst.msk [vmem:[#allocation3 + $0x10] sm:$0xff] %vm411, %v782
      %808 = vst [vmem:[#allocation3 + $0x18] sm:$0xff] %v794
      %809 = vst.msk [vmem:[#allocation3 + $0x20] sm:$0xff] %vm411, %v786
      %810 = vst [vmem:[#allocation3 + $0x28] sm:$0xff] %v795
      %811 = vst.msk [vmem:[#allocation3 + $0x30] sm:$0xff] %vm411, %v790
      %812 = vst [vmem:[#allocation3 + $0x38] sm:$0xff] %v796
      %v813 = vld [vmem:[#allocation3] sm:$0xff]
      %v814 = vld [vmem:[#allocation3 + $0x8] sm:$0xff]
      %v815 = vld [vmem:[#allocation3 + $0x10] sm:$0xff]
      %v816 = vld [vmem:[#allocation3 + $0x18] sm:$0xff]
      %v817 = vld [vmem:[#allocation3 + $0x20] sm:$0xff]
      %v818 = vld [vmem:[#allocation3 + $0x28] sm:$0xff]
      %v819 = vld [vmem:[#allocation3 + $0x30] sm:$0xff]
      %v820 = vld [vmem:[#allocation3 + $0x38] sm:$0xff]
      %v821 = vld [vmem:[#allocation2 + $0x8] sm:$0xff]
      %v822 = vld [vmem:[#allocation2 + $0x18] sm:$0xff]
      %v823 = vld [vmem:[#allocation2 + $0x28] sm:$0xff]
      %v824 = vld [vmem:[#allocation2 + $0x38] sm:$0xff]
      %829 = vrot.lane.b32.xlu0 %v821, 1
      %v830 = vpop.permute.xlu0 %829
      %831 = vrot.lane.b32.xlu0 %v822, 1
      %v832 = vpop.permute.xlu0 %831
      %833 = vrot.lane.b32.xlu0 %v823, 1
      %v834 = vpop.permute.xlu0 %833
      %835 = vrot.lane.b32.xlu0 %v824, 1
      %v836 = vpop.permute.xlu0 %835
      %841 = vst.msk [vmem:[#allocation4] sm:$0xff] %vm421, %v830
      %842 = vst.msk [vmem:[#allocation4 + $0x10] sm:$0xff] %vm421, %v832
      %843 = vst.msk [vmem:[#allocation4 + $0x20] sm:$0xff] %vm421, %v834
      %844 = vst.msk [vmem:[#allocation4 + $0x30] sm:$0xff] %vm421, %v836
      %v845 = vld [vmem:[#allocation2] sm:$0xff]
      %v846 = vld [vmem:[#allocation2 + $0x8] sm:$0xff]
      %v847 = vld [vmem:[#allocation2 + $0x10] sm:$0xff]
      %v848 = vld [vmem:[#allocation2 + $0x18] sm:$0xff]
      %v849 = vld [vmem:[#allocation2 + $0x20] sm:$0xff]
      %v850 = vld [vmem:[#allocation2 + $0x28] sm:$0xff]
      %v851 = vld [vmem:[#allocation2 + $0x30] sm:$0xff]
      %v852 = vld [vmem:[#allocation2 + $0x38] sm:$0xff]
      %861 = vrot.lane.b32.xlu0 %v845, 1
      %v862 = vpop.permute.xlu0 %861
      %863 = vrot.lane.b32.xlu0 %v846, 1
      %v864 = vpop.permute.xlu0 %863
      %865 = vrot.lane.b32.xlu0 %v847, 1
      %v866 = vpop.permute.xlu0 %865
      %867 = vrot.lane.b32.xlu0 %v848, 1
      %v868 = vpop.permute.xlu0 %867
      %869 = vrot.lane.b32.xlu0 %v849, 1
      %v870 = vpop.permute.xlu0 %869
      %871 = vrot.lane.b32.xlu0 %v850, 1
      %v872 = vpop.permute.xlu0 %871
      %873 = vrot.lane.b32.xlu0 %v851, 1
      %v874 = vpop.permute.xlu0 %873
      %875 = vrot.lane.b32.xlu0 %v852, 1
      %v876 = vpop.permute.xlu0 %875
      %v877 = vsel %vm421, %v862, %v864
      %v878 = vsel %vm421, %v866, %v868
      %v879 = vsel %vm421, %v870, %v872
      %v880 = vsel %vm421, %v874, %v876
      %889 = vst.msk [vmem:[#allocation4] sm:$0xff] %vm434, %v862
      %890 = vst [vmem:[#allocation4 + $0x8] sm:$0xff] %v877
      %891 = vst.msk [vmem:[#allocation4 + $0x10] sm:$0xff] %vm434, %v866
      %892 = vst [vmem:[#allocation4 + $0x18] sm:$0xff] %v878
      %893 = vst.msk [vmem:[#allocation4 + $0x20] sm:$0xff] %vm434, %v870
      %894 = vst [vmem:[#allocation4 + $0x28] sm:$0xff] %v879
      %895 = vst.msk [vmem:[#allocation4 + $0x30] sm:$0xff] %vm434, %v874
      %896 = vst [vmem:[#allocation4 + $0x38] sm:$0xff] %v880
      %v897 = vld [vmem:[#allocation4] sm:$0xff]
      %v898 = vld [vmem:[#allocation4 + $0x8] sm:$0xff]
      %v899 = vld [vmem:[#allocation4 + $0x10] sm:$0xff]
      %v900 = vld [vmem:[#allocation4 + $0x18] sm:$0xff]
      %v901 = vld [vmem:[#allocation4 + $0x20] sm:$0xff]
      %v902 = vld [vmem:[#allocation4 + $0x28] sm:$0xff]
      %v903 = vld [vmem:[#allocation4 + $0x30] sm:$0xff]
      %v904 = vld [vmem:[#allocation4 + $0x38] sm:$0xff]
      %v905 = vsel %vm441, %v897, %v813
      %v906 = vsel %vm442, %v898, %v814
      %v907 = vsel %vm441, %v899, %v815
      %v908 = vsel %vm442, %v900, %v816
      %v909 = vsel %vm441, %v901, %v817
      %v910 = vsel %vm442, %v902, %v818
      %v911 = vsel %vm441, %v903, %v819
      %v912 = vsel %vm442, %v904, %v820
      %v913 = vld [vmem:[#allocation2 + $0x8] sm:$0xff]
      %v914 = vld [vmem:[#allocation2 + $0x18] sm:$0xff]
      %v915 = vld [vmem:[#allocation2 + $0x28] sm:$0xff]
      %v916 = vld [vmem:[#allocation2 + $0x38] sm:$0xff]
      %921 = vrot.lane.b32.xlu0 %v913, 16
      %v922 = vpop.permute.xlu0 %921
      %923 = vrot.lane.b32.xlu0 %v914, 16
      %v924 = vpop.permute.xlu0 %923
      %925 = vrot.lane.b32.xlu0 %v915, 16
      %v926 = vpop.permute.xlu0 %925
      %927 = vrot.lane.b32.xlu0 %v916, 16
      %v928 = vpop.permute.xlu0 %927
      %933 = vst.msk [vmem:[#allocation3] sm:$0xff] %vm450, %v922
      %934 = vst.msk [vmem:[#allocation3 + $0x10] sm:$0xff] %vm450, %v924
      %935 = vst.msk [vmem:[#allocation3 + $0x20] sm:$0xff] %vm450, %v926
      %936 = vst.msk [vmem:[#allocation3 + $0x30] sm:$0xff] %vm450, %v928
      %v937 = vld [vmem:[#allocation2] sm:$0xff]
      %v938 = vld [vmem:[#allocation2 + $0x8] sm:$0xff]
      %v939 = vld [vmem:[#allocation2 + $0x10] sm:$0xff]
      %v940 = vld [vmem:[#allocation2 + $0x18] sm:$0xff]
      %v941 = vld [vmem:[#allocation2 + $0x20] sm:$0xff]
      %v942 = vld [vmem:[#allocation2 + $0x28] sm:$0xff]
      %v943 = vld [vmem:[#allocation2 + $0x30] sm:$0xff]
      %v944 = vld [vmem:[#allocation2 + $0x38] sm:$0xff]
      %953 = vrot.lane.b32.xlu0 %v937, 16
      %v954 = vpop.permute.xlu0 %953
      %955 = vrot.lane.b32.xlu0 %v938, 16
      %v956 = vpop.permute.xlu0 %955
      %957 = vrot.lane.b32.xlu0 %v939, 16
      %v958 = vpop.permute.xlu0 %957
      %959 = vrot.lane.b32.xlu0 %v940, 16
      %v960 = vpop.permute.xlu0 %959
      %961 = vrot.lane.b32.xlu0 %v941, 16
      %v962 = vpop.permute.xlu0 %961
      %963 = vrot.lane.b32.xlu0 %v942, 16
      %v964 = vpop.permute.xlu0 %963
      %965 = vrot.lane.b32.xlu0 %v943, 16
      %v966 = vpop.permute.xlu0 %965
      %967 = vrot.lane.b32.xlu0 %v944, 16
      %v968 = vpop.permute.xlu0 %967
      %v969 = vsel %vm450, %v954, %v956
      %v970 = vsel %vm450, %v958, %v960
      %v971 = vsel %vm450, %v962, %v964
      %v972 = vsel %vm450, %v966, %v968
      %981 = vst.msk [vmem:[#allocation3] sm:$0xff] %vm463, %v954
      %982 = vst [vmem:[#allocation3 + $0x8] sm:$0xff] %v969
      %983 = vst.msk [vmem:[#allocation3 + $0x10] sm:$0xff] %vm463, %v958
      %984 = vst [vmem:[#allocation3 + $0x18] sm:$0xff] %v970
      %985 = vst.msk [vmem:[#allocation3 + $0x20] sm:$0xff] %vm463, %v962
      %986 = vst [vmem:[#allocation3 + $0x28] sm:$0xff] %v971
      %987 = vst.msk [vmem:[#allocation3 + $0x30] sm:$0xff] %vm463, %v966
      %988 = vst [vmem:[#allocation3 + $0x38] sm:$0xff] %v972
      %v989 = vld [vmem:[#allocation3] sm:$0xff]
      %v990 = vld [vmem:[#allocation3 + $0x8] sm:$0xff]
      %v991 = vld [vmem:[#allocation3 + $0x10] sm:$0xff]
      %v992 = vld [vmem:[#allocation3 + $0x18] sm:$0xff]
      %v993 = vld [vmem:[#allocation3 + $0x20] sm:$0xff]
      %v994 = vld [vmem:[#allocation3 + $0x28] sm:$0xff]
      %v995 = vld [vmem:[#allocation3 + $0x30] sm:$0xff]
      %v996 = vld [vmem:[#allocation3 + $0x38] sm:$0xff]
      %v997 = vld [vmem:[#allocation2 + $0x8] sm:$0xff]
      %v998 = vld [vmem:[#allocation2 + $0x18] sm:$0xff]
      %v999 = vld [vmem:[#allocation2 + $0x28] sm:$0xff]
      %v1000 = vld [vmem:[#allocation2 + $0x38] sm:$0xff]
      %1005 = vrot.lane.b32.xlu0 %v997, 15
      %v1006 = vpop.permute.xlu0 %1005
      %1007 = vrot.lane.b32.xlu0 %v998, 15
      %v1008 = vpop.permute.xlu0 %1007
      %1009 = vrot.lane.b32.xlu0 %v999, 15
      %v1010 = vpop.permute.xlu0 %1009
      %1011 = vrot.lane.b32.xlu0 %v1000, 15
      %v1012 = vpop.permute.xlu0 %1011
      %1017 = vst.msk [vmem:[#allocation3] sm:$0xff] %vm473, %v1006
      %1018 = vst.msk [vmem:[#allocation3 + $0x10] sm:$0xff] %vm473, %v1008
      %1019 = vst.msk [vmem:[#allocation3 + $0x20] sm:$0xff] %vm473, %v1010
      %1020 = vst.msk [vmem:[#allocation3 + $0x30] sm:$0xff] %vm473, %v1012
      %v1021 = vld [vmem:[#allocation2] sm:$0xff]
      %v1022 = vld [vmem:[#allocation2 + $0x8] sm:$0xff]
      %v1023 = vld [vmem:[#allocation2 + $0x10] sm:$0xff]
      %v1024 = vld [vmem:[#allocation2 + $0x18] sm:$0xff]
      %v1025 = vld [vmem:[#allocation2 + $0x20] sm:$0xff]
      %v1026 = vld [vmem:[#allocation2 + $0x28] sm:$0xff]
      %v1027 = vld [vmem:[#allocation2 + $0x30] sm:$0xff]
      %v1028 = vld [vmem:[#allocation2 + $0x38] sm:$0xff]
      %1037 = vrot.lane.b32.xlu0 %v1021, 15
      %v1038 = vpop.permute.xlu0 %1037
      %1039 = vrot.lane.b32.xlu0 %v1022, 15
      %v1040 = vpop.permute.xlu0 %1039
      %1041 = vrot.lane.b32.xlu0 %v1023, 15
      %v1042 = vpop.permute.xlu0 %1041
      %1043 = vrot.lane.b32.xlu0 %v1024, 15
      %v1044 = vpop.permute.xlu0 %1043
      %1045 = vrot.lane.b32.xlu0 %v1025, 15
      %v1046 = vpop.permute.xlu0 %1045
      %1047 = vrot.lane.b32.xlu0 %v1026, 15
      %v1048 = vpop.permute.xlu0 %1047
      %1049 = vrot.lane.b32.xlu0 %v1027, 15
      %v1050 = vpop.permute.xlu0 %1049
      %1051 = vrot.lane.b32.xlu0 %v1028, 15
      %v1052 = vpop.permute.xlu0 %1051
      %v1053 = vsel %vm473, %v1038, %v1040
      %v1054 = vsel %vm473, %v1042, %v1044
      %v1055 = vsel %vm473, %v1046, %v1048
      %v1056 = vsel %vm473, %v1050, %v1052
      %1065 = vst.msk [vmem:[#allocation3] sm:$0xff] %vm486, %v1038
      %1066 = vst [vmem:[#allocation3 + $0x8] sm:$0xff] %v1053
      %1067 = vst.msk [vmem:[#allocation3 + $0x10] sm:$0xff] %vm486, %v1042
      %1068 = vst [vmem:[#allocation3 + $0x18] sm:$0xff] %v1054
      %1069 = vst.msk [vmem:[#allocation3 + $0x20] sm:$0xff] %vm486, %v1046
      %1070 = vst [vmem:[#allocation3 + $0x28] sm:$0xff] %v1055
      %1071 = vst.msk [vmem:[#allocation3 + $0x30] sm:$0xff] %vm486, %v1050
      %1072 = vst [vmem:[#allocation3 + $0x38] sm:$0xff] %v1056
      %v1073 = vld [vmem:[#allocation3] sm:$0xff]
      %v1074 = vld [vmem:[#allocation3 + $0x8] sm:$0xff]
      %v1075 = vld [vmem:[#allocation3 + $0x10] sm:$0xff]
      %v1076 = vld [vmem:[#allocation3 + $0x18] sm:$0xff]
      %v1077 = vld [vmem:[#allocation3 + $0x20] sm:$0xff]
      %v1078 = vld [vmem:[#allocation3 + $0x28] sm:$0xff]
      %v1079 = vld [vmem:[#allocation3 + $0x30] sm:$0xff]
      %v1080 = vld [vmem:[#allocation3 + $0x38] sm:$0xff]
      %v1081 = vld [vmem:[#allocation2 + $0x8] sm:$0xff]
      %v1082 = vld [vmem:[#allocation2 + $0x18] sm:$0xff]
      %v1083 = vld [vmem:[#allocation2 + $0x28] sm:$0xff]
      %v1084 = vld [vmem:[#allocation2 + $0x38] sm:$0xff]
      %1089 = vrot.lane.b32.xlu0 %v1081, 31
      %v1090 = vpop.permute.xlu0 %1089
      %1091 = vrot.lane.b32.xlu0 %v1082, 31
      %v1092 = vpop.permute.xlu0 %1091
      %1093 = vrot.lane.b32.xlu0 %v1083, 31
      %v1094 = vpop.permute.xlu0 %1093
      %1095 = vrot.lane.b32.xlu0 %v1084, 31
      %v1096 = vpop.permute.xlu0 %1095
      %1101 = vst.msk [vmem:[#allocation4] sm:$0xff] %vm496, %v1090
      %1102 = vst.msk [vmem:[#allocation4 + $0x10] sm:$0xff] %vm496, %v1092
      %1103 = vst.msk [vmem:[#allocation4 + $0x20] sm:$0xff] %vm496, %v1094
      %1104 = vst.msk [vmem:[#allocation4 + $0x30] sm:$0xff] %vm496, %v1096
      %v1105 = vld [vmem:[#allocation2] sm:$0xff]
      %v1106 = vld [vmem:[#allocation2 + $0x8] sm:$0xff]
      %v1107 = vld [vmem:[#allocation2 + $0x10] sm:$0xff]
      %v1108 = vld [vmem:[#allocation2 + $0x18] sm:$0xff]
      %v1109 = vld [vmem:[#allocation2 + $0x20] sm:$0xff]
      %v1110 = vld [vmem:[#allocation2 + $0x28] sm:$0xff]
      %v1111 = vld [vmem:[#allocation2 + $0x30] sm:$0xff]
      %v1112 = vld [vmem:[#allocation2 + $0x38] sm:$0xff]
      %1121 = vrot.lane.b32.xlu0 %v1105, 31
      %v1122 = vpop.permute.xlu0 %1121
      %1123 = vrot.lane.b32.xlu0 %v1106, 31
      %v1124 = vpop.permute.xlu0 %1123
      %1125 = vrot.lane.b32.xlu0 %v1107, 31
      %v1126 = vpop.permute.xlu0 %1125
      %1127 = vrot.lane.b32.xlu0 %v1108, 31
      %v1128 = vpop.permute.xlu0 %1127
      %1129 = vrot.lane.b32.xlu0 %v1109, 31
      %v1130 = vpop.permute.xlu0 %1129
      %1131 = vrot.lane.b32.xlu0 %v1110, 31
      %v1132 = vpop.permute.xlu0 %1131
      %1133 = vrot.lane.b32.xlu0 %v1111, 31
      %v1134 = vpop.permute.xlu0 %1133
      %1135 = vrot.lane.b32.xlu0 %v1112, 31
      %v1136 = vpop.permute.xlu0 %1135
      %v1137 = vsel %vm496, %v1122, %v1124
      %v1138 = vsel %vm496, %v1126, %v1128
      %v1139 = vsel %vm496, %v1130, %v1132
      %v1140 = vsel %vm496, %v1134, %v1136
      %1149 = vst.msk [vmem:[#allocation4] sm:$0xff] %vm509, %v1122
      %1150 = vst [vmem:[#allocation4 + $0x8] sm:$0xff] %v1137
      %1151 = vst.msk [vmem:[#allocation4 + $0x10] sm:$0xff] %vm509, %v1126
      %1152 = vst [vmem:[#allocation4 + $0x18] sm:$0xff] %v1138
      %1153 = vst.msk [vmem:[#allocation4 + $0x20] sm:$0xff] %vm509, %v1130
      %1154 = vst [vmem:[#allocation4 + $0x28] sm:$0xff] %v1139
      %1155 = vst.msk [vmem:[#allocation4 + $0x30] sm:$0xff] %vm509, %v1134
      %1156 = vst [vmem:[#allocation4 + $0x38] sm:$0xff] %v1140
      %v1157 = vld [vmem:[#allocation4] sm:$0xff]
      %v1158 = vld [vmem:[#allocation4 + $0x8] sm:$0xff]
      %v1159 = vld [vmem:[#allocation4 + $0x10] sm:$0xff]
      %v1160 = vld [vmem:[#allocation4 + $0x18] sm:$0xff]
      %v1161 = vld [vmem:[#allocation4 + $0x20] sm:$0xff]
      %v1162 = vld [vmem:[#allocation4 + $0x28] sm:$0xff]
      %v1163 = vld [vmem:[#allocation4 + $0x30] sm:$0xff]
      %v1164 = vld [vmem:[#allocation4 + $0x38] sm:$0xff]
      %v1165 = vsel %vm516, %v1157, %v1073
      %v1166 = vsel %vm517, %v1158, %v1074
      %v1167 = vsel %vm516, %v1159, %v1075
      %v1168 = vsel %vm517, %v1160, %v1076
      %v1169 = vsel %vm516, %v1161, %v1077
      %v1170 = vsel %vm517, %v1162, %v1078
      %v1171 = vsel %vm516, %v1163, %v1079
      %v1172 = vsel %vm517, %v1164, %v1080
      %v1173 = vld [vmem:[#allocation2 + $0x8] sm:$0xff]
      %v1174 = vld [vmem:[#allocation2 + $0x18] sm:$0xff]
      %v1175 = vld [vmem:[#allocation2 + $0x28] sm:$0xff]
      %v1176 = vld [vmem:[#allocation2 + $0x38] sm:$0xff]
      %1181 = vrot.lane.b32.xlu0 %v1173, 1
      %v1182 = vpop.permute.xlu0 %1181
      %1183 = vrot.lane.b32.xlu0 %v1174, 1
      %v1184 = vpop.permute.xlu0 %1183
      %1185 = vrot.lane.b32.xlu0 %v1175, 1
      %v1186 = vpop.permute.xlu0 %1185
      %1187 = vrot.lane.b32.xlu0 %v1176, 1
      %v1188 = vpop.permute.xlu0 %1187
      %1193 = vst.msk [vmem:[#allocation3] sm:$0xff] %vm421, %v1182
      %1194 = vst.msk [vmem:[#allocation3 + $0x10] sm:$0xff] %vm421, %v1184
      %1195 = vst.msk [vmem:[#allocation3 + $0x20] sm:$0xff] %vm421, %v1186
      %1196 = vst.msk [vmem:[#allocation3 + $0x30] sm:$0xff] %vm421, %v1188
      %v1197 = vld [vmem:[#allocation2] sm:$0xff]
      %v1198 = vld [vmem:[#allocation2 + $0x8] sm:$0xff]
      %v1199 = vld [vmem:[#allocation2 + $0x10] sm:$0xff]
      %v1200 = vld [vmem:[#allocation2 + $0x18] sm:$0xff]
      %v1201 = vld [vmem:[#allocation2 + $0x20] sm:$0xff]
      %v1202 = vld [vmem:[#allocation2 + $0x28] sm:$0xff]
      %v1203 = vld [vmem:[#allocation2 + $0x30] sm:$0xff]
      %v1204 = vld [vmem:[#allocation2 + $0x38] sm:$0xff]
      %1213 = vrot.lane.b32.xlu0 %v1197, 1
      %v1214 = vpop.permute.xlu0 %1213
      %1215 = vrot.lane.b32.xlu0 %v1198, 1
      %v1216 = vpop.permute.xlu0 %1215
      %1217 = vrot.lane.b32.xlu0 %v1199, 1
      %v1218 = vpop.permute.xlu0 %1217
      %1219 = vrot.lane.b32.xlu0 %v1200, 1
      %v1220 = vpop.permute.xlu0 %1219
      %1221 = vrot.lane.b32.xlu0 %v1201, 1
      %v1222 = vpop.permute.xlu0 %1221
      %1223 = vrot.lane.b32.xlu0 %v1202, 1
      %v1224 = vpop.permute.xlu0 %1223
      %1225 = vrot.lane.b32.xlu0 %v1203, 1
      %v1226 = vpop.permute.xlu0 %1225
      %1227 = vrot.lane.b32.xlu0 %v1204, 1
      %v1228 = vpop.permute.xlu0 %1227
      %v1229 = vsel %vm421, %v1214, %v1216
      %v1230 = vsel %vm421, %v1218, %v1220
      %v1231 = vsel %vm421, %v1222, %v1224
      %v1232 = vsel %vm421, %v1226, %v1228
      %1241 = vst.msk [vmem:[#allocation3] sm:$0xff] %vm434, %v1214
      %1242 = vst [vmem:[#allocation3 + $0x8] sm:$0xff] %v1229
      %1243 = vst.msk [vmem:[#allocation3 + $0x10] sm:$0xff] %vm434, %v1218
      %1244 = vst [vmem:[#allocation3 + $0x18] sm:$0xff] %v1230
      %1245 = vst.msk [vmem:[#allocation3 + $0x20] sm:$0xff] %vm434, %v1222
      %1246 = vst [vmem:[#allocation3 + $0x28] sm:$0xff] %v1231
      %1247 = vst.msk [vmem:[#allocation3 + $0x30] sm:$0xff] %vm434, %v1226
      %1248 = vst [vmem:[#allocation3 + $0x38] sm:$0xff] %v1232
      %v1249 = vld [vmem:[#allocation3] sm:$0xff]
      %v1250 = vld [vmem:[#allocation3 + $0x8] sm:$0xff]
      %v1251 = vld [vmem:[#allocation3 + $0x10] sm:$0xff]
      %v1252 = vld [vmem:[#allocation3 + $0x18] sm:$0xff]
      %v1253 = vld [vmem:[#allocation3 + $0x20] sm:$0xff]
      %v1254 = vld [vmem:[#allocation3 + $0x28] sm:$0xff]
      %v1255 = vld [vmem:[#allocation3 + $0x30] sm:$0xff]
      %v1256 = vld [vmem:[#allocation3 + $0x38] sm:$0xff]
      %v1257 = vld [vmem:[#allocation2] sm:$0xff]
      %v1258 = vld [vmem:[#allocation2 + $0x8] sm:$0xff]
      %v1259 = vld [vmem:[#allocation2 + $0x10] sm:$0xff]
      %v1260 = vld [vmem:[#allocation2 + $0x18] sm:$0xff]
      %v1261 = vld [vmem:[#allocation2 + $0x20] sm:$0xff]
      %v1262 = vld [vmem:[#allocation2 + $0x28] sm:$0xff]
      %v1263 = vld [vmem:[#allocation2 + $0x30] sm:$0xff]
      %v1264 = vld [vmem:[#allocation2 + $0x38] sm:$0xff]
      %1273 = vrot.lane.b32.xlu0 %v1257, 113
      %v1274 = vpop.permute.xlu0 %1273
      %1275 = vrot.lane.b32.xlu0 %v1258, 113
      %v1276 = vpop.permute.xlu0 %1275
      %1277 = vrot.lane.b32.xlu0 %v1259, 113
      %v1278 = vpop.permute.xlu0 %1277
      %1279 = vrot.lane.b32.xlu0 %v1260, 113
      %v1280 = vpop.permute.xlu0 %1279
      %1281 = vrot.lane.b32.xlu0 %v1261, 113
      %v1282 = vpop.permute.xlu0 %1281
      %1283 = vrot.lane.b32.xlu0 %v1262, 113
      %v1284 = vpop.permute.xlu0 %1283
      %1285 = vrot.lane.b32.xlu0 %v1263, 113
      %v1286 = vpop.permute.xlu0 %1285
      %1287 = vrot.lane.b32.xlu0 %v1264, 113
      %v1288 = vpop.permute.xlu0 %1287
      %v1289 = vsel %vm549, %v1274, %v1276
      %v1290 = vsel %vm549, %v1278, %v1280
      %v1291 = vsel %vm549, %v1282, %v1284
      %v1292 = vsel %vm549, %v1286, %v1288
      %1301 = vst [vmem:[#allocation4] sm:$0xff] %v1289
      %1302 = vst.msk [vmem:[#allocation4 + $0x8] sm:$0xff] %vm549, %v1276
      %1303 = vst [vmem:[#allocation4 + $0x10] sm:$0xff] %v1290
      %1304 = vst.msk [vmem:[#allocation4 + $0x18] sm:$0xff] %vm549, %v1280
      %1305 = vst [vmem:[#allocation4 + $0x20] sm:$0xff] %v1291
      %1306 = vst.msk [vmem:[#allocation4 + $0x28] sm:$0xff] %vm549, %v1284
      %1307 = vst [vmem:[#allocation4 + $0x30] sm:$0xff] %v1292
      %1308 = vst.msk [vmem:[#allocation4 + $0x38] sm:$0xff] %vm549, %v1288
      %v1309 = vld [vmem:[#allocation2] sm:$0xff]
      %v1310 = vld [vmem:[#allocation2 + $0x10] sm:$0xff]
      %v1311 = vld [vmem:[#allocation2 + $0x20] sm:$0xff]
      %v1312 = vld [vmem:[#allocation2 + $0x30] sm:$0xff]
      %1317 = vrot.lane.b32.xlu0 %v1309, 113
      %v1318 = vpop.permute.xlu0 %1317
      %1319 = vrot.lane.b32.xlu0 %v1310, 113
      %v1320 = vpop.permute.xlu0 %1319
      %1321 = vrot.lane.b32.xlu0 %v1311, 113
      %v1322 = vpop.permute.xlu0 %1321
      %1323 = vrot.lane.b32.xlu0 %v1312, 113
      %v1324 = vpop.permute.xlu0 %1323
      %1329 = vst.msk [vmem:[#allocation4 + $0x8] sm:$0xff] %vm560, %v1318
      %1330 = vst.msk [vmem:[#allocation4 + $0x18] sm:$0xff] %vm560, %v1320
      %1331 = vst.msk [vmem:[#allocation4 + $0x28] sm:$0xff] %vm560, %v1322
      %1332 = vst.msk [vmem:[#allocation4 + $0x38] sm:$0xff] %vm560, %v1324
      %v1333 = vld [vmem:[#allocation4] sm:$0xff]
      %v1334 = vld [vmem:[#allocation4 + $0x8] sm:$0xff]
      %v1335 = vld [vmem:[#allocation4 + $0x10] sm:$0xff]
      %v1336 = vld [vmem:[#allocation4 + $0x18] sm:$0xff]
      %v1337 = vld [vmem:[#allocation4 + $0x20] sm:$0xff]
      %v1338 = vld [vmem:[#allocation4 + $0x28] sm:$0xff]
      %v1339 = vld [vmem:[#allocation4 + $0x30] sm:$0xff]
      %v1340 = vld [vmem:[#allocation4 + $0x38] sm:$0xff]
      %v1341 = vsel %vm441, %v1333, %v1249
      %v1342 = vsel %vm442, %v1334, %v1250
      %v1343 = vsel %vm441, %v1335, %v1251
      %v1344 = vsel %vm442, %v1336, %v1252
      %v1345 = vsel %vm441, %v1337, %v1253
      %v1346 = vsel %vm442, %v1338, %v1254
      %v1347 = vsel %vm441, %v1339, %v1255
      %v1348 = vsel %vm442, %v1340, %v1256
      %v1349 = vld [vmem:[#allocation2] sm:$0xff]
      %v1350 = vld [vmem:[#allocation2 + $0x8] sm:$0xff]
      %v1351 = vld [vmem:[#allocation2 + $0x10] sm:$0xff]
      %v1352 = vld [vmem:[#allocation2 + $0x18] sm:$0xff]
      %v1353 = vld [vmem:[#allocation2 + $0x20] sm:$0xff]
      %v1354 = vld [vmem:[#allocation2 + $0x28] sm:$0xff]
      %v1355 = vld [vmem:[#allocation2 + $0x30] sm:$0xff]
      %v1356 = vld [vmem:[#allocation2 + $0x38] sm:$0xff]
      %1365 = vrot.lane.b32.xlu0 %v1349, 127
      %v1366 = vpop.permute.xlu0 %1365
      %1367 = vrot.lane.b32.xlu0 %v1350, 127
      %v1368 = vpop.permute.xlu0 %1367
      %1369 = vrot.lane.b32.xlu0 %v1351, 127
      %v1370 = vpop.permute.xlu0 %1369
      %1371 = vrot.lane.b32.xlu0 %v1352, 127
      %v1372 = vpop.permute.xlu0 %1371
      %1373 = vrot.lane.b32.xlu0 %v1353, 127
      %v1374 = vpop.permute.xlu0 %1373
      %1375 = vrot.lane.b32.xlu0 %v1354, 127
      %v1376 = vpop.permute.xlu0 %1375
      %1377 = vrot.lane.b32.xlu0 %v1355, 127
      %v1378 = vpop.permute.xlu0 %1377
      %1379 = vrot.lane.b32.xlu0 %v1356, 127
      %v1380 = vpop.permute.xlu0 %1379
      %v1381 = vsel %vm574, %v1366, %v1368
      %v1382 = vsel %vm574, %v1370, %v1372
      %v1383 = vsel %vm574, %v1374, %v1376
      %v1384 = vsel %vm574, %v1378, %v1380
      %1393 = vst [vmem:[#allocation3] sm:$0xff] %v1381
      %1394 = vst.msk [vmem:[#allocation3 + $0x8] sm:$0xff] %vm574, %v1368
      %1395 = vst [vmem:[#allocation3 + $0x10] sm:$0xff] %v1382
      %1396 = vst.msk [vmem:[#allocation3 + $0x18] sm:$0xff] %vm574, %v1372
      %1397 = vst [vmem:[#allocation3 + $0x20] sm:$0xff] %v1383
      %1398 = vst.msk [vmem:[#allocation3 + $0x28] sm:$0xff] %vm574, %v1376
      %1399 = vst [vmem:[#allocation3 + $0x30] sm:$0xff] %v1384
      %1400 = vst.msk [vmem:[#allocation3 + $0x38] sm:$0xff] %vm574, %v1380
      %v1401 = vld [vmem:[#allocation2] sm:$0xff]
      %v1402 = vld [vmem:[#allocation2 + $0x10] sm:$0xff]
      %v1403 = vld [vmem:[#allocation2 + $0x20] sm:$0xff]
      %v1404 = vld [vmem:[#allocation2 + $0x30] sm:$0xff]
      %1409 = vrot.lane.b32.xlu0 %v1401, 127
      %v1410 = vpop.permute.xlu0 %1409
      %1411 = vrot.lane.b32.xlu0 %v1402, 127
      %v1412 = vpop.permute.xlu0 %1411
      %1413 = vrot.lane.b32.xlu0 %v1403, 127
      %v1414 = vpop.permute.xlu0 %1413
      %1415 = vrot.lane.b32.xlu0 %v1404, 127
      %v1416 = vpop.permute.xlu0 %1415
      %1421 = vst.msk [vmem:[#allocation3 + $0x8] sm:$0xff] %vm585, %v1410
      %1422 = vst.msk [vmem:[#allocation3 + $0x18] sm:$0xff] %vm585, %v1412
      %1423 = vst.msk [vmem:[#allocation3 + $0x28] sm:$0xff] %vm585, %v1414
      %1424 = vst.msk [vmem:[#allocation3 + $0x38] sm:$0xff] %vm585, %v1416
      %v1425 = vld [vmem:[#allocation3] sm:$0xff]
      %v1426 = vld [vmem:[#allocation3 + $0x8] sm:$0xff]
      %v1427 = vld [vmem:[#allocation3 + $0x10] sm:$0xff]
      %v1428 = vld [vmem:[#allocation3 + $0x18] sm:$0xff]
      %v1429 = vld [vmem:[#allocation3 + $0x20] sm:$0xff]
      %v1430 = vld [vmem:[#allocation3 + $0x28] sm:$0xff]
      %v1431 = vld [vmem:[#allocation3 + $0x30] sm:$0xff]
      %v1432 = vld [vmem:[#allocation3 + $0x38] sm:$0xff]
      %v1433 = vld [vmem:[#allocation2 + $0x8] sm:$0xff]
      %v1434 = vld [vmem:[#allocation2 + $0x18] sm:$0xff]
      %v1435 = vld [vmem:[#allocation2 + $0x28] sm:$0xff]
      %v1436 = vld [vmem:[#allocation2 + $0x38] sm:$0xff]
      %1441 = vrot.lane.b32.xlu0 %v1433, 15
      %v1442 = vpop.permute.xlu0 %1441
      %1443 = vrot.lane.b32.xlu0 %v1434, 15
      %v1444 = vpop.permute.xlu0 %1443
      %1445 = vrot.lane.b32.xlu0 %v1435, 15
      %v1446 = vpop.permute.xlu0 %1445
      %1447 = vrot.lane.b32.xlu0 %v1436, 15
      %v1448 = vpop.permute.xlu0 %1447
      %1453 = vst.msk [vmem:[#allocation4] sm:$0xff] %vm473, %v1442
      %1454 = vst.msk [vmem:[#allocation4 + $0x10] sm:$0xff] %vm473, %v1444
      %1455 = vst.msk [vmem:[#allocation4 + $0x20] sm:$0xff] %vm473, %v1446
      %1456 = vst.msk [vmem:[#allocation4 + $0x30] sm:$0xff] %vm473, %v1448
      %v1457 = vld [vmem:[#allocation2] sm:$0xff]
      %v1458 = vld [vmem:[#allocation2 + $0x8] sm:$0xff]
      %v1459 = vld [vmem:[#allocation2 + $0x10] sm:$0xff]
      %v1460 = vld [vmem:[#allocation2 + $0x18] sm:$0xff]
      %v1461 = vld [vmem:[#allocation2 + $0x20] sm:$0xff]
      %v1462 = vld [vmem:[#allocation2 + $0x28] sm:$0xff]
      %v1463 = vld [vmem:[#allocation2 + $0x30] sm:$0xff]
      %v1464 = vld [vmem:[#allocation2 + $0x38] sm:$0xff]
      %1473 = vrot.lane.b32.xlu0 %v1457, 15
      %v1474 = vpop.permute.xlu0 %1473
      %1475 = vrot.lane.b32.xlu0 %v1458, 15
      %v1476 = vpop.permute.xlu0 %1475
      %1477 = vrot.lane.b32.xlu0 %v1459, 15
      %v1478 = vpop.permute.xlu0 %1477
      %1479 = vrot.lane.b32.xlu0 %v1460, 15
      %v1480 = vpop.permute.xlu0 %1479
      %1481 = vrot.lane.b32.xlu0 %v1461, 15
      %v1482 = vpop.permute.xlu0 %1481
      %1483 = vrot.lane.b32.xlu0 %v1462, 15
      %v1484 = vpop.permute.xlu0 %1483
      %1485 = vrot.lane.b32.xlu0 %v1463, 15
      %v1486 = vpop.permute.xlu0 %1485
      %1487 = vrot.lane.b32.xlu0 %v1464, 15
      %v1488 = vpop.permute.xlu0 %1487
      %v1489 = vsel %vm473, %v1474, %v1476
      %v1490 = vsel %vm473, %v1478, %v1480
      %v1491 = vsel %vm473, %v1482, %v1484
      %v1492 = vsel %vm473, %v1486, %v1488
      %1501 = vst.msk [vmem:[#allocation4] sm:$0xff] %vm486, %v1474
      %1502 = vst [vmem:[#allocation4 + $0x8] sm:$0xff] %v1489
      %1503 = vst.msk [vmem:[#allocation4 + $0x10] sm:$0xff] %vm486, %v1478
      %1504 = vst [vmem:[#allocation4 + $0x18] sm:$0xff] %v1490
      %1505 = vst.msk [vmem:[#allocation4 + $0x20] sm:$0xff] %vm486, %v1482
      %1506 = vst [vmem:[#allocation4 + $0x28] sm:$0xff] %v1491
      %1507 = vst.msk [vmem:[#allocation4 + $0x30] sm:$0xff] %vm486, %v1486
      %1508 = vst [vmem:[#allocation4 + $0x38] sm:$0xff] %v1492
      %v1509 = vld [vmem:[#allocation4] sm:$0xff]
      %v1510 = vld [vmem:[#allocation4 + $0x8] sm:$0xff]
      %v1511 = vld [vmem:[#allocation4 + $0x10] sm:$0xff]
      %v1512 = vld [vmem:[#allocation4 + $0x18] sm:$0xff]
      %v1513 = vld [vmem:[#allocation4 + $0x20] sm:$0xff]
      %v1514 = vld [vmem:[#allocation4 + $0x28] sm:$0xff]
      %v1515 = vld [vmem:[#allocation4 + $0x30] sm:$0xff]
      %v1516 = vld [vmem:[#allocation4 + $0x38] sm:$0xff]
      %v1517 = vsel %vm516, %v1509, %v1425
      %v1518 = vsel %vm517, %v1510, %v1426
      %v1519 = vsel %vm516, %v1511, %v1427
      %v1520 = vsel %vm517, %v1512, %v1428
      %v1521 = vsel %vm516, %v1513, %v1429
      %v1522 = vsel %vm517, %v1514, %v1430
      %v1523 = vsel %vm516, %v1515, %v1431
      %v1524 = vsel %vm517, %v1516, %v1432
      %v1525 = vld [vmem:[#allocation2] sm:$0xff]
      %v1526 = vld [vmem:[#allocation2 + $0x8] sm:$0xff]
      %v1527 = vld [vmem:[#allocation2 + $0x10] sm:$0xff]
      %v1528 = vld [vmem:[#allocation2 + $0x18] sm:$0xff]
      %v1529 = vld [vmem:[#allocation2 + $0x20] sm:$0xff]
      %v1530 = vld [vmem:[#allocation2 + $0x28] sm:$0xff]
      %v1531 = vld [vmem:[#allocation2 + $0x30] sm:$0xff]
      %v1532 = vld [vmem:[#allocation2 + $0x38] sm:$0xff]
      %1541 = vrot.lane.b32.xlu0 %v1525, 113
      %v1542 = vpop.permute.xlu0 %1541
      %1543 = vrot.lane.b32.xlu0 %v1526, 113
      %v1544 = vpop.permute.xlu0 %1543
      %1545 = vrot.lane.b32.xlu0 %v1527, 113
      %v1546 = vpop.permute.xlu0 %1545
      %1547 = vrot.lane.b32.xlu0 %v1528, 113
      %v1548 = vpop.permute.xlu0 %1547
      %1549 = vrot.lane.b32.xlu0 %v1529, 113
      %v1550 = vpop.permute.xlu0 %1549
      %1551 = vrot.lane.b32.xlu0 %v1530, 113
      %v1552 = vpop.permute.xlu0 %1551
      %1553 = vrot.lane.b32.xlu0 %v1531, 113
      %v1554 = vpop.permute.xlu0 %1553
      %1555 = vrot.lane.b32.xlu0 %v1532, 113
      %v1556 = vpop.permute.xlu0 %1555
      %v1557 = vsel %vm549, %v1542, %v1544
      %v1558 = vsel %vm549, %v1546, %v1548
      %v1559 = vsel %vm549, %v1550, %v1552
      %v1560 = vsel %vm549, %v1554, %v1556
      %1569 = vst [vmem:[#allocation3] sm:$0xff] %v1557
      %1570 = vst.msk [vmem:[#allocation3 + $0x8] sm:$0xff] %vm549, %v1544
      %1571 = vst [vmem:[#allocation3 + $0x10] sm:$0xff] %v1558
      %1572 = vst.msk [vmem:[#allocation3 + $0x18] sm:$0xff] %vm549, %v1548
      %1573 = vst [vmem:[#allocation3 + $0x20] sm:$0xff] %v1559
      %1574 = vst.msk [vmem:[#allocation3 + $0x28] sm:$0xff] %vm549, %v1552
      %1575 = vst [vmem:[#allocation3 + $0x30] sm:$0xff] %v1560
      %1576 = vst.msk [vmem:[#allocation3 + $0x38] sm:$0xff] %vm549, %v1556
      %v1577 = vld [vmem:[#allocation2] sm:$0xff]
      %v1578 = vld [vmem:[#allocation2 + $0x10] sm:$0xff]
      %v1579 = vld [vmem:[#allocation2 + $0x20] sm:$0xff]
      %v1580 = vld [vmem:[#allocation2 + $0x30] sm:$0xff]
      %1585 = vrot.lane.b32.xlu0 %v1577, 113
      %v1586 = vpop.permute.xlu0 %1585
      %1587 = vrot.lane.b32.xlu0 %v1578, 113
      %v1588 = vpop.permute.xlu0 %1587
      %1589 = vrot.lane.b32.xlu0 %v1579, 113
      %v1590 = vpop.permute.xlu0 %1589
      %1591 = vrot.lane.b32.xlu0 %v1580, 113
      %v1592 = vpop.permute.xlu0 %1591
      %1597 = vst.msk [vmem:[#allocation3 + $0x8] sm:$0xff] %vm560, %v1586
      %1598 = vst.msk [vmem:[#allocation3 + $0x18] sm:$0xff] %vm560, %v1588
      %1599 = vst.msk [vmem:[#allocation3 + $0x28] sm:$0xff] %vm560, %v1590
      %1600 = vst.msk [vmem:[#allocation3 + $0x38] sm:$0xff] %vm560, %v1592
      %v1601 = vld [vmem:[#allocation3] sm:$0xff]
      %v1602 = vld [vmem:[#allocation3 + $0x8] sm:$0xff]
      %v1603 = vld [vmem:[#allocation3 + $0x10] sm:$0xff]
      %v1604 = vld [vmem:[#allocation3 + $0x18] sm:$0xff]
      %v1605 = vld [vmem:[#allocation3 + $0x20] sm:$0xff]
      %v1606 = vld [vmem:[#allocation3 + $0x28] sm:$0xff]
      %v1607 = vld [vmem:[#allocation3 + $0x30] sm:$0xff]
      %v1608 = vld [vmem:[#allocation3 + $0x38] sm:$0xff]
      %v1609 = vld [vmem:[#allocation2] sm:$0xff]
      %v1610 = vld [vmem:[#allocation2 + $0x8] sm:$0xff]
      %v1611 = vld [vmem:[#allocation2 + $0x10] sm:$0xff]
      %v1612 = vld [vmem:[#allocation2 + $0x18] sm:$0xff]
      %v1613 = vld [vmem:[#allocation2 + $0x20] sm:$0xff]
      %v1614 = vld [vmem:[#allocation2 + $0x28] sm:$0xff]
      %v1615 = vld [vmem:[#allocation2 + $0x30] sm:$0xff]
      %v1616 = vld [vmem:[#allocation2 + $0x38] sm:$0xff]
      %1625 = vrot.lane.b32.xlu0 %v1609, 97
      %v1626 = vpop.permute.xlu0 %1625
      %1627 = vrot.lane.b32.xlu0 %v1610, 97
      %v1628 = vpop.permute.xlu0 %1627
      %1629 = vrot.lane.b32.xlu0 %v1611, 97
      %v1630 = vpop.permute.xlu0 %1629
      %1631 = vrot.lane.b32.xlu0 %v1612, 97
      %v1632 = vpop.permute.xlu0 %1631
      %1633 = vrot.lane.b32.xlu0 %v1613, 97
      %v1634 = vpop.permute.xlu0 %1633
      %1635 = vrot.lane.b32.xlu0 %v1614, 97
      %v1636 = vpop.permute.xlu0 %1635
      %1637 = vrot.lane.b32.xlu0 %v1615, 97
      %v1638 = vpop.permute.xlu0 %1637
      %1639 = vrot.lane.b32.xlu0 %v1616, 97
      %v1640 = vpop.permute.xlu0 %1639
      %v1641 = vsel %vm641, %v1626, %v1628
      %v1642 = vsel %vm641, %v1630, %v1632
      %v1643 = vsel %vm641, %v1634, %v1636
      %v1644 = vsel %vm641, %v1638, %v1640
      %1653 = vst [vmem:[#allocation4] sm:$0xff] %v1641
      %1654 = vst.msk [vmem:[#allocation4 + $0x8] sm:$0xff] %vm641, %v1628
      %1655 = vst [vmem:[#allocation4 + $0x10] sm:$0xff] %v1642
      %1656 = vst.msk [vmem:[#allocation4 + $0x18] sm:$0xff] %vm641, %v1632
      %1657 = vst [vmem:[#allocation4 + $0x20] sm:$0xff] %v1643
      %1658 = vst.msk [vmem:[#allocation4 + $0x28] sm:$0xff] %vm641, %v1636
      %1659 = vst [vmem:[#allocation4 + $0x30] sm:$0xff] %v1644
      %1660 = vst.msk [vmem:[#allocation4 + $0x38] sm:$0xff] %vm641, %v1640
      %v1661 = vld [vmem:[#allocation2] sm:$0xff]
      %v1662 = vld [vmem:[#allocation2 + $0x10] sm:$0xff]
      %v1663 = vld [vmem:[#allocation2 + $0x20] sm:$0xff]
      %v1664 = vld [vmem:[#allocation2 + $0x30] sm:$0xff]
      %1669 = vrot.lane.b32.xlu0 %v1661, 97
      %v1670 = vpop.permute.xlu0 %1669
      %1671 = vrot.lane.b32.xlu0 %v1662, 97
      %v1672 = vpop.permute.xlu0 %1671
      %1673 = vrot.lane.b32.xlu0 %v1663, 97
      %v1674 = vpop.permute.xlu0 %1673
      %1675 = vrot.lane.b32.xlu0 %v1664, 97
      %v1676 = vpop.permute.xlu0 %1675
      %1681 = vst.msk [vmem:[#allocation4 + $0x8] sm:$0xff] %vm652, %v1670
      %1682 = vst.msk [vmem:[#allocation4 + $0x18] sm:$0xff] %vm652, %v1672
      %1683 = vst.msk [vmem:[#allocation4 + $0x28] sm:$0xff] %vm652, %v1674
      %1684 = vst.msk [vmem:[#allocation4 + $0x38] sm:$0xff] %vm652, %v1676
      %v1685 = vld [vmem:[#allocation4] sm:$0xff]
      %v1686 = vld [vmem:[#allocation4 + $0x8] sm:$0xff]
      %v1687 = vld [vmem:[#allocation4 + $0x10] sm:$0xff]
      %v1688 = vld [vmem:[#allocation4 + $0x18] sm:$0xff]
      %v1689 = vld [vmem:[#allocation4 + $0x20] sm:$0xff]
      %v1690 = vld [vmem:[#allocation4 + $0x28] sm:$0xff]
      %v1691 = vld [vmem:[#allocation4 + $0x30] sm:$0xff]
      %v1692 = vld [vmem:[#allocation4 + $0x38] sm:$0xff]
      %v1693 = vsel %vm441, %v1685, %v1601
      %v1694 = vsel %vm442, %v1686, %v1602
      %v1695 = vsel %vm441, %v1687, %v1603
      %v1696 = vsel %vm442, %v1688, %v1604
      %v1697 = vsel %vm441, %v1689, %v1605
      %v1698 = vsel %vm442, %v1690, %v1606
      %v1699 = vsel %vm441, %v1691, %v1607
      %v1700 = vsel %vm442, %v1692, %v1608
      %v1701 = vld [vmem:[#allocation2] sm:$0xff]
      %v1702 = vld [vmem:[#allocation2 + $0x8] sm:$0xff]
      %v1703 = vld [vmem:[#allocation2 + $0x10] sm:$0xff]
      %v1704 = vld [vmem:[#allocation2 + $0x18] sm:$0xff]
      %v1705 = vld [vmem:[#allocation2 + $0x20] sm:$0xff]
      %v1706 = vld [vmem:[#allocation2 + $0x28] sm:$0xff]
      %v1707 = vld [vmem:[#allocation2 + $0x30] sm:$0xff]
      %v1708 = vld [vmem:[#allocation2 + $0x38] sm:$0xff]
      %1717 = vrot.lane.b32.xlu0 %v1701, 112
      %v1718 = vpop.permute.xlu0 %1717
      %1719 = vrot.lane.b32.xlu0 %v1702, 112
      %v1720 = vpop.permute.xlu0 %1719
      %1721 = vrot.lane.b32.xlu0 %v1703, 112
      %v1722 = vpop.permute.xlu0 %1721
      %1723 = vrot.lane.b32.xlu0 %v1704, 112
      %v1724 = vpop.permute.xlu0 %1723
      %1725 = vrot.lane.b32.xlu0 %v1705, 112
      %v1726 = vpop.permute.xlu0 %1725
      %1727 = vrot.lane.b32.xlu0 %v1706, 112
      %v1728 = vpop.permute.xlu0 %1727
      %1729 = vrot.lane.b32.xlu0 %v1707, 112
      %v1730 = vpop.permute.xlu0 %1729
      %1731 = vrot.lane.b32.xlu0 %v1708, 112
      %v1732 = vpop.permute.xlu0 %1731
      %v1733 = vsel %vm666, %v1718, %v1720
      %v1734 = vsel %vm666, %v1722, %v1724
      %v1735 = vsel %vm666, %v1726, %v1728
      %v1736 = vsel %vm666, %v1730, %v1732
      %1745 = vst [vmem:[#allocation3] sm:$0xff] %v1733
      %1746 = vst.msk [vmem:[#allocation3 + $0x8] sm:$0xff] %vm666, %v1720
      %1747 = vst [vmem:[#allocation3 + $0x10] sm:$0xff] %v1734
      %1748 = vst.msk [vmem:[#allocation3 + $0x18] sm:$0xff] %vm666, %v1724
      %1749 = vst [vmem:[#allocation3 + $0x20] sm:$0xff] %v1735
      %1750 = vst.msk [vmem:[#allocation3 + $0x28] sm:$0xff] %vm666, %v1728
      %1751 = vst [vmem:[#allocation3 + $0x30] sm:$0xff] %v1736
      %1752 = vst.msk [vmem:[#allocation3 + $0x38] sm:$0xff] %vm666, %v1732
      %v1753 = vld [vmem:[#allocation2] sm:$0xff]
      %v1754 = vld [vmem:[#allocation2 + $0x10] sm:$0xff]
      %v1755 = vld [vmem:[#allocation2 + $0x20] sm:$0xff]
      %v1756 = vld [vmem:[#allocation2 + $0x30] sm:$0xff]
      %1761 = vrot.lane.b32.xlu0 %v1753, 112
      %v1762 = vpop.permute.xlu0 %1761
      %1763 = vrot.lane.b32.xlu0 %v1754, 112
      %v1764 = vpop.permute.xlu0 %1763
      %1765 = vrot.lane.b32.xlu0 %v1755, 112
      %v1766 = vpop.permute.xlu0 %1765
      %1767 = vrot.lane.b32.xlu0 %v1756, 112
      %v1768 = vpop.permute.xlu0 %1767
      %1773 = vst.msk [vmem:[#allocation3 + $0x8] sm:$0xff] %vm677, %v1762
      %1774 = vst.msk [vmem:[#allocation3 + $0x18] sm:$0xff] %vm677, %v1764
      %1775 = vst.msk [vmem:[#allocation3 + $0x28] sm:$0xff] %vm677, %v1766
      %1776 = vst.msk [vmem:[#allocation3 + $0x38] sm:$0xff] %vm677, %v1768
      %v1777 = vld [vmem:[#allocation3] sm:$0xff]
      %v1778 = vld [vmem:[#allocation3 + $0x8] sm:$0xff]
      %v1779 = vld [vmem:[#allocation3 + $0x10] sm:$0xff]
      %v1780 = vld [vmem:[#allocation3 + $0x18] sm:$0xff]
      %v1781 = vld [vmem:[#allocation3 + $0x20] sm:$0xff]
      %v1782 = vld [vmem:[#allocation3 + $0x28] sm:$0xff]
      %v1783 = vld [vmem:[#allocation3 + $0x30] sm:$0xff]
      %v1784 = vld [vmem:[#allocation3 + $0x38] sm:$0xff]
      %v1785 = vld [vmem:[#allocation2] sm:$0xff]
      %v1786 = vld [vmem:[#allocation2 + $0x8] sm:$0xff]
      %v1787 = vld [vmem:[#allocation2 + $0x10] sm:$0xff]
      %v1788 = vld [vmem:[#allocation2 + $0x18] sm:$0xff]
      %v1789 = vld [vmem:[#allocation2 + $0x20] sm:$0xff]
      %v1790 = vld [vmem:[#allocation2 + $0x28] sm:$0xff]
      %v1791 = vld [vmem:[#allocation2 + $0x30] sm:$0xff]
      %v1792 = vld [vmem:[#allocation2 + $0x38] sm:$0xff]
      %1801 = vrot.lane.b32.xlu0 %v1785, 111
      %v1802 = vpop.permute.xlu0 %1801
      %1803 = vrot.lane.b32.xlu0 %v1786, 111
      %v1804 = vpop.permute.xlu0 %1803
      %1805 = vrot.lane.b32.xlu0 %v1787, 111
      %v1806 = vpop.permute.xlu0 %1805
      %1807 = vrot.lane.b32.xlu0 %v1788, 111
      %v1808 = vpop.permute.xlu0 %1807
      %1809 = vrot.lane.b32.xlu0 %v1789, 111
      %v1810 = vpop.permute.xlu0 %1809
      %1811 = vrot.lane.b32.xlu0 %v1790, 111
      %v1812 = vpop.permute.xlu0 %1811
      %1813 = vrot.lane.b32.xlu0 %v1791, 111
      %v1814 = vpop.permute.xlu0 %1813
      %1815 = vrot.lane.b32.xlu0 %v1792, 111
      %v1816 = vpop.permute.xlu0 %1815
      %v1817 = vsel %vm689, %v1802, %v1804
      %v1818 = vsel %vm689, %v1806, %v1808
      %v1819 = vsel %vm689, %v1810, %v1812
      %v1820 = vsel %vm689, %v1814, %v1816
      %1829 = vst [vmem:[#allocation3] sm:$0xff] %v1817
      %1830 = vst.msk [vmem:[#allocation3 + $0x8] sm:$0xff] %vm689, %v1804
      %1831 = vst [vmem:[#allocation3 + $0x10] sm:$0xff] %v1818
      %1832 = vst.msk [vmem:[#allocation3 + $0x18] sm:$0xff] %vm689, %v1808
      %1833 = vst [vmem:[#allocation3 + $0x20] sm:$0xff] %v1819
      %1834 = vst.msk [vmem:[#allocation3 + $0x28] sm:$0xff] %vm689, %v1812
      %1835 = vst [vmem:[#allocation3 + $0x30] sm:$0xff] %v1820
      %1836 = vst.msk [vmem:[#allocation3 + $0x38] sm:$0xff] %vm689, %v1816
      %v1837 = vld [vmem:[#allocation2] sm:$0xff]
      %v1838 = vld [vmem:[#allocation2 + $0x10] sm:$0xff]
      %v1839 = vld [vmem:[#allocation2 + $0x20] sm:$0xff]
      %v1840 = vld [vmem:[#allocation2 + $0x30] sm:$0xff]
      %1845 = vrot.lane.b32.xlu0 %v1837, 111
      %v1846 = vpop.permute.xlu0 %1845
      %1847 = vrot.lane.b32.xlu0 %v1838, 111
      %v1848 = vpop.permute.xlu0 %1847
      %1849 = vrot.lane.b32.xlu0 %v1839, 111
      %v1850 = vpop.permute.xlu0 %1849
      %1851 = vrot.lane.b32.xlu0 %v1840, 111
      %v1852 = vpop.permute.xlu0 %1851
      %1857 = vst.msk [vmem:[#allocation3 + $0x8] sm:$0xff] %vm700, %v1846
      %1858 = vst.msk [vmem:[#allocation3 + $0x18] sm:$0xff] %vm700, %v1848
      %1859 = vst.msk [vmem:[#allocation3 + $0x28] sm:$0xff] %vm700, %v1850
      %1860 = vst.msk [vmem:[#allocation3 + $0x38] sm:$0xff] %vm700, %v1852
      %v1861 = vld [vmem:[#allocation3] sm:$0xff]
      %v1862 = vld [vmem:[#allocation3 + $0x8] sm:$0xff]
      %v1863 = vld [vmem:[#allocation3 + $0x10] sm:$0xff]
      %v1864 = vld [vmem:[#allocation3 + $0x18] sm:$0xff]
      %v1865 = vld [vmem:[#allocation3 + $0x20] sm:$0xff]
      %v1866 = vld [vmem:[#allocation3 + $0x28] sm:$0xff]
      %v1867 = vld [vmem:[#allocation3 + $0x30] sm:$0xff]
      %v1868 = vld [vmem:[#allocation3 + $0x38] sm:$0xff]
      %v1869 = vld [vmem:[#allocation2] sm:$0xff]
      %v1870 = vld [vmem:[#allocation2 + $0x8] sm:$0xff]
      %v1871 = vld [vmem:[#allocation2 + $0x10] sm:$0xff]
      %v1872 = vld [vmem:[#allocation2 + $0x18] sm:$0xff]
      %v1873 = vld [vmem:[#allocation2 + $0x20] sm:$0xff]
      %v1874 = vld [vmem:[#allocation2 + $0x28] sm:$0xff]
      %v1875 = vld [vmem:[#allocation2 + $0x30] sm:$0xff]
      %v1876 = vld [vmem:[#allocation2 + $0x38] sm:$0xff]
      %1885 = vrot.lane.b32.xlu0 %v1869, 127
      %v1886 = vpop.permute.xlu0 %1885
      %1887 = vrot.lane.b32.xlu0 %v1870, 127
      %v1888 = vpop.permute.xlu0 %1887
      %1889 = vrot.lane.b32.xlu0 %v1871, 127
      %v1890 = vpop.permute.xlu0 %1889
      %1891 = vrot.lane.b32.xlu0 %v1872, 127
      %v1892 = vpop.permute.xlu0 %1891
      %1893 = vrot.lane.b32.xlu0 %v1873, 127
      %v1894 = vpop.permute.xlu0 %1893
      %1895 = vrot.lane.b32.xlu0 %v1874, 127
      %v1896 = vpop.permute.xlu0 %1895
      %1897 = vrot.lane.b32.xlu0 %v1875, 127
      %v1898 = vpop.permute.xlu0 %1897
      %1899 = vrot.lane.b32.xlu0 %v1876, 127
      %v1900 = vpop.permute.xlu0 %1899
      %v1901 = vsel %vm574, %v1886, %v1888
      %v1902 = vsel %vm574, %v1890, %v1892
      %v1903 = vsel %vm574, %v1894, %v1896
      %v1904 = vsel %vm574, %v1898, %v1900
      %1913 = vst [vmem:[#allocation4] sm:$0xff] %v1901
      %1914 = vst.msk [vmem:[#allocation4 + $0x8] sm:$0xff] %vm574, %v1888
      %1915 = vst [vmem:[#allocation4 + $0x10] sm:$0xff] %v1902
      %1916 = vst.msk [vmem:[#allocation4 + $0x18] sm:$0xff] %vm574, %v1892
      %1917 = vst [vmem:[#allocation4 + $0x20] sm:$0xff] %v1903
      %1918 = vst.msk [vmem:[#allocation4 + $0x28] sm:$0xff] %vm574, %v1896
      %1919 = vst [vmem:[#allocation4 + $0x30] sm:$0xff] %v1904
      %1920 = vst.msk [vmem:[#allocation4 + $0x38] sm:$0xff] %vm574, %v1900
      %v1921 = vld [vmem:[#allocation2] sm:$0xff]
      %v1922 = vld [vmem:[#allocation2 + $0x10] sm:$0xff]
      %v1923 = vld [vmem:[#allocation2 + $0x20] sm:$0xff]
      %v1924 = vld [vmem:[#allocation2 + $0x30] sm:$0xff]
      %1929 = vrot.lane.b32.xlu0 %v1921, 127
      %v1930 = vpop.permute.xlu0 %1929
      %1931 = vrot.lane.b32.xlu0 %v1922, 127
      %v1932 = vpop.permute.xlu0 %1931
      %1933 = vrot.lane.b32.xlu0 %v1923, 127
      %v1934 = vpop.permute.xlu0 %1933
      %1935 = vrot.lane.b32.xlu0 %v1924, 127
      %v1936 = vpop.permute.xlu0 %1935
      %1941 = vst.msk [vmem:[#allocation4 + $0x8] sm:$0xff] %vm585, %v1930
      %1942 = vst.msk [vmem:[#allocation4 + $0x18] sm:$0xff] %vm585, %v1932
      %1943 = vst.msk [vmem:[#allocation4 + $0x28] sm:$0xff] %vm585, %v1934
      %1944 = vst.msk [vmem:[#allocation4 + $0x38] sm:$0xff] %vm585, %v1936
      %v1945 = vld [vmem:[#allocation4] sm:$0xff]
      %v1946 = vld [vmem:[#allocation4 + $0x8] sm:$0xff]
      %v1947 = vld [vmem:[#allocation4 + $0x10] sm:$0xff]
      %v1948 = vld [vmem:[#allocation4 + $0x18] sm:$0xff]
      %v1949 = vld [vmem:[#allocation4 + $0x20] sm:$0xff]
      %v1950 = vld [vmem:[#allocation4 + $0x28] sm:$0xff]
      %v1951 = vld [vmem:[#allocation4 + $0x30] sm:$0xff]
      %v1952 = vld [vmem:[#allocation4 + $0x38] sm:$0xff]
      %v1953 = vsel %vm516, %v1945, %v1861
      %v1954 = vsel %vm517, %v1946, %v1862
      %v1955 = vsel %vm516, %v1947, %v1863
      %v1956 = vsel %vm517, %v1948, %v1864
      %v1957 = vsel %vm516, %v1949, %v1865
      %v1958 = vsel %vm517, %v1950, %v1866
      %v1959 = vsel %vm516, %v1951, %v1867
      %v1960 = vsel %vm517, %v1952, %v1868
      %v1961 = vpack.c.bf16 %v907, %v905
      %v1962 = vpack.c.bf16 %v908, %v906
      %v1963 = vpack.c.bf16 %v911, %v909
      %v1964 = vpack.c.bf16 %v912, %v910
      %v1965 = vpack.c.bf16 %v991, %v989
      %v1966 = vpack.c.bf16 %v992, %v990
      %v1967 = vpack.c.bf16 %v995, %v993
      %v1968 = vpack.c.bf16 %v996, %v994
      %v1969 = vpack.c.bf16 %v1167, %v1165
      %v1970 = vpack.c.bf16 %v1168, %v1166
      %v1971 = vpack.c.bf16 %v1171, %v1169
      %v1972 = vpack.c.bf16 %v1172, %v1170
      %v1973 = vpack.c.bf16 %v1343, %v1341
      %v1974 = vpack.c.bf16 %v1344, %v1342
      %v1975 = vpack.c.bf16 %v1347, %v1345
      %v1976 = vpack.c.bf16 %v1348, %v1346
      %v1977 = vpack.c.bf16 %v1351, %v1349
      %v1978 = vpack.c.bf16 %v1352, %v1350
      %v1979 = vpack.c.bf16 %v1355, %v1353
      %v1980 = vpack.c.bf16 %v1356, %v1354
      %v1981 = vpack.c.bf16 %v1519, %v1517
      %v1982 = vpack.c.bf16 %v1520, %v1518
      %v1983 = vpack.c.bf16 %v1523, %v1521
      %v1984 = vpack.c.bf16 %v1524, %v1522
      %v1985 = vpack.c.bf16 %v1695, %v1693
      %v1986 = vpack.c.bf16 %v1696, %v1694
      %v1987 = vpack.c.bf16 %v1699, %v1697
      %v1988 = vpack.c.bf16 %v1700, %v1698
      %v1989 = vpack.c.bf16 %v1779, %v1777
      %v1990 = vpack.c.bf16 %v1780, %v1778
      %v1991 = vpack.c.bf16 %v1783, %v1781
      %v1992 = vpack.c.bf16 %v1784, %v1782
      %v1993 = vpack.c.bf16 %v1955, %v1953
      %v1994 = vpack.c.bf16 %v1956, %v1954
      %v1995 = vpack.c.bf16 %v1959, %v1957
      %v1996 = vpack.c.bf16 %v1960, %v1958
      %v1997 = vld [vmem:[%s3] sm:$0xf]
      %v1998 = vld [vmem:[%s3 + $0x4] sm:$0xf]
      %v1999 = vld [vmem:[%s3 + $0x8] sm:$0xf]
      %v2000 = vld [vmem:[%s3 + $0xc] sm:$0xf]
      %v2001 = vld [vmem:[%s3 + $0x10] sm:$0xf]
      %v2002 = vld [vmem:[%s3 + $0x14] sm:$0xf]
      %v2003 = vld [vmem:[%s3 + $0x18] sm:$0xf]
      %v2004 = vld [vmem:[%s3 + $0x1c] sm:$0xf]
      %v2005 = vld [vmem:[%s3 + $0x20] sm:$0xf]
      %v2006 = vld [vmem:[%s3 + $0x24] sm:$0xf]
      %v2007 = vld [vmem:[%s3 + $0x28] sm:$0xf]
      %v2008 = vld [vmem:[%s3 + $0x2c] sm:$0xf]
      %v2009 = vld [vmem:[%s3 + $0x30] sm:$0xf]
      %v2010 = vld [vmem:[%s3 + $0x34] sm:$0xf]
      %v2011 = vld [vmem:[%s3 + $0x38] sm:$0xf]
      %v2012 = vld [vmem:[%s3 + $0x3c] sm:$0xf]
      %v2013 = vld [vmem:[%s4] sm:$0xff]
      %v2014 = vld [vmem:[%s4 + $0x8] sm:$0xf]
      %v2015 = vld [vmem:[%s4 + $0xc] sm:$0xff]
      %v2016 = vld [vmem:[%s4 + $0x14] sm:$0xf]
      %v2017 = vld [vmem:[%s4 + $0x18] sm:$0xff]
      %v2018 = vld [vmem:[%s4 + $0x20] sm:$0xf]
      %v2019 = vld [vmem:[%s4 + $0x24] sm:$0xff]
      %v2020 = vld [vmem:[%s4 + $0x2c] sm:$0xf]
      %v2021 = vld [vmem:[%s4 + $0x30] sm:$0xff]
      %v2022 = vld [vmem:[%s4 + $0x38] sm:$0xf]
      %v2023 = vld [vmem:[%s4 + $0x3c] sm:$0xff]
      %v2024 = vld [vmem:[%s4 + $0x44] sm:$0xf]
      %v2025 = vld [vmem:[%s4 + $0x48] sm:$0xff]
      %v2026 = vld [vmem:[%s4 + $0x50] sm:$0xf]
      %v2027 = vld [vmem:[%s4 + $0x54] sm:$0xff]
      %v2028 = vld [vmem:[%s4 + $0x5c] sm:$0xf]
      %v2029 = vld [vmem:[%s4 + $0x60] sm:$0xff]
      %v2030 = vld [vmem:[%s4 + $0x68] sm:$0xf]
      %v2031 = vld [vmem:[%s4 + $0x6c] sm:$0xff]
      %v2032 = vld [vmem:[%s4 + $0x74] sm:$0xf]
      %v2033 = vld [vmem:[%s4 + $0x78] sm:$0xff]
      %v2034 = vld [vmem:[%s4 + $0x80] sm:$0xf]
      %v2035 = vld [vmem:[%s4 + $0x84] sm:$0xff]
      %v2036 = vld [vmem:[%s4 + $0x8c] sm:$0xf]
      %v2037 = vld [vmem:[%s4 + $0x90] sm:$0xff]
      %v2038 = vld [vmem:[%s4 + $0x98] sm:$0xf]
      %v2039 = vld [vmem:[%s4 + $0x9c] sm:$0xff]
      %v2040 = vld [vmem:[%s4 + $0xa4] sm:$0xf]
      %v2041 = vld [vmem:[%s4 + $0xa8] sm:$0xff]
      %v2042 = vld [vmem:[%s4 + $0xb0] sm:$0xf]
      %v2043 = vld [vmem:[%s4 + $0xb4] sm:$0xff]
      %v2044 = vld [vmem:[%s4 + $0xbc] sm:$0xf]
      %v2077 = vunpack.c.l.b16 %v2013
      %v2078 = vunpack.c.h.b16 %v2013
      %v2079 = vunpack.c.l.b16 %v2014
      %v2080 = vunpack.c.l.b16 %v2015
      %v2081 = vunpack.c.h.b16 %v2015
      %v2082 = vunpack.c.l.b16 %v2016
      %v2083 = vunpack.c.l.b16 %v2017
      %v2084 = vunpack.c.h.b16 %v2017
      %v2085 = vunpack.c.l.b16 %v2018
      %v2086 = vunpack.c.l.b16 %v2019
      %v2087 = vunpack.c.h.b16 %v2019
      %v2088 = vunpack.c.l.b16 %v2020
      %v2089 = vunpack.c.l.b16 %v2021
      %v2090 = vunpack.c.h.b16 %v2021
      %v2091 = vunpack.c.l.b16 %v2022
      %v2092 = vunpack.c.l.b16 %v2023
      %v2093 = vunpack.c.h.b16 %v2023
      %v2094 = vunpack.c.l.b16 %v2024
      %v2095 = vunpack.c.l.b16 %v2025
      %v2096 = vunpack.c.h.b16 %v2025
      %v2097 = vunpack.c.l.b16 %v2026
      %v2098 = vunpack.c.l.b16 %v2027
      %v2099 = vunpack.c.h.b16 %v2027
      %v2100 = vunpack.c.l.b16 %v2028
      %v2101 = vunpack.c.l.b16 %v2029
      %v2102 = vunpack.c.h.b16 %v2029
      %v2103 = vunpack.c.l.b16 %v2030
      %v2104 = vunpack.c.l.b16 %v2031
      %v2105 = vunpack.c.h.b16 %v2031
      %v2106 = vunpack.c.l.b16 %v2032
      %v2107 = vunpack.c.l.b16 %v2033
      %v2108 = vunpack.c.h.b16 %v2033
      %v2109 = vunpack.c.l.b16 %v2034
      %v2110 = vunpack.c.l.b16 %v2035
      %v2111 = vunpack.c.h.b16 %v2035
      %v2112 = vunpack.c.l.b16 %v2036
      %v2113 = vunpack.c.l.b16 %v2037
      %v2114 = vunpack.c.h.b16 %v2037
      %v2115 = vunpack.c.l.b16 %v2038
      %v2116 = vunpack.c.l.b16 %v2039
      %v2117 = vunpack.c.h.b16 %v2039
      %v2118 = vunpack.c.l.b16 %v2040
      %v2119 = vunpack.c.l.b16 %v2041
      %v2120 = vunpack.c.h.b16 %v2041
      %v2121 = vunpack.c.l.b16 %v2042
      %v2122 = vunpack.c.l.b16 %v2043
      %v2123 = vunpack.c.h.b16 %v2043
      %v2124 = vunpack.c.l.b16 %v2044
      %v2125 = vpack.c.b16 %v2080, %v2077
      %v2126 = vpack.c.b16 %v2081, %v2078
      %v2127 = vpack.c.b16 %v2082, %v2079
      %v2128 = vpack.c.b16 %v2086, %v2083
      %v2129 = vpack.c.b16 %v2087, %v2084
      %v2130 = vpack.c.b16 %v2088, %v2085
      %v2131 = vpack.c.b16 %v2092, %v2089
      %v2132 = vpack.c.b16 %v2093, %v2090
      %v2133 = vpack.c.b16 %v2094, %v2091
      %v2134 = vpack.c.b16 %v2098, %v2095
      %v2135 = vpack.c.b16 %v2099, %v2096
      %v2136 = vpack.c.b16 %v2100, %v2097
      %v2137 = vpack.c.b16 %v2104, %v2101
      %v2138 = vpack.c.b16 %v2105, %v2102
      %v2139 = vpack.c.b16 %v2106, %v2103
      %v2140 = vpack.c.b16 %v2110, %v2107
      %v2141 = vpack.c.b16 %v2111, %v2108
      %v2142 = vpack.c.b16 %v2112, %v2109
      %v2143 = vpack.c.b16 %v2116, %v2113
      %v2144 = vpack.c.b16 %v2117, %v2114
      %v2145 = vpack.c.b16 %v2118, %v2115
      %v2146 = vpack.c.b16 %v2122, %v2119
      %v2147 = vpack.c.b16 %v2123, %v2120
      %v2148 = vpack.c.b16 %v2124, %v2121
      %vm2165 = vcmask 261120
      %v2167 = vsel %vm2165, %v2127, 0
      %v2170 = vsel %vm2165, %v2130, 0
      %v2173 = vsel %vm2165, %v2133, 0
      %v2176 = vsel %vm2165, %v2136, 0
      %v2179 = vsel %vm2165, %v2139, 0
      %v2182 = vsel %vm2165, %v2142, 0
      %v2185 = vsel %vm2165, %v2145, 0
      %v2188 = vsel %vm2165, %v2148, 0
      %2190 = vmatpush.bf16.msra.mxu0 %v1975
      %2191 = vmatpush.bf16.msra.mxu0 %v1973
      %2192 = vmatpush.bf16.msra.mxu0 %v1971
      %2193 = vmatpush.bf16.msra.mxu0 %v1969
      %2194 = vmatpush.bf16.msra.mxu0 %v1967
      %2195 = vmatpush.bf16.msra.mxu0 %v1965
      %2196 = vmatpush.bf16.msra.mxu0 %v1963
      %2197 = vmatpush.bf16.msra.mxu0 %v1961
      %2198 = vmatmul.bf16.gmra.mxu0 %v2125
      %v2199 = vpop.f32.mrf.mxu0
      %v2200 = vadd.f32 0.0, %v2199
      %v2201 = vpop.f32.mrf.mxu0
      %v2202 = vadd.f32 0.0, %v2201
      %2203 = vmatmul.bf16.gmra.mxu0 %v2128
      %v2204 = vpop.f32.mrf.mxu0
      %v2205 = vadd.f32 0.0, %v2204
      %v2206 = vpop.f32.mrf.mxu0
      %v2207 = vadd.f32 0.0, %v2206
      %2208 = vmatmul.bf16.gmra.mxu0 %v2131
      %v2209 = vpop.f32.mrf.mxu0
      %v2210 = vadd.f32 0.0, %v2209
      %v2211 = vpop.f32.mrf.mxu0
      %v2212 = vadd.f32 0.0, %v2211
      %2213 = vmatmul.bf16.gmra.mxu0 %v2134
      %v2214 = vpop.f32.mrf.mxu0
      %v2215 = vadd.f32 0.0, %v2214
      %v2216 = vpop.f32.mrf.mxu0
      %v2217 = vadd.f32 0.0, %v2216
      %2218 = vmatmul.bf16.gmra.mxu0 %v2137
      %v2219 = vpop.f32.mrf.mxu0
      %v2220 = vadd.f32 0.0, %v2219
      %v2221 = vpop.f32.mrf.mxu0
      %v2222 = vadd.f32 0.0, %v2221
      %2223 = vmatmul.bf16.gmra.mxu0 %v2140
      %v2224 = vpop.f32.mrf.mxu0
      %v2225 = vadd.f32 0.0, %v2224
      %v2226 = vpop.f32.mrf.mxu0
      %v2227 = vadd.f32 0.0, %v2226
      %2228 = vmatmul.bf16.gmra.mxu0 %v2143
      %v2229 = vpop.f32.mrf.mxu0
      %v2230 = vadd.f32 0.0, %v2229
      %v2231 = vpop.f32.mrf.mxu0
      %v2232 = vadd.f32 0.0, %v2231
      %2233 = vmatmul.bf16.gmra.mxu0 %v2146
      %v2234 = vpop.f32.mrf.mxu0
      %v2235 = vadd.f32 0.0, %v2234
      %v2236 = vpop.f32.mrf.mxu0
      %v2237 = vadd.f32 0.0, %v2236
      %2238 = vdwg.mxu0
      %2239 = vmatpush.bf16.msra.mxu0 %v1991
      %2240 = vmatpush.bf16.msra.mxu0 %v1989
      %2241 = vmatpush.bf16.msra.mxu0 %v1987
      %2242 = vmatpush.bf16.msra.mxu0 %v1985
      %2243 = vmatpush.bf16.msra.mxu0 %v1983
      %2244 = vmatpush.bf16.msra.mxu0 %v1981
      %2245 = vmatpush.bf16.msra.mxu0 %v1979
      %2246 = vmatpush.bf16.msra.mxu0 %v1977
      %2247 = vmatmul.bf16.gmra.mxu0 %v2126
      %v2248 = vpop.f32.mrf.mxu0
      %v2249 = vadd.f32 %v2200, %v2248
      %v2250 = vpop.f32.mrf.mxu0
      %v2251 = vadd.f32 %v2202, %v2250
      %2252 = vmatmul.bf16.gmra.mxu0 %v2129
      %v2253 = vpop.f32.mrf.mxu0
      %v2254 = vadd.f32 %v2205, %v2253
      %v2255 = vpop.f32.mrf.mxu0
      %v2256 = vadd.f32 %v2207, %v2255
      %2257 = vmatmul.bf16.gmra.mxu0 %v2132
      %v2258 = vpop.f32.mrf.mxu0
      %v2259 = vadd.f32 %v2210, %v2258
      %v2260 = vpop.f32.mrf.mxu0
      %v2261 = vadd.f32 %v2212, %v2260
      %2262 = vmatmul.bf16.gmra.mxu0 %v2135
      %v2263 = vpop.f32.mrf.mxu0
      %v2264 = vadd.f32 %v2215, %v2263
      %v2265 = vpop.f32.mrf.mxu0
      %v2266 = vadd.f32 %v2217, %v2265
      %2267 = vmatmul.bf16.gmra.mxu0 %v2138
      %v2268 = vpop.f32.mrf.mxu0
      %v2269 = vadd.f32 %v2220, %v2268
      %v2270 = vpop.f32.mrf.mxu0
      %v2271 = vadd.f32 %v2222, %v2270
      %2272 = vmatmul.bf16.gmra.mxu0 %v2141
      %v2273 = vpop.f32.mrf.mxu0
      %v2274 = vadd.f32 %v2225, %v2273
      %v2275 = vpop.f32.mrf.mxu0
      %v2276 = vadd.f32 %v2227, %v2275
      %2277 = vmatmul.bf16.gmra.mxu0 %v2144
      %v2278 = vpop.f32.mrf.mxu0
      %v2279 = vadd.f32 %v2230, %v2278
      %v2280 = vpop.f32.mrf.mxu0
      %v2281 = vadd.f32 %v2232, %v2280
      %2282 = vmatmul.bf16.gmra.mxu0 %v2147
      %v2283 = vpop.f32.mrf.mxu0
      %v2284 = vadd.f32 %v2235, %v2283
      %v2285 = vpop.f32.mrf.mxu0
      %v2286 = vadd.f32 %v2237, %v2285
      %2287 = vdwg.mxu0
      %2288 = vmatpush.bf16.msra.mxu0 0
      %2289 = vmatpush.bf16.msra.mxu0 0
      %2290 = vmatpush.bf16.msra.mxu0 0
      %2291 = vmatpush.bf16.msra.mxu0 0
      %2292 = vmatpush.bf16.msra.mxu0 0
      %2293 = vmatpush.bf16.msra.mxu0 0
      %2294 = vmatpush.bf16.msra.mxu0 %v1995
      %2295 = vmatpush.bf16.msra.mxu0 %v1993
      %2296 = vmatmul.bf16.gmra.mxu0 %v2167
      %v2297 = vpop.f32.mrf.mxu0
      %v2298 = vadd.f32 %v2249, %v2297
      %v2299 = vpop.f32.mrf.mxu0
      %v2300 = vadd.f32 %v2251, %v2299
      %2301 = vmatmul.bf16.gmra.mxu0 %v2170
      %v2302 = vpop.f32.mrf.mxu0
      %v2303 = vadd.f32 %v2254, %v2302
      %v2304 = vpop.f32.mrf.mxu0
      %v2305 = vadd.f32 %v2256, %v2304
      %2306 = vmatmul.bf16.gmra.mxu0 %v2173
      %v2307 = vpop.f32.mrf.mxu0
      %v2308 = vadd.f32 %v2259, %v2307
      %v2309 = vpop.f32.mrf.mxu0
      %v2310 = vadd.f32 %v2261, %v2309
      %2311 = vmatmul.bf16.gmra.mxu0 %v2176
      %v2312 = vpop.f32.mrf.mxu0
      %v2313 = vadd.f32 %v2264, %v2312
      %v2314 = vpop.f32.mrf.mxu0
      %v2315 = vadd.f32 %v2266, %v2314
      %2316 = vmatmul.bf16.gmra.mxu0 %v2179
      %v2317 = vpop.f32.mrf.mxu0
      %v2318 = vadd.f32 %v2269, %v2317
      %v2319 = vpop.f32.mrf.mxu0
      %v2320 = vadd.f32 %v2271, %v2319
      %2321 = vmatmul.bf16.gmra.mxu0 %v2182
      %v2322 = vpop.f32.mrf.mxu0
      %v2323 = vadd.f32 %v2274, %v2322
      %v2324 = vpop.f32.mrf.mxu0
      %v2325 = vadd.f32 %v2276, %v2324
      %2326 = vmatmul.bf16.gmra.mxu0 %v2185
      %v2327 = vpop.f32.mrf.mxu0
      %v2328 = vadd.f32 %v2279, %v2327
      %v2329 = vpop.f32.mrf.mxu0
      %v2330 = vadd.f32 %v2281, %v2329
      %2331 = vmatmul.bf16.gmra.mxu0 %v2188
      %v2332 = vpop.f32.mrf.mxu0
      %v2333 = vadd.f32 %v2284, %v2332
      %v2334 = vpop.f32.mrf.mxu0
      %v2335 = vadd.f32 %v2286, %v2334
      %2336 = vdwg.mxu0
      %2337 = vmatpush.bf16.msra.mxu0 %v1976
      %2338 = vmatpush.bf16.msra.mxu0 %v1974
      %2339 = vmatpush.bf16.msra.mxu0 %v1972
      %2340 = vmatpush.bf16.msra.mxu0 %v1970
      %2341 = vmatpush.bf16.msra.mxu0 %v1968
      %2342 = vmatpush.bf16.msra.mxu0 %v1966
      %2343 = vmatpush.bf16.msra.mxu0 %v1964
      %2344 = vmatpush.bf16.msra.mxu0 %v1962
      %2345 = vmatmul.bf16.gmra.mxu0 %v2125
      %v2346 = vpop.f32.mrf.mxu0
      %v2347 = vadd.f32 0.0, %v2346
      %v2348 = vpop.f32.mrf.mxu0
      %v2349 = vadd.f32 0.0, %v2348
      %2350 = vmatmul.bf16.gmra.mxu0 %v2128
      %v2351 = vpop.f32.mrf.mxu0
      %v2352 = vadd.f32 0.0, %v2351
      %v2353 = vpop.f32.mrf.mxu0
      %v2354 = vadd.f32 0.0, %v2353
      %2355 = vmatmul.bf16.gmra.mxu0 %v2131
      %v2356 = vpop.f32.mrf.mxu0
      %v2357 = vadd.f32 0.0, %v2356
      %v2358 = vpop.f32.mrf.mxu0
      %v2359 = vadd.f32 0.0, %v2358
      %2360 = vmatmul.bf16.gmra.mxu0 %v2134
      %v2361 = vpop.f32.mrf.mxu0
      %v2362 = vadd.f32 0.0, %v2361
      %v2363 = vpop.f32.mrf.mxu0
      %v2364 = vadd.f32 0.0, %v2363
      %2365 = vmatmul.bf16.gmra.mxu0 %v2137
      %v2366 = vpop.f32.mrf.mxu0
      %v2367 = vadd.f32 0.0, %v2366
      %v2368 = vpop.f32.mrf.mxu0
      %v2369 = vadd.f32 0.0, %v2368
      %2370 = vmatmul.bf16.gmra.mxu0 %v2140
      %v2371 = vpop.f32.mrf.mxu0
      %v2372 = vadd.f32 0.0, %v2371
      %v2373 = vpop.f32.mrf.mxu0
      %v2374 = vadd.f32 0.0, %v2373
      %2375 = vmatmul.bf16.gmra.mxu0 %v2143
      %v2376 = vpop.f32.mrf.mxu0
      %v2377 = vadd.f32 0.0, %v2376
      %v2378 = vpop.f32.mrf.mxu0
      %v2379 = vadd.f32 0.0, %v2378
      %2380 = vmatmul.bf16.gmra.mxu0 %v2146
      %v2381 = vpop.f32.mrf.mxu0
      %v2382 = vadd.f32 0.0, %v2381
      %v2383 = vpop.f32.mrf.mxu0
      %v2384 = vadd.f32 0.0, %v2383
      %2385 = vdwg.mxu0
      %2386 = vmatpush.bf16.msra.mxu0 %v1992
      %2387 = vmatpush.bf16.msra.mxu0 %v1990
      %2388 = vmatpush.bf16.msra.mxu0 %v1988
      %2389 = vmatpush.bf16.msra.mxu0 %v1986
      %2390 = vmatpush.bf16.msra.mxu0 %v1984
      %2391 = vmatpush.bf16.msra.mxu0 %v1982
      %2392 = vmatpush.bf16.msra.mxu0 %v1980
      %2393 = vmatpush.bf16.msra.mxu0 %v1978
      %2394 = vmatmul.bf16.gmra.mxu0 %v2126
      %v2395 = vpop.f32.mrf.mxu0
      %v2396 = vadd.f32 %v2347, %v2395
      %v2397 = vpop.f32.mrf.mxu0
      %v2398 = vadd.f32 %v2349, %v2397
      %2399 = vmatmul.bf16.gmra.mxu0 %v2129
      %v2400 = vpop.f32.mrf.mxu0
      %v2401 = vadd.f32 %v2352, %v2400
      %v2402 = vpop.f32.mrf.mxu0
      %v2403 = vadd.f32 %v2354, %v2402
      %2404 = vmatmul.bf16.gmra.mxu0 %v2132
      %v2405 = vpop.f32.mrf.mxu0
      %v2406 = vadd.f32 %v2357, %v2405
      %v2407 = vpop.f32.mrf.mxu0
      %v2408 = vadd.f32 %v2359, %v2407
      %2409 = vmatmul.bf16.gmra.mxu0 %v2135
      %v2410 = vpop.f32.mrf.mxu0
      %v2411 = vadd.f32 %v2362, %v2410
      %v2412 = vpop.f32.mrf.mxu0
      %v2413 = vadd.f32 %v2364, %v2412
      %2414 = vmatmul.bf16.gmra.mxu0 %v2138
      %v2415 = vpop.f32.mrf.mxu0
      %v2416 = vadd.f32 %v2367, %v2415
      %v2417 = vpop.f32.mrf.mxu0
      %v2418 = vadd.f32 %v2369, %v2417
      %2419 = vmatmul.bf16.gmra.mxu0 %v2141
      %v2420 = vpop.f32.mrf.mxu0
      %v2421 = vadd.f32 %v2372, %v2420
      %v2422 = vpop.f32.mrf.mxu0
      %v2423 = vadd.f32 %v2374, %v2422
      %2424 = vmatmul.bf16.gmra.mxu0 %v2144
      %v2425 = vpop.f32.mrf.mxu0
      %v2426 = vadd.f32 %v2377, %v2425
      %v2427 = vpop.f32.mrf.mxu0
      %v2428 = vadd.f32 %v2379, %v2427
      %2429 = vmatmul.bf16.gmra.mxu0 %v2147
      %v2430 = vpop.f32.mrf.mxu0
      %v2431 = vadd.f32 %v2382, %v2430
      %v2432 = vpop.f32.mrf.mxu0
      %v2433 = vadd.f32 %v2384, %v2432
      %2434 = vdwg.mxu0
      %2435 = vmatpush.bf16.msra.mxu0 0
      %2436 = vmatpush.bf16.msra.mxu0 0
      %2437 = vmatpush.bf16.msra.mxu0 0
      %2438 = vmatpush.bf16.msra.mxu0 0
      %2439 = vmatpush.bf16.msra.mxu0 0
      %2440 = vmatpush.bf16.msra.mxu0 0
      %2441 = vmatpush.bf16.msra.mxu0 %v1996
      %2442 = vmatpush.bf16.msra.mxu0 %v1994
      %2443 = vmatmul.bf16.gmra.mxu0 %v2167
      %v2444 = vpop.f32.mrf.mxu0
      %v2445 = vadd.f32 %v2396, %v2444
      %v2446 = vpop.f32.mrf.mxu0
      %v2447 = vadd.f32 %v2398, %v2446
      %2448 = vmatmul.bf16.gmra.mxu0 %v2170
      %v2449 = vpop.f32.mrf.mxu0
      %v2450 = vadd.f32 %v2401, %v2449
      %v2451 = vpop.f32.mrf.mxu0
      %v2452 = vadd.f32 %v2403, %v2451
      %2453 = vmatmul.bf16.gmra.mxu0 %v2173
      %v2454 = vpop.f32.mrf.mxu0
      %v2455 = vadd.f32 %v2406, %v2454
      %v2456 = vpop.f32.mrf.mxu0
      %v2457 = vadd.f32 %v2408, %v2456
      %2458 = vmatmul.bf16.gmra.mxu0 %v2176
      %v2459 = vpop.f32.mrf.mxu0
      %v2460 = vadd.f32 %v2411, %v2459
      %v2461 = vpop.f32.mrf.mxu0
      %v2462 = vadd.f32 %v2413, %v2461
      %2463 = vmatmul.bf16.gmra.mxu0 %v2179
      %v2464 = vpop.f32.mrf.mxu0
      %v2465 = vadd.f32 %v2416, %v2464
      %v2466 = vpop.f32.mrf.mxu0
      %v2467 = vadd.f32 %v2418, %v2466
      %2468 = vmatmul.bf16.gmra.mxu0 %v2182
      %v2469 = vpop.f32.mrf.mxu0
      %v2470 = vadd.f32 %v2421, %v2469
      %v2471 = vpop.f32.mrf.mxu0
      %v2472 = vadd.f32 %v2423, %v2471
      %2473 = vmatmul.bf16.gmra.mxu0 %v2185
      %v2474 = vpop.f32.mrf.mxu0
      %v2475 = vadd.f32 %v2426, %v2474
      %v2476 = vpop.f32.mrf.mxu0
      %v2477 = vadd.f32 %v2428, %v2476
      %2478 = vmatmul.bf16.gmra.mxu0 %v2188
      %v2479 = vpop.f32.mrf.mxu0
      %v2480 = vadd.f32 %v2431, %v2479
      %v2481 = vpop.f32.mrf.mxu0
      %v2482 = vadd.f32 %v2433, %v2481
      %2483 = vdwg.mxu0
      %v2500 = vunpack.c.l.b16 %v1997
      %v2501 = vunpack.c.l.b16 %v1998
      %v2502 = vunpack.c.l.b16 %v1999
      %v2503 = vunpack.c.l.b16 %v2000
      %v2504 = vunpack.c.l.b16 %v2001
      %v2505 = vunpack.c.l.b16 %v2002
      %v2506 = vunpack.c.l.b16 %v2003
      %v2507 = vunpack.c.l.b16 %v2004
      %v2508 = vunpack.c.l.b16 %v2005
      %v2509 = vunpack.c.l.b16 %v2006
      %v2510 = vunpack.c.l.b16 %v2007
      %v2511 = vunpack.c.l.b16 %v2008
      %v2512 = vunpack.c.l.b16 %v2009
      %v2513 = vunpack.c.l.b16 %v2010
      %v2514 = vunpack.c.l.b16 %v2011
      %v2515 = vunpack.c.l.b16 %v2012
      %v2516 = vpack.c.b16 %v2501, %v2500
      %v2517 = vpack.c.b16 %v2503, %v2502
      %v2518 = vpack.c.b16 %v2505, %v2504
      %v2519 = vpack.c.b16 %v2507, %v2506
      %v2520 = vpack.c.b16 %v2509, %v2508
      %v2521 = vpack.c.b16 %v2511, %v2510
      %v2522 = vpack.c.b16 %v2513, %v2512
      %v2523 = vpack.c.b16 %v2515, %v2514
      %vm2524 = vcmask 588800
      %v2526 = vsel %vm2524, %v2516, 0
      %v2529 = vsel %vm2524, %v2517, 0
      %v2532 = vsel %vm2524, %v2518, 0
      %v2535 = vsel %vm2524, %v2519, 0
      %v2538 = vsel %vm2524, %v2520, 0
      %v2541 = vsel %vm2524, %v2521, 0
      %v2544 = vsel %vm2524, %v2522, 0
      %v2547 = vsel %vm2524, %v2523, 0
      %vm2549 = vcmask 1043456
      %v2551 = vsel %vm2549, %v735, 0
      %v2554 = vsel %vm2549, %v736, 0
      %2556 = vmatpush.bf16.msra.mxu0 0
      %2557 = vmatpush.bf16.msra.mxu0 0
      %2558 = vmatpush.bf16.msra.mxu0 0
      %2559 = vmatpush.bf16.msra.mxu0 %v2551
      %2560 = vmatpush.bf16.msra.mxu0 %v733
      %2561 = vmatpush.bf16.msra.mxu0 %v731
      %2562 = vmatpush.bf16.msra.mxu0 %v729
      %2563 = vmatpush.bf16.msra.mxu0 %v727
      %2564 = vmatmul.bf16.gmra.mxu0 %v2526
      %v2565 = vpop.f32.mrf.mxu0
      %v2566 = vadd.f32 %v2298, %v2565
      %v2567 = vpop.f32.mrf.mxu0
      %v2568 = vadd.f32 %v2300, %v2567
      %2569 = vmatmul.bf16.gmra.mxu0 %v2529
      %v2570 = vpop.f32.mrf.mxu0
      %v2571 = vadd.f32 %v2303, %v2570
      %v2572 = vpop.f32.mrf.mxu0
      %v2573 = vadd.f32 %v2305, %v2572
      %2574 = vmatmul.bf16.gmra.mxu0 %v2532
      %v2575 = vpop.f32.mrf.mxu0
      %v2576 = vadd.f32 %v2308, %v2575
      %v2577 = vpop.f32.mrf.mxu0
      %v2578 = vadd.f32 %v2310, %v2577
      %2579 = vmatmul.bf16.gmra.mxu0 %v2535
      %v2580 = vpop.f32.mrf.mxu0
      %v2581 = vadd.f32 %v2313, %v2580
      %v2582 = vpop.f32.mrf.mxu0
      %v2583 = vadd.f32 %v2315, %v2582
      %2584 = vmatmul.bf16.gmra.mxu0 %v2538
      %v2585 = vpop.f32.mrf.mxu0
      %v2586 = vadd.f32 %v2318, %v2585
      %v2587 = vpop.f32.mrf.mxu0
      %v2588 = vadd.f32 %v2320, %v2587
      %2589 = vmatmul.bf16.gmra.mxu0 %v2541
      %v2590 = vpop.f32.mrf.mxu0
      %v2591 = vadd.f32 %v2323, %v2590
      %v2592 = vpop.f32.mrf.mxu0
      %v2593 = vadd.f32 %v2325, %v2592
      %2594 = vmatmul.bf16.gmra.mxu0 %v2544
      %v2595 = vpop.f32.mrf.mxu0
      %v2596 = vadd.f32 %v2328, %v2595
      %v2597 = vpop.f32.mrf.mxu0
      %v2598 = vadd.f32 %v2330, %v2597
      %2599 = vmatmul.bf16.gmra.mxu0 %v2547
      %v2600 = vpop.f32.mrf.mxu0
      %v2601 = vadd.f32 %v2333, %v2600
      %v2602 = vpop.f32.mrf.mxu0
      %v2603 = vadd.f32 %v2335, %v2602
      %2604 = vdwg.mxu0
      %2605 = vmatpush.bf16.msra.mxu0 0
      %2606 = vmatpush.bf16.msra.mxu0 0
      %2607 = vmatpush.bf16.msra.mxu0 0
      %2608 = vmatpush.bf16.msra.mxu0 %v2554
      %2609 = vmatpush.bf16.msra.mxu0 %v734
      %2610 = vmatpush.bf16.msra.mxu0 %v732
      %2611 = vmatpush.bf16.msra.mxu0 %v730
      %2612 = vmatpush.bf16.msra.mxu0 %v728
      %2613 = vmatmul.bf16.gmra.mxu0 %v2526
      %v2614 = vpop.f32.mrf.mxu0
      %v2615 = vadd.f32 %v2445, %v2614
      %v2616 = vpop.f32.mrf.mxu0
      %v2617 = vadd.f32 %v2447, %v2616
      %2618 = vmatmul.bf16.gmra.mxu0 %v2529
      %v2619 = vpop.f32.mrf.mxu0
      %v2620 = vadd.f32 %v2450, %v2619
      %v2621 = vpop.f32.mrf.mxu0
      %v2622 = vadd.f32 %v2452, %v2621
      %2623 = vmatmul.bf16.gmra.mxu0 %v2532
      %v2624 = vpop.f32.mrf.mxu0
      %v2625 = vadd.f32 %v2455, %v2624
      %v2626 = vpop.f32.mrf.mxu0
      %v2627 = vadd.f32 %v2457, %v2626
      %2628 = vmatmul.bf16.gmra.mxu0 %v2535
      %v2629 = vpop.f32.mrf.mxu0
      %v2630 = vadd.f32 %v2460, %v2629
      %v2631 = vpop.f32.mrf.mxu0
      %v2632 = vadd.f32 %v2462, %v2631
      %2633 = vmatmul.bf16.gmra.mxu0 %v2538
      %v2634 = vpop.f32.mrf.mxu0
      %v2635 = vadd.f32 %v2465, %v2634
      %v2636 = vpop.f32.mrf.mxu0
      %v2637 = vadd.f32 %v2467, %v2636
      %2638 = vmatmul.bf16.gmra.mxu0 %v2541
      %v2639 = vpop.f32.mrf.mxu0
      %v2640 = vadd.f32 %v2470, %v2639
      %v2641 = vpop.f32.mrf.mxu0
      %v2642 = vadd.f32 %v2472, %v2641
      %2643 = vmatmul.bf16.gmra.mxu0 %v2544
      %v2644 = vpop.f32.mrf.mxu0
      %v2645 = vadd.f32 %v2475, %v2644
      %v2646 = vpop.f32.mrf.mxu0
      %v2647 = vadd.f32 %v2477, %v2646
      %2648 = vmatmul.bf16.gmra.mxu0 %v2547
      %v2649 = vpop.f32.mrf.mxu0
      %v2650 = vadd.f32 %v2480, %v2649
      %v2651 = vpop.f32.mrf.mxu0
      %v2652 = vadd.f32 %v2482, %v2651
      %2653 = vdwg.mxu0
      %v2654 = vld [vmem:[%s5] sm:$0xff]
      %v2655 = vld [vmem:[%s5 + $0x8] sm:$0xff]
      %v2656 = vld [vmem:[%s5 + $0x10] sm:$0xff]
      %v2657 = vld [vmem:[%s5 + $0x18] sm:$0xff]
      %v2658 = vld [vmem:[%s5 + $0x20] sm:$0xff]
      %v2659 = vld [vmem:[%s5 + $0x28] sm:$0xff]
      %v2660 = vld [vmem:[%s5 + $0x30] sm:$0xff]
      %v2661 = vld [vmem:[%s5 + $0x38] sm:$0xff]
      %v2662 = vld [vmem:[%s5 + $0x40] sm:$0xff]
      %v2663 = vld [vmem:[%s5 + $0x48] sm:$0xff]
      %v2664 = vld [vmem:[%s5 + $0x50] sm:$0xff]
      %v2665 = vld [vmem:[%s5 + $0x58] sm:$0xff]
      %v2666 = vld [vmem:[%s5 + $0x60] sm:$0xff]
      %v2667 = vld [vmem:[%s5 + $0x68] sm:$0xff]
      %v2668 = vld [vmem:[%s5 + $0x70] sm:$0xff]
      %v2669 = vld [vmem:[%s5 + $0x78] sm:$0xff]
      %2671 = vset.pattern.permute.xlu0 0
      %2672 = vperm.xlu0 %2671, %v2654
      %v2673 = vpop.permute.xlu0 %2672
      %2676 = vset.pattern.permute.xlu0 0
      %2677 = vperm.xlu0 %2676, %v2655
      %v2678 = vpop.permute.xlu0 %2677
      %2681 = vset.pattern.permute.xlu0 0
      %2682 = vperm.xlu0 %2681, %v2656
      %v2683 = vpop.permute.xlu0 %2682
      %2686 = vset.pattern.permute.xlu0 0
      %2687 = vperm.xlu0 %2686, %v2657
      %v2688 = vpop.permute.xlu0 %2687
      %2691 = vset.pattern.permute.xlu0 0
      %2692 = vperm.xlu0 %2691, %v2658
      %v2693 = vpop.permute.xlu0 %2692
      %2696 = vset.pattern.permute.xlu0 0
      %2697 = vperm.xlu0 %2696, %v2659
      %v2698 = vpop.permute.xlu0 %2697
      %2701 = vset.pattern.permute.xlu0 0
      %2702 = vperm.xlu0 %2701, %v2660
      %v2703 = vpop.permute.xlu0 %2702
      %2706 = vset.pattern.permute.xlu0 0
      %2707 = vperm.xlu0 %2706, %v2661
      %v2708 = vpop.permute.xlu0 %2707
      %2711 = vset.pattern.permute.xlu0 0
      %2712 = vperm.xlu0 %2711, %v2662
      %v2713 = vpop.permute.xlu0 %2712
      %2716 = vset.pattern.permute.xlu0 0
      %2717 = vperm.xlu0 %2716, %v2663
      %v2718 = vpop.permute.xlu0 %2717
      %2721 = vset.pattern.permute.xlu0 0
      %2722 = vperm.xlu0 %2721, %v2664
      %v2723 = vpop.permute.xlu0 %2722
      %2726 = vset.pattern.permute.xlu0 0
      %2727 = vperm.xlu0 %2726, %v2665
      %v2728 = vpop.permute.xlu0 %2727
      %2731 = vset.pattern.permute.xlu0 0
      %2732 = vperm.xlu0 %2731, %v2666
      %v2733 = vpop.permute.xlu0 %2732
      %2736 = vset.pattern.permute.xlu0 0
      %2737 = vperm.xlu0 %2736, %v2667
      %v2738 = vpop.permute.xlu0 %2737
      %2741 = vset.pattern.permute.xlu0 0
      %2742 = vperm.xlu0 %2741, %v2668
      %v2743 = vpop.permute.xlu0 %2742
      %2746 = vset.pattern.permute.xlu0 0
      %2747 = vperm.xlu0 %2746, %v2669
      %v2748 = vpop.permute.xlu0 %2747
      %v2750 = vadd.f32 %v2566, %v2673
      %v2751 = vadd.f32 %v2615, %v2673
      %v2752 = vadd.f32 %v2568, %v2678
      %v2753 = vadd.f32 %v2617, %v2678
      %v2754 = vadd.f32 %v2571, %v2683
      %v2755 = vadd.f32 %v2620, %v2683
      %v2756 = vadd.f32 %v2573, %v2688
      %v2757 = vadd.f32 %v2622, %v2688
      %v2758 = vadd.f32 %v2576, %v2693
      %v2759 = vadd.f32 %v2625, %v2693
      %v2760 = vadd.f32 %v2578, %v2698
      %v2761 = vadd.f32 %v2627, %v2698
      %v2762 = vadd.f32 %v2581, %v2703
      %v2763 = vadd.f32 %v2630, %v2703
      %v2764 = vadd.f32 %v2583, %v2708
      %v2765 = vadd.f32 %v2632, %v2708
      %v2766 = vadd.f32 %v2586, %v2713
      %v2767 = vadd.f32 %v2635, %v2713
      %v2768 = vadd.f32 %v2588, %v2718
      %v2769 = vadd.f32 %v2637, %v2718
      %v2770 = vadd.f32 %v2591, %v2723
      %v2771 = vadd.f32 %v2640, %v2723
      %v2772 = vadd.f32 %v2593, %v2728
      %v2773 = vadd.f32 %v2642, %v2728
      %v2774 = vadd.f32 %v2596, %v2733
      %v2775 = vadd.f32 %v2645, %v2733
      %v2776 = vadd.f32 %v2598, %v2738
      %v2777 = vadd.f32 %v2647, %v2738
      %v2778 = vadd.f32 %v2601, %v2743
      %v2779 = vadd.f32 %v2650, %v2743
      %v2780 = vadd.f32 %v2603, %v2748
      %v2781 = vadd.f32 %v2652, %v2748
      %v2782 = vxor.u32 %v2750, 2147483648
      %v2783 = vxor.u32 %v2751, 2147483648
      %v2784 = vxor.u32 %v2752, 2147483648
      %v2785 = vxor.u32 %v2753, 2147483648
      %v2786 = vxor.u32 %v2754, 2147483648
      %v2787 = vxor.u32 %v2755, 2147483648
      %v2788 = vxor.u32 %v2756, 2147483648
      %v2789 = vxor.u32 %v2757, 2147483648
      %v2790 = vxor.u32 %v2758, 2147483648
      %v2791 = vxor.u32 %v2759, 2147483648
      %v2792 = vxor.u32 %v2760, 2147483648
      %v2793 = vxor.u32 %v2761, 2147483648
      %v2794 = vxor.u32 %v2762, 2147483648
      %v2795 = vxor.u32 %v2763, 2147483648
      %v2796 = vxor.u32 %v2764, 2147483648
      %v2797 = vxor.u32 %v2765, 2147483648
      %v2798 = vxor.u32 %v2766, 2147483648
      %v2799 = vxor.u32 %v2767, 2147483648
      %v2800 = vxor.u32 %v2768, 2147483648
      %v2801 = vxor.u32 %v2769, 2147483648
      %v2802 = vxor.u32 %v2770, 2147483648
      %v2803 = vxor.u32 %v2771, 2147483648
      %v2804 = vxor.u32 %v2772, 2147483648
      %v2805 = vxor.u32 %v2773, 2147483648
      %v2806 = vmul.f32 %v2782, 1.442695
      %v2807 = vpow.pop %v2806
      %v2808 = vmul.f32 %v2783, 1.442695
      %v2809 = vpow.pop %v2808
      %v2810 = vmul.f32 %v2784, 1.442695
      %v2811 = vpow.pop %v2810
      %v2812 = vmul.f32 %v2785, 1.442695
      %v2813 = vpow.pop %v2812
      %v2814 = vmul.f32 %v2786, 1.442695
      %v2815 = vpow.pop %v2814
      %v2816 = vmul.f32 %v2787, 1.442695
      %v2817 = vpow.pop %v2816
      %v2818 = vmul.f32 %v2788, 1.442695
      %v2819 = vpow.pop %v2818
      %v2820 = vmul.f32 %v2789, 1.442695
      %v2821 = vpow.pop %v2820
      %v2822 = vmul.f32 %v2790, 1.442695
      %v2823 = vpow.pop %v2822
      %v2824 = vmul.f32 %v2791, 1.442695
      %v2825 = vpow.pop %v2824
      %v2826 = vmul.f32 %v2792, 1.442695
      %v2827 = vpow.pop %v2826
      %v2828 = vmul.f32 %v2793, 1.442695
      %v2829 = vpow.pop %v2828
      %v2830 = vmul.f32 %v2794, 1.442695
      %v2831 = vpow.pop %v2830
      %v2832 = vmul.f32 %v2795, 1.442695
      %v2833 = vpow.pop %v2832
      %v2834 = vmul.f32 %v2796, 1.442695
      %v2835 = vpow.pop %v2834
      %v2836 = vmul.f32 %v2797, 1.442695
      %v2837 = vpow.pop %v2836
      %v2838 = vmul.f32 %v2798, 1.442695
      %v2839 = vpow.pop %v2838
      %v2840 = vmul.f32 %v2799, 1.442695
      %v2841 = vpow.pop %v2840
      %v2842 = vmul.f32 %v2800, 1.442695
      %v2843 = vpow.pop %v2842
      %v2844 = vmul.f32 %v2801, 1.442695
      %v2845 = vpow.pop %v2844
      %v2846 = vmul.f32 %v2802, 1.442695
      %v2847 = vpow.pop %v2846
      %v2848 = vmul.f32 %v2803, 1.442695
      %v2849 = vpow.pop %v2848
      %v2850 = vmul.f32 %v2804, 1.442695
      %v2851 = vpow.pop %v2850
      %v2852 = vmul.f32 %v2805, 1.442695
      %v2853 = vpow.pop %v2852
      %v2854 = vadd.f32 %v2807, 1.0
      %v2855 = vadd.f32 %v2809, 1.0
      %v2856 = vadd.f32 %v2811, 1.0
      %v2857 = vadd.f32 %v2813, 1.0
      %v2858 = vadd.f32 %v2815, 1.0
      %v2859 = vadd.f32 %v2817, 1.0
      %v2860 = vadd.f32 %v2819, 1.0
      %v2861 = vadd.f32 %v2821, 1.0
      %v2862 = vadd.f32 %v2823, 1.0
      %v2863 = vadd.f32 %v2825, 1.0
      %v2864 = vadd.f32 %v2827, 1.0
      %v2865 = vadd.f32 %v2829, 1.0
      %v2866 = vadd.f32 %v2831, 1.0
      %v2867 = vadd.f32 %v2833, 1.0
      %v2868 = vadd.f32 %v2835, 1.0
      %v2869 = vadd.f32 %v2837, 1.0
      %v2870 = vadd.f32 %v2839, 1.0
      %v2871 = vadd.f32 %v2841, 1.0
      %v2872 = vadd.f32 %v2843, 1.0
      %v2873 = vadd.f32 %v2845, 1.0
      %v2874 = vadd.f32 %v2847, 1.0
      %v2875 = vadd.f32 %v2849, 1.0
      %v2876 = vadd.f32 %v2851, 1.0
      %v2877 = vadd.f32 %v2853, 1.0
      %v2878 = vrcp.pop %v2854
      %v2879 = vmul.f32 %v2854, %v2878
      %v2880 = vsub.f32 1.0, %v2879
      %v2881 = vmul.f32 %v2878, %v2880
      %v2882 = vadd.f32 %v2878, %v2881
      %vm2883 = vweird.f32 %v2854
      %vm2884 = vweird.f32 %v2878
      %vm2885 = vmor %vm2883, %vm2884
      %v2886 = vsel %vm2885, %v2878, %v2882
      %v2887 = vand.u32 2147483647, %v2854
      %vm2888 = vcmp.eq.f32.partialorder %v2887, 8.507059e+37
      %v2889 = vand.u32 %v2854, 2147483648
      %v2890 = vor.u32 1.1754944e-38, %v2889
      %v2891 = vsel %vm2888, %v2890, %v2886
      %v2892 = vmul.f32 1.0, %v2891
      %v2893 = vrcp.pop %v2855
      %v2894 = vmul.f32 %v2855, %v2893
      %v2895 = vsub.f32 1.0, %v2894
      %v2896 = vmul.f32 %v2893, %v2895
      %v2897 = vadd.f32 %v2893, %v2896
      %vm2898 = vweird.f32 %v2855
      %vm2899 = vweird.f32 %v2893
      %vm2900 = vmor %vm2898, %vm2899
      %v2901 = vsel %vm2900, %v2893, %v2897
      %v2902 = vand.u32 2147483647, %v2855
      %vm2903 = vcmp.eq.f32.partialorder %v2902, 8.507059e+37
      %v2904 = vand.u32 %v2855, 2147483648
      %v2905 = vor.u32 1.1754944e-38, %v2904
      %v2906 = vsel %vm2903, %v2905, %v2901
      %v2907 = vmul.f32 1.0, %v2906
      %v2908 = vrcp.pop %v2856
      %v2909 = vmul.f32 %v2856, %v2908
      %v2910 = vsub.f32 1.0, %v2909
      %v2911 = vmul.f32 %v2908, %v2910
      %v2912 = vadd.f32 %v2908, %v2911
      %vm2913 = vweird.f32 %v2856
      %vm2914 = vweird.f32 %v2908
      %vm2915 = vmor %vm2913, %vm2914
      %v2916 = vsel %vm2915, %v2908, %v2912
      %v2917 = vand.u32 2147483647, %v2856
      %vm2918 = vcmp.eq.f32.partialorder %v2917, 8.507059e+37
      %v2919 = vand.u32 %v2856, 2147483648
      %v2920 = vor.u32 1.1754944e-38, %v2919
      %v2921 = vsel %vm2918, %v2920, %v2916
      %v2922 = vmul.f32 1.0, %v2921
      %v2923 = vrcp.pop %v2857
      %v2924 = vmul.f32 %v2857, %v2923
      %v2925 = vsub.f32 1.0, %v2924
      %v2926 = vmul.f32 %v2923, %v2925
      %v2927 = vadd.f32 %v2923, %v2926
      %vm2928 = vweird.f32 %v2857
      %vm2929 = vweird.f32 %v2923
      %vm2930 = vmor %vm2928, %vm2929
      %v2931 = vsel %vm2930, %v2923, %v2927
      %v2932 = vand.u32 2147483647, %v2857
      %vm2933 = vcmp.eq.f32.partialorder %v2932, 8.507059e+37
      %v2934 = vand.u32 %v2857, 2147483648
      %v2935 = vor.u32 1.1754944e-38, %v2934
      %v2936 = vsel %vm2933, %v2935, %v2931
      %v2937 = vmul.f32 1.0, %v2936
      %v2938 = vrcp.pop %v2858
      %v2939 = vmul.f32 %v2858, %v2938
      %v2940 = vsub.f32 1.0, %v2939
      %v2941 = vmul.f32 %v2938, %v2940
      %v2942 = vadd.f32 %v2938, %v2941
      %vm2943 = vweird.f32 %v2858
      %vm2944 = vweird.f32 %v2938
      %vm2945 = vmor %vm2943, %vm2944
      %v2946 = vsel %vm2945, %v2938, %v2942
      %v2947 = vand.u32 2147483647, %v2858
      %vm2948 = vcmp.eq.f32.partialorder %v2947, 8.507059e+37
      %v2949 = vand.u32 %v2858, 2147483648
      %v2950 = vor.u32 1.1754944e-38, %v2949
      %v2951 = vsel %vm2948, %v2950, %v2946
      %v2952 = vmul.f32 1.0, %v2951
      %v2953 = vrcp.pop %v2859
      %v2954 = vmul.f32 %v2859, %v2953
      %v2955 = vsub.f32 1.0, %v2954
      %v2956 = vmul.f32 %v2953, %v2955
      %v2957 = vadd.f32 %v2953, %v2956
      %vm2958 = vweird.f32 %v2859
      %vm2959 = vweird.f32 %v2953
      %vm2960 = vmor %vm2958, %vm2959
      %v2961 = vsel %vm2960, %v2953, %v2957
      %v2962 = vand.u32 2147483647, %v2859
      %vm2963 = vcmp.eq.f32.partialorder %v2962, 8.507059e+37
      %v2964 = vand.u32 %v2859, 2147483648
      %v2965 = vor.u32 1.1754944e-38, %v2964
      %v2966 = vsel %vm2963, %v2965, %v2961
      %v2967 = vmul.f32 1.0, %v2966
      %v2968 = vrcp.pop %v2860
      %v2969 = vmul.f32 %v2860, %v2968
      %v2970 = vsub.f32 1.0, %v2969
      %v2971 = vmul.f32 %v2968, %v2970
      %v2972 = vadd.f32 %v2968, %v2971
      %vm2973 = vweird.f32 %v2860
      %vm2974 = vweird.f32 %v2968
      %vm2975 = vmor %vm2973, %vm2974
      %v2976 = vsel %vm2975, %v2968, %v2972
      %v2977 = vand.u32 2147483647, %v2860
      %vm2978 = vcmp.eq.f32.partialorder %v2977, 8.507059e+37
      %v2979 = vand.u32 %v2860, 2147483648
      %v2980 = vor.u32 1.1754944e-38, %v2979
      %v2981 = vsel %vm2978, %v2980, %v2976
      %v2982 = vmul.f32 1.0, %v2981
      %v2983 = vrcp.pop %v2861
      %v2984 = vmul.f32 %v2861, %v2983
      %v2985 = vsub.f32 1.0, %v2984
      %v2986 = vmul.f32 %v2983, %v2985
      %v2987 = vadd.f32 %v2983, %v2986
      %vm2988 = vweird.f32 %v2861
      %vm2989 = vweird.f32 %v2983
      %vm2990 = vmor %vm2988, %vm2989
      %v2991 = vsel %vm2990, %v2983, %v2987
      %v2992 = vand.u32 2147483647, %v2861
      %vm2993 = vcmp.eq.f32.partialorder %v2992, 8.507059e+37
      %v2994 = vand.u32 %v2861, 2147483648
      %v2995 = vor.u32 1.1754944e-38, %v2994
      %v2996 = vsel %vm2993, %v2995, %v2991
      %v2997 = vmul.f32 1.0, %v2996
      %v2998 = vrcp.pop %v2862
      %v2999 = vmul.f32 %v2862, %v2998
      %v3000 = vsub.f32 1.0, %v2999
      %v3001 = vmul.f32 %v2998, %v3000
      %v3002 = vadd.f32 %v2998, %v3001
      %vm3003 = vweird.f32 %v2862
      %vm3004 = vweird.f32 %v2998
      %vm3005 = vmor %vm3003, %vm3004
      %v3006 = vsel %vm3005, %v2998, %v3002
      %v3007 = vand.u32 2147483647, %v2862
      %vm3008 = vcmp.eq.f32.partialorder %v3007, 8.507059e+37
      %v3009 = vand.u32 %v2862, 2147483648
      %v3010 = vor.u32 1.1754944e-38, %v3009
      %v3011 = vsel %vm3008, %v3010, %v3006
      %v3012 = vmul.f32 1.0, %v3011
      %v3013 = vrcp.pop %v2863
      %v3014 = vmul.f32 %v2863, %v3013
      %v3015 = vsub.f32 1.0, %v3014
      %v3016 = vmul.f32 %v3013, %v3015
      %v3017 = vadd.f32 %v3013, %v3016
      %vm3018 = vweird.f32 %v2863
      %vm3019 = vweird.f32 %v3013
      %vm3020 = vmor %vm3018, %vm3019
      %v3021 = vsel %vm3020, %v3013, %v3017
      %v3022 = vand.u32 2147483647, %v2863
      %vm3023 = vcmp.eq.f32.partialorder %v3022, 8.507059e+37
      %v3024 = vand.u32 %v2863, 2147483648
      %v3025 = vor.u32 1.1754944e-38, %v3024
      %v3026 = vsel %vm3023, %v3025, %v3021
      %v3027 = vmul.f32 1.0, %v3026
      %v3028 = vrcp.pop %v2864
      %v3029 = vmul.f32 %v2864, %v3028
      %v3030 = vsub.f32 1.0, %v3029
      %v3031 = vmul.f32 %v3028, %v3030
      %v3032 = vadd.f32 %v3028, %v3031
      %vm3033 = vweird.f32 %v2864
      %vm3034 = vweird.f32 %v3028
      %vm3035 = vmor %vm3033, %vm3034
      %v3036 = vsel %vm3035, %v3028, %v3032
      %v3037 = vand.u32 2147483647, %v2864
      %vm3038 = vcmp.eq.f32.partialorder %v3037, 8.507059e+37
      %v3039 = vand.u32 %v2864, 2147483648
      %v3040 = vor.u32 1.1754944e-38, %v3039
      %v3041 = vsel %vm3038, %v3040, %v3036
      %v3042 = vmul.f32 1.0, %v3041
      %v3043 = vrcp.pop %v2865
      %v3044 = vmul.f32 %v2865, %v3043
      %v3045 = vsub.f32 1.0, %v3044
      %v3046 = vmul.f32 %v3043, %v3045
      %v3047 = vadd.f32 %v3043, %v3046
      %vm3048 = vweird.f32 %v2865
      %vm3049 = vweird.f32 %v3043
      %vm3050 = vmor %vm3048, %vm3049
      %v3051 = vsel %vm3050, %v3043, %v3047
      %v3052 = vand.u32 2147483647, %v2865
      %vm3053 = vcmp.eq.f32.partialorder %v3052, 8.507059e+37
      %v3054 = vand.u32 %v2865, 2147483648
      %v3055 = vor.u32 1.1754944e-38, %v3054
      %v3056 = vsel %vm3053, %v3055, %v3051
      %v3057 = vmul.f32 1.0, %v3056
      %v3058 = vrcp.pop %v2866
      %v3059 = vmul.f32 %v2866, %v3058
      %v3060 = vsub.f32 1.0, %v3059
      %v3061 = vmul.f32 %v3058, %v3060
      %v3062 = vadd.f32 %v3058, %v3061
      %vm3063 = vweird.f32 %v2866
      %vm3064 = vweird.f32 %v3058
      %vm3065 = vmor %vm3063, %vm3064
      %v3066 = vsel %vm3065, %v3058, %v3062
      %v3067 = vand.u32 2147483647, %v2866
      %vm3068 = vcmp.eq.f32.partialorder %v3067, 8.507059e+37
      %v3069 = vand.u32 %v2866, 2147483648
      %v3070 = vor.u32 1.1754944e-38, %v3069
      %v3071 = vsel %vm3068, %v3070, %v3066
      %v3072 = vmul.f32 1.0, %v3071
      %v3073 = vrcp.pop %v2867
      %v3074 = vmul.f32 %v2867, %v3073
      %v3075 = vsub.f32 1.0, %v3074
      %v3076 = vmul.f32 %v3073, %v3075
      %v3077 = vadd.f32 %v3073, %v3076
      %vm3078 = vweird.f32 %v2867
      %vm3079 = vweird.f32 %v3073
      %vm3080 = vmor %vm3078, %vm3079
      %v3081 = vsel %vm3080, %v3073, %v3077
      %v3082 = vand.u32 2147483647, %v2867
      %vm3083 = vcmp.eq.f32.partialorder %v3082, 8.507059e+37
      %v3084 = vand.u32 %v2867, 2147483648
      %v3085 = vor.u32 1.1754944e-38, %v3084
      %v3086 = vsel %vm3083, %v3085, %v3081
      %v3087 = vmul.f32 1.0, %v3086
      %v3088 = vrcp.pop %v2868
      %v3089 = vmul.f32 %v2868, %v3088
      %v3090 = vsub.f32 1.0, %v3089
      %v3091 = vmul.f32 %v3088, %v3090
      %v3092 = vadd.f32 %v3088, %v3091
      %vm3093 = vweird.f32 %v2868
      %vm3094 = vweird.f32 %v3088
      %vm3095 = vmor %vm3093, %vm3094
      %v3096 = vsel %vm3095, %v3088, %v3092
      %v3097 = vand.u32 2147483647, %v2868
      %vm3098 = vcmp.eq.f32.partialorder %v3097, 8.507059e+37
      %v3099 = vand.u32 %v2868, 2147483648
      %v3100 = vor.u32 1.1754944e-38, %v3099
      %v3101 = vsel %vm3098, %v3100, %v3096
      %v3102 = vmul.f32 1.0, %v3101
      %v3103 = vrcp.pop %v2869
      %v3104 = vmul.f32 %v2869, %v3103
      %v3105 = vsub.f32 1.0, %v3104
      %v3106 = vmul.f32 %v3103, %v3105
      %v3107 = vadd.f32 %v3103, %v3106
      %vm3108 = vweird.f32 %v2869
      %vm3109 = vweird.f32 %v3103
      %vm3110 = vmor %vm3108, %vm3109
      %v3111 = vsel %vm3110, %v3103, %v3107
      %v3112 = vand.u32 2147483647, %v2869
      %vm3113 = vcmp.eq.f32.partialorder %v3112, 8.507059e+37
      %v3114 = vand.u32 %v2869, 2147483648
      %v3115 = vor.u32 1.1754944e-38, %v3114
      %v3116 = vsel %vm3113, %v3115, %v3111
      %v3117 = vmul.f32 1.0, %v3116
      %v3118 = vrcp.pop %v2870
      %v3119 = vmul.f32 %v2870, %v3118
      %v3120 = vsub.f32 1.0, %v3119
      %v3121 = vmul.f32 %v3118, %v3120
      %v3122 = vadd.f32 %v3118, %v3121
      %vm3123 = vweird.f32 %v2870
      %vm3124 = vweird.f32 %v3118
      %vm3125 = vmor %vm3123, %vm3124
      %v3126 = vsel %vm3125, %v3118, %v3122
      %v3127 = vand.u32 2147483647, %v2870
      %vm3128 = vcmp.eq.f32.partialorder %v3127, 8.507059e+37
      %v3129 = vand.u32 %v2870, 2147483648
      %v3130 = vor.u32 1.1754944e-38, %v3129
      %v3131 = vsel %vm3128, %v3130, %v3126
      %v3132 = vmul.f32 1.0, %v3131
      %v3133 = vrcp.pop %v2871
      %v3134 = vmul.f32 %v2871, %v3133
      %v3135 = vsub.f32 1.0, %v3134
      %v3136 = vmul.f32 %v3133, %v3135
      %v3137 = vadd.f32 %v3133, %v3136
      %vm3138 = vweird.f32 %v2871
      %vm3139 = vweird.f32 %v3133
      %vm3140 = vmor %vm3138, %vm3139
      %v3141 = vsel %vm3140, %v3133, %v3137
      %v3142 = vand.u32 2147483647, %v2871
      %vm3143 = vcmp.eq.f32.partialorder %v3142, 8.507059e+37
      %v3144 = vand.u32 %v2871, 2147483648
      %v3145 = vor.u32 1.1754944e-38, %v3144
      %v3146 = vsel %vm3143, %v3145, %v3141
      %v3147 = vmul.f32 1.0, %v3146
      %v3148 = vrcp.pop %v2872
      %v3149 = vmul.f32 %v2872, %v3148
      %v3150 = vsub.f32 1.0, %v3149
      %v3151 = vmul.f32 %v3148, %v3150
      %v3152 = vadd.f32 %v3148, %v3151
      %vm3153 = vweird.f32 %v2872
      %vm3154 = vweird.f32 %v3148
      %vm3155 = vmor %vm3153, %vm3154
      %v3156 = vsel %vm3155, %v3148, %v3152
      %v3157 = vand.u32 2147483647, %v2872
      %vm3158 = vcmp.eq.f32.partialorder %v3157, 8.507059e+37
      %v3159 = vand.u32 %v2872, 2147483648
      %v3160 = vor.u32 1.1754944e-38, %v3159
      %v3161 = vsel %vm3158, %v3160, %v3156
      %v3162 = vmul.f32 1.0, %v3161
      %v3163 = vrcp.pop %v2873
      %v3164 = vmul.f32 %v2873, %v3163
      %v3165 = vsub.f32 1.0, %v3164
      %v3166 = vmul.f32 %v3163, %v3165
      %v3167 = vadd.f32 %v3163, %v3166
      %vm3168 = vweird.f32 %v2873
      %vm3169 = vweird.f32 %v3163
      %vm3170 = vmor %vm3168, %vm3169
      %v3171 = vsel %vm3170, %v3163, %v3167
      %v3172 = vand.u32 2147483647, %v2873
      %vm3173 = vcmp.eq.f32.partialorder %v3172, 8.507059e+37
      %v3174 = vand.u32 %v2873, 2147483648
      %v3175 = vor.u32 1.1754944e-38, %v3174
      %v3176 = vsel %vm3173, %v3175, %v3171
      %v3177 = vmul.f32 1.0, %v3176
      %v3178 = vrcp.pop %v2874
      %v3179 = vmul.f32 %v2874, %v3178
      %v3180 = vsub.f32 1.0, %v3179
      %v3181 = vmul.f32 %v3178, %v3180
      %v3182 = vadd.f32 %v3178, %v3181
      %vm3183 = vweird.f32 %v2874
      %vm3184 = vweird.f32 %v3178
      %vm3185 = vmor %vm3183, %vm3184
      %v3186 = vsel %vm3185, %v3178, %v3182
      %v3187 = vand.u32 2147483647, %v2874
      %vm3188 = vcmp.eq.f32.partialorder %v3187, 8.507059e+37
      %v3189 = vand.u32 %v2874, 2147483648
      %v3190 = vor.u32 1.1754944e-38, %v3189
      %v3191 = vsel %vm3188, %v3190, %v3186
      %v3192 = vmul.f32 1.0, %v3191
      %v3193 = vrcp.pop %v2875
      %v3194 = vmul.f32 %v2875, %v3193
      %v3195 = vsub.f32 1.0, %v3194
      %v3196 = vmul.f32 %v3193, %v3195
      %v3197 = vadd.f32 %v3193, %v3196
      %vm3198 = vweird.f32 %v2875
      %vm3199 = vweird.f32 %v3193
      %vm3200 = vmor %vm3198, %vm3199
      %v3201 = vsel %vm3200, %v3193, %v3197
      %v3202 = vand.u32 2147483647, %v2875
      %vm3203 = vcmp.eq.f32.partialorder %v3202, 8.507059e+37
      %v3204 = vand.u32 %v2875, 2147483648
      %v3205 = vor.u32 1.1754944e-38, %v3204
      %v3206 = vsel %vm3203, %v3205, %v3201
      %v3207 = vmul.f32 1.0, %v3206
      %v3208 = vrcp.pop %v2876
      %v3209 = vmul.f32 %v2876, %v3208
      %v3210 = vsub.f32 1.0, %v3209
      %v3211 = vmul.f32 %v3208, %v3210
      %v3212 = vadd.f32 %v3208, %v3211
      %vm3213 = vweird.f32 %v2876
      %vm3214 = vweird.f32 %v3208
      %vm3215 = vmor %vm3213, %vm3214
      %v3216 = vsel %vm3215, %v3208, %v3212
      %v3217 = vand.u32 2147483647, %v2876
      %vm3218 = vcmp.eq.f32.partialorder %v3217, 8.507059e+37
      %v3219 = vand.u32 %v2876, 2147483648
      %v3220 = vor.u32 1.1754944e-38, %v3219
      %v3221 = vsel %vm3218, %v3220, %v3216
      %v3222 = vmul.f32 1.0, %v3221
      %v3223 = vrcp.pop %v2877
      %v3224 = vmul.f32 %v2877, %v3223
      %v3225 = vsub.f32 1.0, %v3224
      %v3226 = vmul.f32 %v3223, %v3225
      %v3227 = vadd.f32 %v3223, %v3226
      %vm3228 = vweird.f32 %v2877
      %vm3229 = vweird.f32 %v3223
      %vm3230 = vmor %vm3228, %vm3229
      %v3231 = vsel %vm3230, %v3223, %v3227
      %v3232 = vand.u32 2147483647, %v2877
      %vm3233 = vcmp.eq.f32.partialorder %v3232, 8.507059e+37
      %v3234 = vand.u32 %v2877, 2147483648
      %v3235 = vor.u32 1.1754944e-38, %v3234
      %v3236 = vsel %vm3233, %v3235, %v3231
      %v3237 = vmul.f32 1.0, %v3236
      %v3238 = vtanh.pop %v2774
      %v3239 = vtanh.pop %v2775
      %v3240 = vtanh.pop %v2776
      %v3241 = vtanh.pop %v2777
      %v3242 = vtanh.pop %v2778
      %v3243 = vtanh.pop %v2779
      %v3244 = vtanh.pop %v2780
      %v3245 = vtanh.pop %v2781
      %v3246 = vld [vmem:[%s332] sm:$0xff]
      %v3247 = vld [vmem:[%s332 + $0x8] sm:$0xff]
      %v3248 = vld [vmem:[%s332 + $0x10] sm:$0xff]
      %v3249 = vld [vmem:[%s332 + $0x18] sm:$0xff]
      %v3250 = vld [vmem:[%s332 + $0x20] sm:$0xff]
      %v3251 = vld [vmem:[%s332 + $0x28] sm:$0xff]
      %v3252 = vld [vmem:[%s332 + $0x30] sm:$0xff]
      %v3253 = vld [vmem:[%s332 + $0x38] sm:$0xff]
      %v3254 = vmul.f32 %v3012, %v3246
      %v3255 = vmul.f32 %v3027, %v3247
      %v3256 = vmul.f32 %v3042, %v3248
      %v3257 = vmul.f32 %v3057, %v3249
      %v3258 = vmul.f32 %v3072, %v3250
      %v3259 = vmul.f32 %v3087, %v3251
      %v3260 = vmul.f32 %v3102, %v3252
      %v3261 = vmul.f32 %v3117, %v3253
      %v3262 = vmul.f32 %v2892, %v3238
      %v3263 = vmul.f32 %v2907, %v3239
      %v3264 = vmul.f32 %v2922, %v3240
      %v3265 = vmul.f32 %v2937, %v3241
      %v3266 = vmul.f32 %v2952, %v3242
      %v3267 = vmul.f32 %v2967, %v3243
      %v3268 = vmul.f32 %v2982, %v3244
      %v3269 = vmul.f32 %v2997, %v3245
      %v3270 = vadd.f32 %v3254, %v3262
      %v3271 = vadd.f32 %v3255, %v3263
      %v3272 = vadd.f32 %v3256, %v3264
      %v3273 = vadd.f32 %v3257, %v3265
      %v3274 = vadd.f32 %v3258, %v3266
      %v3275 = vadd.f32 %v3259, %v3267
      %v3276 = vadd.f32 %v3260, %v3268
      %v3277 = vadd.f32 %v3261, %v3269
      %v3278 = vtanh.pop %v3270
      %v3279 = vtanh.pop %v3271
      %v3280 = vtanh.pop %v3272
      %v3281 = vtanh.pop %v3273
      %v3282 = vtanh.pop %v3274
      %v3283 = vtanh.pop %v3275
      %v3284 = vtanh.pop %v3276
      %v3285 = vtanh.pop %v3277
      %v3286 = vmul.f32 %v3132, %v3278
      %v3287 = vmul.f32 %v3147, %v3279
      %v3288 = vmul.f32 %v3162, %v3280
      %v3289 = vmul.f32 %v3177, %v3281
      %v3290 = vmul.f32 %v3192, %v3282
      %v3291 = vmul.f32 %v3207, %v3283
      %v3292 = vmul.f32 %v3222, %v3284
      %v3293 = vmul.f32 %v3237, %v3285
      %3294 = vst [vmem:[%s346] sm:$0xff] %v3270
      %3295 = vst [vmem:[%s346 + $0x8] sm:$0xff] %v3271
      %3296 = vst [vmem:[%s346 + $0x10] sm:$0xff] %v3272
      %3297 = vst [vmem:[%s346 + $0x18] sm:$0xff] %v3273
      %3298 = vst [vmem:[%s346 + $0x20] sm:$0xff] %v3274
      %3299 = vst [vmem:[%s346 + $0x28] sm:$0xff] %v3275
      %3300 = vst [vmem:[%s346 + $0x30] sm:$0xff] %v3276
      %3301 = vst [vmem:[%s346 + $0x38] sm:$0xff] %v3277
      %3302 = vst [vmem:[%s339] sm:$0xff] %v3286
      %3303 = vst [vmem:[%s339 + $0x8] sm:$0xff] %v3287
      %3304 = vst [vmem:[%s339 + $0x10] sm:$0xff] %v3288
      %3305 = vst [vmem:[%s339 + $0x18] sm:$0xff] %v3289
      %3306 = vst [vmem:[%s339 + $0x20] sm:$0xff] %v3290
      %3307 = vst [vmem:[%s339 + $0x28] sm:$0xff] %v3291
      %3308 = vst [vmem:[%s339 + $0x30] sm:$0xff] %v3292
      %3309 = vst [vmem:[%s339 + $0x38] sm:$0xff] %v3293
      %s3310 = smul.u32 4, %s19
      %p3311 = scmp.lt.s32.totalorder %s3310, 7
      %s3312 = scalar_select %p3311, %s3310, 7
      %s3313 = smul.addr %s3312, 2
      %s3314 = smul.addr %s3313, 8
      %s3315 = scalar_lea.vmem %s6, %s3314
      %s3316 = smul.u32 4, %s19
      %p3317 = scmp.lt.s32.totalorder %s3316, 7
      %s3318 = scalar_select %p3317, %s3316, 7
      %s3319 = smul.addr %s3318, 2
      %s3320 = smul.addr %s3319, 8
      %s3321 = scalar_lea.vmem %s7, %s3320
      // Predicated region
      $region45: #{convlstm_forward_pallas.1} parent=43 // pred_check
        %p3322 = pneg %p178
      $region46: #{convlstm_forward_pallas.1} parent=43 // pred_check_branch
        %3324 = sbr.rel (%p3322) target = $region48
      $region47: #{convlstm_forward_pallas.1} parent=43 // pred_region
        %s3325 = smul.u32 4, %s19
      $region48: #{convlstm_forward_pallas.1} parent=43 // pred_fallthru
        _
      // Predicated region
      $region49: #{convlstm_forward_pallas.1} parent=43 // pred_check
        %p3326 = pneg %p204
      $region50: #{convlstm_forward_pallas.1} parent=43 // pred_check_branch
        %3328 = sbr.rel (%p3326) target = $region52
      $region51: #{convlstm_forward_pallas.1} parent=43 // pred_region
        %s3329 = smul.u32 4, %s19
      $region52: #{convlstm_forward_pallas.1} parent=43 // pred_fallthru
        _
    $region44: #{convlstm_forward_pallas.1} parent=5 // pred_fallthru
      _
    %p3330 = scmp.le.s32.totalorder 2, %s14
    // Predicated region
    $region53: #{convlstm_forward_pallas.1} parent=5 // pred_check
      %p3331 = pneg %p3330
    $region54: #{convlstm_forward_pallas.1} parent=5 // pred_check_branch
      %3333 = sbr.rel (%p3331) target = $region56
    $region55: #{convlstm_forward_pallas.1} parent=5 // pred_region
      %s3334 = ssub.s32 %s14, 2
      // Predicated region
      $region57: #{convlstm_forward_pallas.1} parent=55 // pred_check
        %p3335 = pneg %p184
      $region58: #{convlstm_forward_pallas.1} parent=55 // pred_check_branch
        %3337 = sbr.rel (%p3335) target = $region60
      $region59: #{convlstm_forward_pallas.1} parent=55 // pred_region
        %s3338 = smul.u32 4, %s20
        %p3339 = scmp.lt.s32.totalorder %s3338, 7
        %s3340 = scalar_select %p3339, %s3338, 7
        %s3341 = smul.addr %s3340, 2
        %s3342 = smul.addr %s3341, 8
        %s3343 = scalar_lea.vmem %s6, %s3342
      $region60: #{convlstm_forward_pallas.1} parent=55 // pred_fallthru
        _
      // Predicated region
      $region61: #{convlstm_forward_pallas.1} parent=55 // pred_check
        %p3344 = pneg %p210
      $region62: #{convlstm_forward_pallas.1} parent=55 // pred_check_branch
        %3346 = sbr.rel (%p3344) target = $region64
      $region63: #{convlstm_forward_pallas.1} parent=55 // pred_region
        %s3347 = smul.u32 4, %s20
        %p3348 = scmp.lt.s32.totalorder %s3347, 7
        %s3349 = scalar_select %p3348, %s3347, 7
        %s3350 = smul.addr %s3349, 2
        %s3351 = smul.addr %s3350, 8
        %s3352 = scalar_lea.vmem %s7, %s3351
      $region64: #{convlstm_forward_pallas.1} parent=55 // pred_fallthru
        _
    $region56: #{convlstm_forward_pallas.1} parent=5 // pred_fallthru
      _
  $region6: #{convlstm_forward_pallas.1} parent=0 // loop_footer
    %s18 = sadd.s32 1, %s14
  $region7: #{convlstm_forward_pallas.1} parent=0 // loop_footer_branch
    %13 = sbr.rel target = $region3
  $region8: #{convlstm_forward_pallas.1} parent=0 // loop_exit
    _

</llo_original>
